<compile_context>
chip_gen: v5e
topology: v5e:2x2
jax: 0.10.0
libtpu: 0.0.40
codegen_flags: <defaults>
</compile_context>

<pallas_src>
import jax
import jax.numpy as jnp
from jax.experimental import pallas as pl
from jax.experimental.pallas import tpu as pltpu

X_DIM, H_DIM, Z_DIM = 784, 400, 20          # logical dims (PyTorch module)
X_PAD, H_PAD, Z_PAD = 896, 512, 128         # lane-padded dims (multiples of 128)
_LN2 = 0.6931471805599453


def _cdiv(a, b):
    return (a + b - 1) // b


def _round_up(a, m):
    return _cdiv(a, m) * m


def m1_ff_kernel(
    n_valid_ref,                # SMEM (1,) int32 — number of real batch rows
    x_ref,                      # (TB, X_PAD)  f32
    w_enc_ref, b_enc_ref,       # (X_PAD, H_PAD) bf16, (1, H_PAD) f32
    w_lat_ref, b_lat_ref,       # (H_PAD, Z_PAD) bf16, (1, Z_PAD) f32 (fused mean|lvar, BN folded)
    w_dec_ref, b_dec_ref,       # (Z_PAD, H_PAD) bf16, (1, H_PAD) f32
    w_out_ref, b_out_ref,       # (H_PAD, X_PAD) bf16, (1, X_PAD) f32
    recon_ref,                  # (TB, X_PAD)  bf16
    latent_ref,                 # (TB, Z_PAD)  f32 (cols [0,20)=mean_bn, [20,40)=lvar_bn)
    loss_ref,                   # (8, 128)     f32 (per-tile partial, broadcast)
):
    tb = x_ref.shape[0]
    x = x_ref[...]                                           # f32, reused for BCE

    # ---- encode: relu(x @ W + b) ----
    h_enc = jnp.dot(x.astype(jnp.bfloat16), w_enc_ref[...],
                    preferred_element_type=jnp.float32) + b_enc_ref[...]
    h_enc = jnp.maximum(h_enc, 0.0)

    # ---- fused (mean | lvar) head, eval-BN already folded into W/b ----
    latent = jnp.dot(h_enc.astype(jnp.bfloat16), w_lat_ref[...],
                     preferred_element_type=jnp.float32) + b_lat_ref[...]
    latent_ref[...] = latent

    # ---- sample (eval mode): z = mean.  W_dec rows >= Z_DIM are zero, so the
    # full padded latent (mean | lvar | 0) feeds the decoder directly. ----
    h_dec = jnp.dot(latent.astype(jnp.bfloat16), w_dec_ref[...],
                    preferred_element_type=jnp.float32) + b_dec_ref[...]
    h_dec = jnp.maximum(h_dec, 0.0)
    logits = jnp.dot(h_dec.astype(jnp.bfloat16), w_out_ref[...],
                     preferred_element_type=jnp.float32) + b_out_ref[...]

    # ---- shared transcendental: e = exp(-|l|) feeds sigmoid AND BCE ----
    e = jnp.exp(-jnp.abs(logits))                            # one EUP pass
    inv_1pe = pl.reciprocal(1.0 + e, approx=True)            # EUP vrcp, ~free slot
    sig = jnp.where(logits >= 0.0, inv_1pe, e * inv_1pe)
    recon_ref[...] = sig.astype(recon_ref.dtype)             # bf16 writeback

    # ---- mask for padded batch rows ----
    row_ids = pl.program_id(0) * tb + jax.lax.broadcasted_iota(jnp.int32, (tb, 1), 0)
    row_mask = (row_ids < n_valid_ref[0]).astype(jnp.float32)   # (tb, 1)
    n_rows = jnp.sum(row_mask)

    # ---- BCE from logits: max(l,0) - x*l + log1p(e). Padded feature columns
    # have logits == 0 exactly (zero weight cols + zero bias invariant), so
    # each valid row contributes (X_PAD - X_DIM)*ln2 there; subtract it
    # analytically instead of building a (tb, X_PAD) column mask. ----
    bce_elem = jnp.maximum(logits, 0.0) - x * logits + jnp.log1p(e)
    bce = jnp.sum(bce_elem * row_mask) - n_rows * ((X_PAD - X_DIM) * _LN2)

    # ---- KLD over the fused latent: cols [0,Z)=mean, [Z,2Z)=lvar ----
    z_cols = jax.lax.broadcasted_iota(jnp.int32, latent.shape, 1)
    mean_mask = jnp.where(z_cols < Z_DIM, 1.0, 0.0)
    lvar_mask = jnp.where((z_cols >= Z_DIM) & (z_cols < 2 * Z_DIM), 1.0, 0.0)
    lvar_safe = jnp.where(lvar_mask > 0.5, latent, 0.0)       # keep exp() bounded off-range
    kld_terms = (latent - jnp.exp(lvar_safe)) * lvar_mask - (latent * latent) * mean_mask
    kld_row = Z_DIM + jnp.sum(kld_terms, axis=-1, keepdims=True)   # (tb, 1)
    kld = -0.5 * jnp.sum(kld_row * row_mask)

    loss_ref[...] = jnp.full((8, 128), bce + kld, jnp.float32)


def init_params(key):
    """Deterministic init mimicking PyTorch nn.Linear default U(-k, k), k=1/sqrt(fan_in)."""
    def linear(key, fan_in, fan_out):
        kw, kb = jax.random.split(key)
        k = 1.0 / jnp.sqrt(fan_in)
        w = jax.random.uniform(kw, (fan_out, fan_in), jnp.float32, -k, k)
        b = jax.random.uniform(kb, (fan_out,), jnp.float32, -k, k)
        return w, b

    keys = jax.random.split(key, 5)
    p = {}
    p["en0_w"], p["en0_b"] = linear(keys[0], X_DIM, H_DIM)
    p["enm_w"], p["enm_b"] = linear(keys[1], H_DIM, Z_DIM)
    p["enl_w"], p["enl_b"] = linear(keys[2], H_DIM, Z_DIM)
    p["dez_w"], p["dez_b"] = linear(keys[3], Z_DIM, H_DIM)
    p["de0_w"], p["de0_b"] = linear(keys[4], H_DIM, X_DIM)
    # BatchNorm1d(affine=True) params and running stats (module: eps=1e-3).
    for tag in ("bnm", "bnl"):
        p[f"{tag}_gamma"] = jnp.ones((Z_DIM,), jnp.float32)
        p[f"{tag}_beta"] = jnp.zeros((Z_DIM,), jnp.float32)
        p[f"{tag}_rmean"] = jnp.zeros((Z_DIM,), jnp.float32)
        p[f"{tag}_rvar"] = jnp.ones((Z_DIM,), jnp.float32)
    return p


def pack_params(params, eps=1e-3):
    """One-time prep: transpose, lane-pad (zeros), fold eval-BN, fuse heads, cast to bf16.

    Invariant relied on by the kernel: padded rows/cols of every weight and
    padded entries of every bias are EXACTLY zero (BCE ln2 correction and the
    decoder ignoring the lvar/pad half of the latent both depend on it).
    """
    def _pad(a, rows, cols):
        return jnp.zeros((rows, cols), jnp.float32).at[:a.shape[0], :a.shape[1]].set(a)

    def bn_fold(tag):
        scale = params[f"{tag}_gamma"] / jnp.sqrt(params[f"{tag}_rvar"] + eps)
        shift = params[f"{tag}_beta"] - params[f"{tag}_rmean"] * scale
        return scale, shift

    bnm_scale, bnm_shift = bn_fold("bnm")
    bnl_scale, bnl_shift = bn_fold("bnl")

    packed = {}
    # encoder x -> h
    packed["w_enc"] = _pad(params["en0_w"].T, X_PAD, H_PAD).astype(jnp.bfloat16)
    packed["b_enc"] = jnp.zeros((1, H_PAD), jnp.float32).at[0, :H_DIM].set(params["en0_b"])

    # fused mean|lvar head with BN folded in
    w_lat = jnp.zeros((H_PAD, Z_PAD), jnp.float32)
    w_lat = w_lat.at[:H_DIM, :Z_DIM].set(params["enm_w"].T * bnm_scale[None, :])
    w_lat = w_lat.at[:H_DIM, Z_DIM:2 * Z_DIM].set(params["enl_w"].T * bnl_scale[None, :])
    b_lat = jnp.zeros((1, Z_PAD), jnp.float32)
    b_lat = b_lat.at[0, :Z_DIM].set(params["enm_b"] * bnm_scale + bnm_shift)
    b_lat = b_lat.at[0, Z_DIM:2 * Z_DIM].set(params["enl_b"] * bnl_scale + bnl_shift)
    packed["w_lat"] = w_lat.astype(jnp.bfloat16)
    packed["b_lat"] = b_lat

    # decoder z -> h (rows >= Z_DIM zero so lvar/pad part of latent is ignored)
    packed["w_dec"] = _pad(params["dez_w"].T, Z_PAD, H_PAD).astype(jnp.bfloat16)
    packed["b_dec"] = jnp.zeros((1, H_PAD), jnp.float32).at[0, :H_DIM].set(params["dez_b"])

    # decoder h -> x
    packed["w_out"] = _pad(params["de0_w"].T, H_PAD, X_PAD).astype(jnp.bfloat16)
    packed["b_out"] = jnp.zeros((1, X_PAD), jnp.float32).at[0, :X_DIM].set(params["de0_b"])
    return packed


def _pick_tiling(B):
    """Batch tile up to 512 rows; even tile count when tiling (v7x megacore balance)."""
    if B <= 512:
        tb = max(8, _round_up(B, 8))
        return tb, 1
    num_tiles = max(2, _round_up(_cdiv(B, 512), 2))   # even count for 2 TCs
    tb = _round_up(_cdiv(B, num_tiles), 8)
    num_tiles = _cdiv(B, tb)
    return tb, num_tiles


def m1_ff_forward(x, packed):
    B = x.shape[0]
    x_flat = x.reshape(B, X_DIM).astype(jnp.float32)

    TB, num_tiles = _pick_tiling(B)
    B_pad = num_tiles * TB

    x_pad = jnp.zeros((B_pad, X_PAD), jnp.float32).at[:B, :X_DIM].set(x_flat)
    n_valid = jnp.array([B], jnp.int32)                 # scalar-prefetch operand

    weight_spec = lambda r, c: pl.BlockSpec((r, c), lambda i, nv: (0, 0))  # VMEM-resident

    recon_pad, latent, loss_parts = pl.pallas_call(
        m1_ff_kernel,
        grid_spec=pltpu.PrefetchScalarGridSpec(
            num_scalar_prefetch=1,
            grid=(num_tiles,),
            in_specs=[
                pl.BlockSpec((TB, X_PAD), lambda i, nv: (i, 0)),     # x tile
                weight_spec(X_PAD, H_PAD), weight_spec(1, H_PAD),
                weight_spec(H_PAD, Z_PAD), weight_spec(1, Z_PAD),
                weight_spec(Z_PAD, H_PAD), weight_spec(1, H_PAD),
                weight_spec(H_PAD, X_PAD), weight_spec(1, X_PAD),
            ],
            out_specs=(
                pl.BlockSpec((TB, X_PAD), lambda i, nv: (i, 0)),     # recon tile (bf16)
                pl.BlockSpec((TB, Z_PAD), lambda i, nv: (i, 0)),     # latent tile
                pl.BlockSpec((8, 128), lambda i, nv: (i, 0)),        # per-tile loss partial
            ),
        ),
        out_shape=(
            jax.ShapeDtypeStruct((B_pad, X_PAD), jnp.bfloat16),
            jax.ShapeDtypeStruct((B_pad, Z_PAD), jnp.float32),
            jax.ShapeDtypeStruct((num_tiles * 8, 128), jnp.float32),
        ),
        compiler_params=pltpu.CompilerParams(
            dimension_semantics=("parallel",),
            vmem_limit_bytes=48 * 1024 * 1024,
        ),
    )(
        n_valid,
        x_pad,
        packed["w_enc"], packed["b_enc"],
        packed["w_lat"], packed["b_lat"],
        packed["w_dec"], packed["b_dec"],
        packed["w_out"], packed["b_out"],
    )

    recon = recon_pad[:B, :X_DIM].astype(jnp.float32)
    mean_bn = latent[:B, :Z_DIM]
    lvar_bn = latent[:B, Z_DIM:2 * Z_DIM]
    loss = jnp.sum(loss_parts.reshape(num_tiles, 8, 128)[:, 0, 0])

    return {"input_x": x, "recon_x": recon, "loss": loss,
            "mean": mean_bn, "lvar": lvar_bn}


def m1_ff_reference(x, params, eps=1e-3):
    """Pure-JAX f32 eval-mode reference (mirrors the PyTorch module)."""
    xf = x.reshape(-1, X_DIM).astype(jnp.float32)
    h = jax.nn.relu(xf @ params["en0_w"].T + params["en0_b"])
    mean = h @ params["enm_w"].T + params["enm_b"]
    lvar = h @ params["enl_w"].T + params["enl_b"]

    def bn(v, tag):
        scale = params[f"{tag}_gamma"] / jnp.sqrt(params[f"{tag}_rvar"] + eps)
        return (v - params[f"{tag}_rmean"]) * scale + params[f"{tag}_beta"]

    mean_bn, lvar_bn = bn(mean, "bnm"), bn(lvar, "bnl")
    z = mean_bn
    hd = jax.nn.relu(z @ params["dez_w"].T + params["dez_b"])
    recon = jax.nn.sigmoid(hd @ params["de0_w"].T + params["de0_b"])
    log_r = jnp.maximum(jnp.log(recon), -100.0)
    log_1mr = jnp.maximum(jnp.log1p(-recon), -100.0)
    bce = -jnp.sum(xf * log_r + (1.0 - xf) * log_1mr)
    kld = -0.5 * jnp.sum(1.0 + lvar_bn - mean_bn * mean_bn - jnp.exp(lvar_bn))
    return recon, mean_bn, lvar_bn, bce + kld


if __name__ == "__main__":
    key = jax.random.PRNGKey(0)
    k_param, k_x = jax.random.split(key)

    params = init_params(k_param)
    packed = pack_params(params)
    # BCE targets must lie in [0, 1] (MNIST-like pixel intensities).
    x = jax.random.uniform(k_x, (8, 1, 28, 28), jnp.float32, 0.0, 1.0)

    out = m1_ff_forward(x, packed)
    jax.block_until_ready(out["recon_x"])
    jax.block_until_ready(out["loss"])

    assert out["recon_x"].shape == (8, X_DIM)
    assert out["mean"].shape == (8, Z_DIM)
    assert out["lvar"].shape == (8, Z_DIM)
    assert out["loss"].shape == ()
    assert bool(jnp.isfinite(out["loss"]))

    # Loose correctness check vs. f32 reference (bf16 MXU operands + bf16 recon
    # writeback + approx reciprocal in sigmoid -> small drift).
    ref_recon, ref_mean, ref_lvar, ref_loss = m1_ff_reference(x, params)
    assert bool(jnp.max(jnp.abs(out["recon_x"] - ref_recon)) < 5e-2)
    assert bool(jnp.max(jnp.abs(out["mean"] - ref_mean)) < 5e-2)
    assert bool(jnp.max(jnp.abs(out["lvar"] - ref_lvar)) < 5e-2)
    assert bool(jnp.abs(out["loss"] - ref_loss) < 0.03 * jnp.abs(ref_loss) + 1.0)

    print("KERNEL_OK")
</pallas_src>

<mosaic_0001>
module attributes {stable_mosaic.version = 11 : i64} {
  func.func @m1_ff_kernel(%arg0: i32, %arg1: memref<1xi32, #tpu.memory_space<smem>>, %arg2: memref<8x896xf32, #tpu.memory_space<vmem>>, %arg3: memref<896x512xbf16, #tpu.memory_space<vmem>>, %arg4: memref<1x512xf32, #tpu.memory_space<vmem>>, %arg5: memref<512x128xbf16, #tpu.memory_space<vmem>>, %arg6: memref<1x128xf32, #tpu.memory_space<vmem>>, %arg7: memref<128x512xbf16, #tpu.memory_space<vmem>>, %arg8: memref<1x512xf32, #tpu.memory_space<vmem>>, %arg9: memref<512x896xbf16, #tpu.memory_space<vmem>>, %arg10: memref<1x896xf32, #tpu.memory_space<vmem>>, %arg11: memref<8x896xbf16, #tpu.memory_space<vmem>>, %arg12: memref<8x128xf32, #tpu.memory_space<vmem>>, %arg13: memref<8x128xf32, #tpu.memory_space<vmem>>) attributes {dimension_semantics = [#tpu.dimension_semantics<parallel>], iteration_bounds = array<i64: 1>, scalar_prefetch = 1 : i64, scratch_operands = 0 : i64, tpu.core_type = #tpu.core_type<tc>, window_params = [{transform_indices = @transform_0, window_bounds = array<i64: 8, 896>}, {pipeline_mode = #tpu.pipeline_mode<synchronous>, transform_indices = @transform_1, window_bounds = array<i64: 896, 512>}, {pipeline_mode = #tpu.pipeline_mode<synchronous>, transform_indices = @transform_2, window_bounds = array<i64: 1, 512>}, {pipeline_mode = #tpu.pipeline_mode<synchronous>, transform_indices = @transform_3, window_bounds = array<i64: 512, 128>}, {pipeline_mode = #tpu.pipeline_mode<synchronous>, transform_indices = @transform_4, window_bounds = array<i64: 1, 128>}, {pipeline_mode = #tpu.pipeline_mode<synchronous>, transform_indices = @transform_5, window_bounds = array<i64: 128, 512>}, {pipeline_mode = #tpu.pipeline_mode<synchronous>, transform_indices = @transform_6, window_bounds = array<i64: 1, 512>}, {pipeline_mode = #tpu.pipeline_mode<synchronous>, transform_indices = @transform_7, window_bounds = array<i64: 512, 896>}, {pipeline_mode = #tpu.pipeline_mode<synchronous>, transform_indices = @transform_8, window_bounds = array<i64: 1, 896>}, {transform_indices = @transform_9, window_bounds = array<i64: 8, 896>}, {transform_indices = @transform_10, window_bounds = array<i64: 8, 128>}, {transform_indices = @transform_11, window_bounds = array<i64: 8, 128>}]} {
    %c0 = arith.constant 0 : index
    %c0_0 = arith.constant 0 : index
    %0 = vector.load %arg2[%c0, %c0_0] : memref<8x896xf32, #tpu.memory_space<vmem>>, vector<8x896xf32>
    %1 = arith.truncf %0 : vector<8x896xf32> to vector<8x896xbf16>
    %c0_1 = arith.constant 0 : index
    %c0_2 = arith.constant 0 : index
    %2 = vector.load %arg3[%c0_1, %c0_2] : memref<896x512xbf16, #tpu.memory_space<vmem>>, vector<896x512xbf16>
    %cst = arith.constant dense<0.000000e+00> : vector<8x512xf32>
    %3 = tpu.matmul %1, %2, %cst {dimension_numbers = #tpu.dot_dimension_numbers<[1], [0], [0], [1], [0, 0, 1, 1], [], []>} : vector<8x896xbf16>, vector<896x512xbf16>, vector<8x512xf32> -> vector<8x512xf32>
    %c0_3 = arith.constant 0 : index
    %c0_4 = arith.constant 0 : index
    %4 = vector.load %arg4[%c0_3, %c0_4] : memref<1x512xf32, #tpu.memory_space<vmem>>, vector<1x512xf32>
    %5 = vector.broadcast %4 : vector<1x512xf32> to vector<8x512xf32>
    %6 = arith.addf %3, %5 : vector<8x512xf32>
    %cst_5 = arith.constant 0.000000e+00 : f32
    %7 = vector.broadcast %cst_5 : f32 to vector<8x512xf32>
    %8 = arith.maximumf %6, %7 : vector<8x512xf32>
    %9 = arith.truncf %8 : vector<8x512xf32> to vector<8x512xbf16>
    %c0_6 = arith.constant 0 : index
    %c0_7 = arith.constant 0 : index
    %10 = vector.load %arg5[%c0_6, %c0_7] : memref<512x128xbf16, #tpu.memory_space<vmem>>, vector<512x128xbf16>
    %cst_8 = arith.constant dense<0.000000e+00> : vector<8x128xf32>
    %11 = tpu.matmul %9, %10, %cst_8 {dimension_numbers = #tpu.dot_dimension_numbers<[1], [0], [0], [1], [0, 0, 1, 1], [], []>} : vector<8x512xbf16>, vector<512x128xbf16>, vector<8x128xf32> -> vector<8x128xf32>
    %c0_9 = arith.constant 0 : index
    %c0_10 = arith.constant 0 : index
    %12 = vector.load %arg6[%c0_9, %c0_10] : memref<1x128xf32, #tpu.memory_space<vmem>>, vector<1x128xf32>
    %13 = vector.broadcast %12 : vector<1x128xf32> to vector<8x128xf32>
    %14 = arith.addf %11, %13 : vector<8x128xf32>
    %c0_11 = arith.constant 0 : index
    %c0_12 = arith.constant 0 : index
    %15 = vector.load %arg12[%c0_11, %c0_12] : memref<8x128xf32, #tpu.memory_space<vmem>>, vector<8x128xf32>
    tpu.vector_store %arg12[%c0_11, %c0_12], %14 {strides = array<i32>} : memref<8x128xf32, #tpu.memory_space<vmem>>, vector<8x128xf32>,
    %16 = arith.truncf %14 : vector<8x128xf32> to vector<8x128xbf16>
    %c0_13 = arith.constant 0 : index
    %c0_14 = arith.constant 0 : index
    %17 = vector.load %arg7[%c0_13, %c0_14] : memref<128x512xbf16, #tpu.memory_space<vmem>>, vector<128x512xbf16>
    %cst_15 = arith.constant dense<0.000000e+00> : vector<8x512xf32>
    %18 = tpu.matmul %16, %17, %cst_15 {dimension_numbers = #tpu.dot_dimension_numbers<[1], [0], [0], [1], [0, 0, 1, 1], [], []>} : vector<8x128xbf16>, vector<128x512xbf16>, vector<8x512xf32> -> vector<8x512xf32>
    %c0_16 = arith.constant 0 : index
    %c0_17 = arith.constant 0 : index
    %19 = vector.load %arg8[%c0_16, %c0_17] : memref<1x512xf32, #tpu.memory_space<vmem>>, vector<1x512xf32>
    %20 = vector.broadcast %19 : vector<1x512xf32> to vector<8x512xf32>
    %21 = arith.addf %18, %20 : vector<8x512xf32>
    %cst_18 = arith.constant 0.000000e+00 : f32
    %22 = vector.broadcast %cst_18 : f32 to vector<8x512xf32>
    %23 = arith.maximumf %21, %22 : vector<8x512xf32>
    %24 = arith.truncf %23 : vector<8x512xf32> to vector<8x512xbf16>
    %c0_19 = arith.constant 0 : index
    %c0_20 = arith.constant 0 : index
    %25 = vector.load %arg9[%c0_19, %c0_20] : memref<512x896xbf16, #tpu.memory_space<vmem>>, vector<512x896xbf16>
    %cst_21 = arith.constant dense<0.000000e+00> : vector<8x896xf32>
    %26 = tpu.matmul %24, %25, %cst_21 {dimension_numbers = #tpu.dot_dimension_numbers<[1], [0], [0], [1], [0, 0, 1, 1], [], []>} : vector<8x512xbf16>, vector<512x896xbf16>, vector<8x896xf32> -> vector<8x896xf32>
    %c0_22 = arith.constant 0 : index
    %c0_23 = arith.constant 0 : index
    %27 = vector.load %arg10[%c0_22, %c0_23] : memref<1x896xf32, #tpu.memory_space<vmem>>, vector<1x896xf32>
    %28 = vector.broadcast %27 : vector<1x896xf32> to vector<8x896xf32>
    %29 = arith.addf %26, %28 : vector<8x896xf32>
    %30 = math.absf %29 : vector<8x896xf32>
    %cst_24 = arith.constant 0.000000e+00 : f32
    %31 = vector.broadcast %cst_24 : f32 to vector<8x896xf32>
    %32 = arith.subf %31, %30 : vector<8x896xf32>
    %33 = math.exp %32 : vector<8x896xf32>
    %cst_25 = arith.constant 1.000000e+00 : f32
    %34 = vector.broadcast %cst_25 : f32 to vector<8x896xf32>
    %35 = arith.addf %34, %33 : vector<8x896xf32>
    %36 = tpu.reciprocal %35 {approx = true} : vector<8x896xf32> -> vector<8x896xf32>
    %cst_26 = arith.constant 0.000000e+00 : f32
    %37 = vector.broadcast %cst_26 : f32 to vector<8x896xf32>
    %38 = arith.cmpf oge, %29, %37 : vector<8x896xf32>
    %39 = arith.mulf %33, %36 : vector<8x896xf32>
    %40 = arith.select %38, %36, %39 : vector<8x896xi1>, vector<8x896xf32>
    %41 = arith.truncf %40 : vector<8x896xf32> to vector<8x896xbf16>
    %c0_27 = arith.constant 0 : index
    %c0_28 = arith.constant 0 : index
    %42 = vector.load %arg11[%c0_27, %c0_28] : memref<8x896xbf16, #tpu.memory_space<vmem>>, vector<8x896xbf16>
    tpu.vector_store %arg11[%c0_27, %c0_28], %41 {strides = array<i32>} : memref<8x896xbf16, #tpu.memory_space<vmem>>, vector<8x896xbf16>,
    %c8_i32 = arith.constant 8 : i32
    %43 = arith.muli %arg0, %c8_i32 : i32
    %44 = tpu.iota {dimensions = array<i32: 0>} : vector<8x1xi32>
    %45 = vector.broadcast %43 : i32 to vector<8x1xi32>
    %46 = arith.addi %45, %44 : vector<8x1xi32>
    %c0_29 = arith.constant 0 : index
    %47 = memref.load %arg1[%c0_29] : memref<1xi32, #tpu.memory_space<smem>>
    %48 = vector.broadcast %47 : i32 to vector<8x1xi32>
    %49 = arith.cmpi slt, %46, %48 : vector<8x1xi32>
    %50 = arith.extui %49 : vector<8x1xi1> to vector<8x1xi32>
    %51 = arith.sitofp %50 : vector<8x1xi32> to vector<8x1xf32>
    %52 = vector.shape_cast %51 : vector<8x1xf32> to vector<1x8x1xf32>
    %cst_30 = arith.constant dense<0.000000e+00> : vector<1xf32>
    %53 = vector.multi_reduction <add>, %52, %cst_30 [1, 2] : vector<1x8x1xf32> to vector<1xf32>
    %54 = vector.shape_cast %53 : vector<1xf32> to vector<1x1x1xf32>
    %55 = vector.extract %54[0, 0, 0] : f32 from vector<1x1x1xf32>
    %cst_31 = arith.constant 0.000000e+00 : f32
    %56 = vector.broadcast %cst_31 : f32 to vector<8x896xf32>
    %57 = arith.maximumf %29, %56 : vector<8x896xf32>
    %58 = arith.mulf %0, %29 : vector<8x896xf32>
    %59 = arith.subf %57, %58 : vector<8x896xf32>
    %60 = math.log1p %33 : vector<8x896xf32>
    %61 = arith.addf %59, %60 : vector<8x896xf32>
    %62 = vector.broadcast %51 : vector<8x1xf32> to vector<8x896xf32>
    %63 = arith.mulf %61, %62 : vector<8x896xf32>
    %64 = vector.shape_cast %63 : vector<8x896xf32> to vector<1x8x896xf32>
    %cst_32 = arith.constant dense<0.000000e+00> : vector<1xf32>
    %65 = vector.multi_reduction <add>, %64, %cst_32 [1, 2] : vector<1x8x896xf32> to vector<1xf32>
    %66 = vector.shape_cast %65 : vector<1xf32> to vector<1x1x1xf32>
    %67 = vector.extract %66[0, 0, 0] : f32 from vector<1x1x1xf32>
    %cst_33 = arith.constant 77.6324844 : f32
    %68 = arith.mulf %55, %cst_33 : f32
    %69 = arith.subf %67, %68 : f32
    %70 = tpu.iota {dimensions = array<i32: 1>} : vector<8x128xi32>
    %c20_i32 = arith.constant 20 : i32
    %71 = vector.broadcast %c20_i32 : i32 to vector<8x128xi32>
    %72 = arith.cmpi slt, %70, %71 : vector<8x128xi32>
    %cst_34 = arith.constant 1.000000e+00 : f32
    %cst_35 = arith.constant 0.000000e+00 : f32
    %73 = vector.broadcast %cst_34 : f32 to vector<8x128xf32>
    %74 = vector.broadcast %cst_35 : f32 to vector<8x128xf32>
    %75 = arith.select %72, %73, %74 : vector<8x128xi1>, vector<8x128xf32>
    %c20_i32_36 = arith.constant 20 : i32
    %76 = vector.broadcast %c20_i32_36 : i32 to vector<8x128xi32>
    %77 = arith.cmpi sge, %70, %76 : vector<8x128xi32>
    %c40_i32 = arith.constant 40 : i32
    %78 = vector.broadcast %c40_i32 : i32 to vector<8x128xi32>
    %79 = arith.cmpi slt, %70, %78 : vector<8x128xi32>
    %80 = arith.andi %77, %79 : vector<8x128xi1>
    %cst_37 = arith.constant 1.000000e+00 : f32
    %cst_38 = arith.constant 0.000000e+00 : f32
    %81 = vector.broadcast %cst_37 : f32 to vector<8x128xf32>
    %82 = vector.broadcast %cst_38 : f32 to vector<8x128xf32>
    %83 = arith.select %80, %81, %82 : vector<8x128xi1>, vector<8x128xf32>
    %cst_39 = arith.constant 5.000000e-01 : f32
    %84 = vector.broadcast %cst_39 : f32 to vector<8x128xf32>
    %85 = arith.cmpf ogt, %83, %84 : vector<8x128xf32>
    %cst_40 = arith.constant 0.000000e+00 : f32
    %86 = vector.broadcast %cst_40 : f32 to vector<8x128xf32>
    %87 = arith.select %85, %14, %86 : vector<8x128xi1>, vector<8x128xf32>
    %88 = math.exp %87 : vector<8x128xf32>
    %89 = arith.subf %14, %88 : vector<8x128xf32>
    %90 = arith.mulf %89, %83 : vector<8x128xf32>
    %91 = arith.mulf %14, %14 : vector<8x128xf32>
    %92 = arith.mulf %91, %75 : vector<8x128xf32>
    %93 = arith.subf %90, %92 : vector<8x128xf32>
    %cst_41 = arith.constant dense<0.000000e+00> : vector<8xf32>
    %94 = vector.multi_reduction <add>, %93, %cst_41 [1] : vector<8x128xf32> to vector<8xf32>
    %95 = vector.shape_cast %94 : vector<8xf32> to vector<8x1xf32>
    %cst_42 = arith.constant 2.000000e+01 : f32
    %96 = vector.broadcast %cst_42 : f32 to vector<8x1xf32>
    %97 = arith.addf %96, %95 : vector<8x1xf32>
    %98 = arith.mulf %97, %51 : vector<8x1xf32>
    %99 = vector.shape_cast %98 : vector<8x1xf32> to vector<1x8x1xf32>
    %cst_43 = arith.constant dense<0.000000e+00> : vector<1xf32>
    %100 = vector.multi_reduction <add>, %99, %cst_43 [1, 2] : vector<1x8x1xf32> to vector<1xf32>
    %101 = vector.shape_cast %100 : vector<1xf32> to vector<1x1x1xf32>
    %102 = vector.extract %101[0, 0, 0] : f32 from vector<1x1x1xf32>
    %cst_44 = arith.constant -5.000000e-01 : f32
    %103 = arith.mulf %cst_44, %102 : f32
    %104 = arith.addf %69, %103 : f32
    %105 = vector.broadcast %104 : f32 to vector<8x128xf32>
    %c0_45 = arith.constant 0 : index
    %c0_46 = arith.constant 0 : index
    %106 = vector.load %arg13[%c0_45, %c0_46] : memref<8x128xf32, #tpu.memory_space<vmem>>, vector<8x128xf32>
    tpu.vector_store %arg13[%c0_45, %c0_46], %105 {strides = array<i32>} : memref<8x128xf32, #tpu.memory_space<vmem>>, vector<8x128xf32>,
    return
  }
  func.func @transform_0(%arg0: i32, %arg1: memref<1xi32, #tpu.memory_space<smem>>) -> (i32, i32) {
    %c0_i32 = arith.constant 0 : i32
    %c0_i32_0 = arith.constant 0 : i32
    return %arg0, %c0_i32 : i32, i32
  }
  func.func @transform_1(%arg0: i32, %arg1: memref<1xi32, #tpu.memory_space<smem>>) -> (i32, i32) {
    %c0_i32 = arith.constant 0 : i32
    %c0_i32_0 = arith.constant 0 : i32
    %c0_i32_1 = arith.constant 0 : i32
    return %c0_i32, %c0_i32_0 : i32, i32
  }
  func.func @transform_2(%arg0: i32, %arg1: memref<1xi32, #tpu.memory_space<smem>>) -> (i32, i32) {
    %c0_i32 = arith.constant 0 : i32
    %c0_i32_0 = arith.constant 0 : i32
    %c0_i32_1 = arith.constant 0 : i32
    return %c0_i32, %c0_i32_0 : i32, i32
  }
  func.func @transform_3(%arg0: i32, %arg1: memref<1xi32, #tpu.memory_space<smem>>) -> (i32, i32) {
    %c0_i32 = arith.constant 0 : i32
    %c0_i32_0 = arith.constant 0 : i32
    %c0_i32_1 = arith.constant 0 : i32
    return %c0_i32, %c0_i32_0 : i32, i32
  }
  func.func @transform_4(%arg0: i32, %arg1: memref<1xi32, #tpu.memory_space<smem>>) -> (i32, i32) {
    %c0_i32 = arith.constant 0 : i32
    %c0_i32_0 = arith.constant 0 : i32
    %c0_i32_1 = arith.constant 0 : i32
    return %c0_i32, %c0_i32_0 : i32, i32
  }
  func.func @transform_5(%arg0: i32, %arg1: memref<1xi32, #tpu.memory_space<smem>>) -> (i32, i32) {
    %c0_i32 = arith.constant 0 : i32
    %c0_i32_0 = arith.constant 0 : i32
    %c0_i32_1 = arith.constant 0 : i32
    return %c0_i32, %c0_i32_0 : i32, i32
  }
  func.func @transform_6(%arg0: i32, %arg1: memref<1xi32, #tpu.memory_space<smem>>) -> (i32, i32) {
    %c0_i32 = arith.constant 0 : i32
    %c0_i32_0 = arith.constant 0 : i32
    %c0_i32_1 = arith.constant 0 : i32
    return %c0_i32, %c0_i32_0 : i32, i32
  }
  func.func @transform_7(%arg0: i32, %arg1: memref<1xi32, #tpu.memory_space<smem>>) -> (i32, i32) {
    %c0_i32 = arith.constant 0 : i32
    %c0_i32_0 = arith.constant 0 : i32
    %c0_i32_1 = arith.constant 0 : i32
    return %c0_i32, %c0_i32_0 : i32, i32
  }
  func.func @transform_8(%arg0: i32, %arg1: memref<1xi32, #tpu.memory_space<smem>>) -> (i32, i32) {
    %c0_i32 = arith.constant 0 : i32
    %c0_i32_0 = arith.constant 0 : i32
    %c0_i32_1 = arith.constant 0 : i32
    return %c0_i32, %c0_i32_0 : i32, i32
  }
  func.func @transform_9(%arg0: i32, %arg1: memref<1xi32, #tpu.memory_space<smem>>) -> (i32, i32) {
    %c0_i32 = arith.constant 0 : i32
    %c0_i32_0 = arith.constant 0 : i32
    return %arg0, %c0_i32 : i32, i32
  }
  func.func @transform_10(%arg0: i32, %arg1: memref<1xi32, #tpu.memory_space<smem>>) -> (i32, i32) {
    %c0_i32 = arith.constant 0 : i32
    %c0_i32_0 = arith.constant 0 : i32
    return %arg0, %c0_i32 : i32, i32
  }
  func.func @transform_11(%arg0: i32, %arg1: memref<1xi32, #tpu.memory_space<smem>>) -> (i32, i32) {
    %c0_i32 = arith.constant 0 : i32
    %c0_i32_0 = arith.constant 0 : i32
    return %arg0, %c0_i32 : i32, i32
  }
}

</mosaic_0001>

<llo_original>
// kernel: tpu_custom_call.1
$region0: #{tpu_custom_call.1}
  #allocation0 [shape = 'u32[]', space=smem, size = 0x4, offset = 0x4, fixed_abs, tag = 'smem constant byte address 0x4 - core index']
  #allocation1 [shape = 'u32[72,128]{1,0:T(1,128)}', space=vmem, size = 0x9000, scoped, tag = 'internal scratch']
  #allocation2 [shape = 's32[1]{0}', space=sflag, size = 0x4, scoped, tag = 'scoped memory for tpu_custom_call.1']
  #allocation3 [shape = 's32[1]{0:T(128)S(6)}', space=smem, size = 0x200, scoped, tag = 'prefetched SMEM operand 0']
  %s0 = inlined_call_operand.<no memory space> [shape: s32[1], index: 0, kind: input, shape index: {}]
  %s1 = inlined_call_operand.hbm [shape: f32[8,896], index: 1, kind: input, shape index: {}]
  %s2 = inlined_call_operand.hbm [shape: bf16[896,512], index: 2, kind: input, shape index: {}]
  %s3 = inlined_call_operand.hbm [shape: f32[1,512], index: 3, kind: input, shape index: {}]
  %s4 = inlined_call_operand.hbm [shape: bf16[512,128], index: 4, kind: input, shape index: {}]
  %s5 = inlined_call_operand.vmem [shape: f32[1,128], index: 5, kind: input, shape index: {}]
  %s6 = inlined_call_operand.hbm [shape: bf16[128,512], index: 6, kind: input, shape index: {}]
  %s7 = inlined_call_operand.hbm [shape: f32[1,512], index: 7, kind: input, shape index: {}]
  %s8 = inlined_call_operand.hbm [shape: bf16[512,896], index: 8, kind: input, shape index: {}]
  %s9 = inlined_call_operand.vmem [shape: f32[1,896], index: 9, kind: input, shape index: {}]
  %s10 = inlined_call_operand.hbm [shape: bf16[8,896], index: 10, kind: output, shape index: {0}]
  %s11 = inlined_call_operand.hbm [shape: f32[8,128], index: 11, kind: output, shape index: {1}]
  %s12 = inlined_call_operand.hbm [shape: f32[8,128], index: 12, kind: output, shape index: {2}]
  %13 = xla_tuple %s10, %s11, %s12
  %s14 = sld [smem:[#allocation0]]
  $region90: #{tpu_custom_call.1} parent=0
    _
  %s16 = ssub.s32 1, %s14
  %s17 = scalar_select 0, %s16, %s14
  %18 = sst [smem:[#allocation3]] %s0
  $region1: #{tpu_custom_call.1} parent=0
    #allocation4 [shape = 'u8[28672]{0}', space=vmem, size = 0x7000, scoped, tag = 'input window, operand 1, single buffered']
    #allocation5 [shape = 's32[1]{0}', space=sflag, size = 0x4, scoped, tag = 'scoped memory for tpu_custom_call.1']
    #allocation6 [shape = 's32[1]{0}', space=sflag, size = 0x4, scoped, tag = 'scoped memory for tpu_custom_call.1']
    #allocation7 [shape = 'u8[917504]{0}', space=vmem, size = 0xe0000, scoped, tag = 'input window, operand 2, single buffered']
    #allocation8 [shape = 's32[1]{0}', space=sflag, size = 0x4, scoped, tag = 'scoped memory for tpu_custom_call.1']
    #allocation9 [shape = 'u8[2048]{0}', space=vmem, size = 0x800, scoped, tag = 'input window, operand 3, single buffered']
    #allocation10 [shape = 'u8[131072]{0}', space=vmem, size = 0x20000, scoped, tag = 'input window, operand 4, single buffered']
    #allocation11 [shape = 's32[1]{0}', space=sflag, size = 0x4, scoped, tag = 'scoped memory for tpu_custom_call.1']
    #allocation12 [shape = 'u8[131072]{0}', space=vmem, size = 0x20000, scoped, tag = 'input window, operand 6, single buffered']
    #allocation13 [shape = 'u8[2048]{0}', space=vmem, size = 0x800, scoped, tag = 'input window, operand 7, single buffered']
    #allocation14 [shape = 's32[1]{0}', space=sflag, size = 0x4, scoped, tag = 'scoped memory for tpu_custom_call.1']
    #allocation15 [shape = 'u8[917504]{0}', space=vmem, size = 0xe0000, scoped, tag = 'input window, operand 8, single buffered']
    #allocation16 [shape = 'u8[14336]{0}', space=vmem, size = 0x3800, scoped, tag = 'output window, operand 0, single buffered']
    #allocation17 [shape = 'u8[4096]{0}', space=vmem, size = 0x1000, scoped, tag = 'output window, operand 1, single buffered']
    #allocation18 [shape = 's32[1]{0}', space=sflag, size = 0x4, scoped, tag = 'scoped memory for tpu_custom_call.1']
    #allocation19 [shape = 'u8[4096]{0}', space=vmem, size = 0x1000, scoped, tag = 'output window, operand 2, single buffered']
    %19 = vsyncpa [#allocation5], 0
    %20 = vsyncpa [#allocation8], 0
    %21 = vsyncpa [#allocation11], 0
    %22 = vsyncpa [#allocation14], 0
    %23 = vsyncpa [#allocation6], 0
    %24 = vsyncpa [#allocation18], 0
    // Predicated region
    $region2: #{tpu_custom_call.1} parent=1 // pred_check
      _
    $region3: #{tpu_custom_call.1} parent=1 // pred_check_branch
      %26 = sbr.rel (0) target = $region5
    $region4: #{tpu_custom_call.1} parent=1 // pred_region
      %28 = vsyncadd [#allocation5], 0
      %s30 = sshll.u32 %s1, 4
      %s31 = int_to_ptr.hbm [resolvable:$true] %s30
      %s32 = sshll.u32 [#allocation4], 4
      %s33 = int_to_ptr.vmem [resolvable:$true] %s32
      %35 = dma.hbm_to_vmem [thread:$0]  %s31, 896, %s33, [#allocation5]
    $region5: #{tpu_custom_call.1} parent=1 // pred_fallthru
      _
    // Predicated region
    $region6: #{tpu_custom_call.1} parent=1 // pred_check
      _
    $region7: #{tpu_custom_call.1} parent=1 // pred_check_branch
      %37 = sbr.rel (0) target = $region9
    $region8: #{tpu_custom_call.1} parent=1 // pred_region
      %39 = vsyncadd [#allocation8], 0
      %s40 = sshll.u32 %s2, 4
      %s41 = int_to_ptr.hbm [resolvable:$true] %s40
      %s42 = sshll.u32 [#allocation7], 4
      %s43 = int_to_ptr.vmem [resolvable:$true] %s42
      %48 = dma.hbm_to_vmem [thread:$0]  %s41, 28672, %s43, [#allocation8], 256, 256, 16
    $region9: #{tpu_custom_call.1} parent=1 // pred_fallthru
      _
    // Predicated region
    $region10: #{tpu_custom_call.1} parent=1 // pred_check
      _
    $region11: #{tpu_custom_call.1} parent=1 // pred_check_branch
      %50 = sbr.rel (0) target = $region13
    $region12: #{tpu_custom_call.1} parent=1 // pred_region
      %52 = vsyncadd [#allocation8], 0
      %s54 = sshll.u32 %s3, 4
      %s55 = int_to_ptr.hbm [resolvable:$true] %s54
      %s56 = sshll.u32 [#allocation9], 4
      %s57 = int_to_ptr.vmem [resolvable:$true] %s56
      %59 = dma.hbm_to_vmem [thread:$0]  %s55, 64, %s57, [#allocation8]
    $region13: #{tpu_custom_call.1} parent=1 // pred_fallthru
      _
    // Predicated region
    $region14: #{tpu_custom_call.1} parent=1 // pred_check
      _
    $region15: #{tpu_custom_call.1} parent=1 // pred_check_branch
      %61 = sbr.rel (0) target = $region17
    $region16: #{tpu_custom_call.1} parent=1 // pred_region
      %63 = vsyncadd [#allocation11], 0
      %s64 = sshll.u32 %s4, 4
      %s65 = int_to_ptr.hbm [resolvable:$true] %s64
      %s66 = sshll.u32 [#allocation10], 4
      %s67 = int_to_ptr.vmem [resolvable:$true] %s66
      %72 = dma.hbm_to_vmem [thread:$0]  %s65, 4096, %s67, [#allocation11], 64, 64, 4
    $region17: #{tpu_custom_call.1} parent=1 // pred_fallthru
      _
    // Predicated region
    $region18: #{tpu_custom_call.1} parent=1 // pred_check
      _
    $region19: #{tpu_custom_call.1} parent=1 // pred_check_branch
      %74 = sbr.rel (0) target = $region21
    $region20: #{tpu_custom_call.1} parent=1 // pred_region
      _
    $region21: #{tpu_custom_call.1} parent=1 // pred_fallthru
      _
    // Predicated region
    $region22: #{tpu_custom_call.1} parent=1 // pred_check
      _
    $region23: #{tpu_custom_call.1} parent=1 // pred_check_branch
      %76 = sbr.rel (0) target = $region25
    $region24: #{tpu_custom_call.1} parent=1 // pred_region
      %78 = vsyncadd [#allocation11], 0
      %s79 = sshll.u32 %s6, 4
      %s80 = int_to_ptr.hbm [resolvable:$true] %s79
      %s81 = sshll.u32 [#allocation12], 4
      %s82 = int_to_ptr.vmem [resolvable:$true] %s81
      %87 = dma.hbm_to_vmem [thread:$0]  %s80, 4096, %s82, [#allocation11], 256, 256, 16
    $region25: #{tpu_custom_call.1} parent=1 // pred_fallthru
      _
    // Predicated region
    $region26: #{tpu_custom_call.1} parent=1 // pred_check
      _
    $region27: #{tpu_custom_call.1} parent=1 // pred_check_branch
      %89 = sbr.rel (0) target = $region29
    $region28: #{tpu_custom_call.1} parent=1 // pred_region
      %91 = vsyncadd [#allocation14], 0
      %s93 = sshll.u32 %s7, 4
      %s94 = int_to_ptr.hbm [resolvable:$true] %s93
      %s95 = sshll.u32 [#allocation13], 4
      %s96 = int_to_ptr.vmem [resolvable:$true] %s95
      %98 = dma.hbm_to_vmem [thread:$0]  %s94, 64, %s96, [#allocation14]
    $region29: #{tpu_custom_call.1} parent=1 // pred_fallthru
      _
    // Predicated region
    $region30: #{tpu_custom_call.1} parent=1 // pred_check
      _
    $region31: #{tpu_custom_call.1} parent=1 // pred_check_branch
      %100 = sbr.rel (0) target = $region33
    $region32: #{tpu_custom_call.1} parent=1 // pred_region
      %102 = vsyncadd [#allocation14], 0
      %s103 = sshll.u32 %s8, 4
      %s104 = int_to_ptr.hbm [resolvable:$true] %s103
      %s105 = sshll.u32 [#allocation15], 4
      %s106 = int_to_ptr.vmem [resolvable:$true] %s105
      %111 = dma.hbm_to_vmem [thread:$0]  %s104, 28672, %s106, [#allocation14], 448, 448, 28
    $region33: #{tpu_custom_call.1} parent=1 // pred_fallthru
      _
    // Predicated region
    $region34: #{tpu_custom_call.1} parent=1 // pred_check
      _
    $region35: #{tpu_custom_call.1} parent=1 // pred_check_branch
      %113 = sbr.rel (0) target = $region37
    $region36: #{tpu_custom_call.1} parent=1 // pred_region
      _
    $region37: #{tpu_custom_call.1} parent=1 // pred_fallthru
      _
    // Predicated region
    $region38: #{tpu_custom_call.1} parent=1 // pred_check
      _
    $region39: #{tpu_custom_call.1} parent=1 // pred_check_branch
      %115 = sbr.rel (0) target = $region41
    $region40: #{tpu_custom_call.1} parent=1 // pred_region
      %117 = dma.done [#allocation5], 896
    $region41: #{tpu_custom_call.1} parent=1 // pred_fallthru
      _
    // Predicated region
    $region42: #{tpu_custom_call.1} parent=1 // pred_check
      _
    $region43: #{tpu_custom_call.1} parent=1 // pred_check_branch
      %119 = sbr.rel (0) target = $region45
    $region44: #{tpu_custom_call.1} parent=1 // pred_region
      %121 = dma.done [#allocation8], 28672
    $region45: #{tpu_custom_call.1} parent=1 // pred_fallthru
      _
    // Predicated region
    $region46: #{tpu_custom_call.1} parent=1 // pred_check
      _
    $region47: #{tpu_custom_call.1} parent=1 // pred_check_branch
      %123 = sbr.rel (0) target = $region49
    $region48: #{tpu_custom_call.1} parent=1 // pred_region
      %125 = dma.done [#allocation8], 64
    $region49: #{tpu_custom_call.1} parent=1 // pred_fallthru
      _
    // Predicated region
    $region50: #{tpu_custom_call.1} parent=1 // pred_check
      _
    $region51: #{tpu_custom_call.1} parent=1 // pred_check_branch
      %127 = sbr.rel (0) target = $region53
    $region52: #{tpu_custom_call.1} parent=1 // pred_region
      %129 = dma.done [#allocation11], 4096
    $region53: #{tpu_custom_call.1} parent=1 // pred_fallthru
      _
    // Predicated region
    $region54: #{tpu_custom_call.1} parent=1 // pred_check
      _
    $region55: #{tpu_custom_call.1} parent=1 // pred_check_branch
      %131 = sbr.rel (0) target = $region57
    $region56: #{tpu_custom_call.1} parent=1 // pred_region
      %133 = dma.done [#allocation11], 4096
    $region57: #{tpu_custom_call.1} parent=1 // pred_fallthru
      _
    // Predicated region
    $region58: #{tpu_custom_call.1} parent=1 // pred_check
      _
    $region59: #{tpu_custom_call.1} parent=1 // pred_check_branch
      %135 = sbr.rel (0) target = $region61
    $region60: #{tpu_custom_call.1} parent=1 // pred_region
      %137 = dma.done [#allocation14], 64
    $region61: #{tpu_custom_call.1} parent=1 // pred_fallthru
      _
    // Predicated region
    $region62: #{tpu_custom_call.1} parent=1 // pred_check
      _
    $region63: #{tpu_custom_call.1} parent=1 // pred_check_branch
      %139 = sbr.rel (0) target = $region65
    $region64: #{tpu_custom_call.1} parent=1 // pred_region
      %141 = dma.done [#allocation14], 28672
    $region65: #{tpu_custom_call.1} parent=1 // pred_fallthru
      _
    %v142 = vld [vmem:[#allocation4] sm:$0xff]
    %v143 = vld [vmem:[#allocation4 + $0x8] sm:$0xff]
    %v144 = vld [vmem:[#allocation4 + $0x10] sm:$0xff]
    %v145 = vld [vmem:[#allocation4 + $0x18] sm:$0xff]
    %v146 = vld [vmem:[#allocation4 + $0x20] sm:$0xff]
    %v147 = vld [vmem:[#allocation4 + $0x28] sm:$0xff]
    %v148 = vld [vmem:[#allocation4 + $0x30] sm:$0xff]
    %v149 = vpack.c.bf16 %v142, %v142
    %v150 = vpack.c.bf16 %v143, %v143
    %v151 = vpack.c.bf16 %v144, %v144
    %v152 = vpack.c.bf16 %v145, %v145
    %v153 = vpack.c.bf16 %v146, %v146
    %v154 = vpack.c.bf16 %v147, %v147
    %v155 = vpack.c.bf16 %v148, %v148
    %v156 = vld [vmem:[#allocation7] sm:$0xff]
    %v157 = vld [vmem:[#allocation7 + $0x8] sm:$0xff]
    %v158 = vld [vmem:[#allocation7 + $0x10] sm:$0xff]
    %v159 = vld [vmem:[#allocation7 + $0x18] sm:$0xff]
    %v160 = vld [vmem:[#allocation7 + $0x20] sm:$0xff]
    %v161 = vld [vmem:[#allocation7 + $0x28] sm:$0xff]
    %v162 = vld [vmem:[#allocation7 + $0x30] sm:$0xff]
    %v163 = vld [vmem:[#allocation7 + $0x38] sm:$0xff]
    %v164 = vld [vmem:[#allocation7 + $0x40] sm:$0xff]
    %v165 = vld [vmem:[#allocation7 + $0x48] sm:$0xff]
    %v166 = vld [vmem:[#allocation7 + $0x50] sm:$0xff]
    %v167 = vld [vmem:[#allocation7 + $0x58] sm:$0xff]
    %v168 = vld [vmem:[#allocation7 + $0x60] sm:$0xff]
    %v169 = vld [vmem:[#allocation7 + $0x68] sm:$0xff]
    %v170 = vld [vmem:[#allocation7 + $0x70] sm:$0xff]
    %v171 = vld [vmem:[#allocation7 + $0x78] sm:$0xff]
    %v172 = vld [vmem:[#allocation7 + $0x80] sm:$0xff]
    %v173 = vld [vmem:[#allocation7 + $0x88] sm:$0xff]
    %v174 = vld [vmem:[#allocation7 + $0x90] sm:$0xff]
    %v175 = vld [vmem:[#allocation7 + $0x98] sm:$0xff]
    %v176 = vld [vmem:[#allocation7 + $0xa0] sm:$0xff]
    %v177 = vld [vmem:[#allocation7 + $0xa8] sm:$0xff]
    %v178 = vld [vmem:[#allocation7 + $0xb0] sm:$0xff]
    %v179 = vld [vmem:[#allocation7 + $0xb8] sm:$0xff]
    %v180 = vld [vmem:[#allocation7 + $0xc0] sm:$0xff]
    %v181 = vld [vmem:[#allocation7 + $0xc8] sm:$0xff]
    %v182 = vld [vmem:[#allocation7 + $0xd0] sm:$0xff]
    %v183 = vld [vmem:[#allocation7 + $0xd8] sm:$0xff]
    %v184 = vld [vmem:[#allocation7 + $0xe0] sm:$0xff]
    %v185 = vld [vmem:[#allocation7 + $0xe8] sm:$0xff]
    %v186 = vld [vmem:[#allocation7 + $0xf0] sm:$0xff]
    %v187 = vld [vmem:[#allocation7 + $0xf8] sm:$0xff]
    %v188 = vld [vmem:[#allocation7 + $0x100] sm:$0xff]
    %v189 = vld [vmem:[#allocation7 + $0x108] sm:$0xff]
    %v190 = vld [vmem:[#allocation7 + $0x110] sm:$0xff]
    %v191 = vld [vmem:[#allocation7 + $0x118] sm:$0xff]
    %v192 = vld [vmem:[#allocation7 + $0x120] sm:$0xff]
    %v193 = vld [vmem:[#allocation7 + $0x128] sm:$0xff]
    %v194 = vld [vmem:[#allocation7 + $0x130] sm:$0xff]
    %v195 = vld [vmem:[#allocation7 + $0x138] sm:$0xff]
    %v196 = vld [vmem:[#allocation7 + $0x140] sm:$0xff]
    %v197 = vld [vmem:[#allocation7 + $0x148] sm:$0xff]
    %v198 = vld [vmem:[#allocation7 + $0x150] sm:$0xff]
    %v199 = vld [vmem:[#allocation7 + $0x158] sm:$0xff]
    %v200 = vld [vmem:[#allocation7 + $0x160] sm:$0xff]
    %v201 = vld [vmem:[#allocation7 + $0x168] sm:$0xff]
    %v202 = vld [vmem:[#allocation7 + $0x170] sm:$0xff]
    %v203 = vld [vmem:[#allocation7 + $0x178] sm:$0xff]
    %v204 = vld [vmem:[#allocation7 + $0x180] sm:$0xff]
    %v205 = vld [vmem:[#allocation7 + $0x188] sm:$0xff]
    %v206 = vld [vmem:[#allocation7 + $0x190] sm:$0xff]
    %v207 = vld [vmem:[#allocation7 + $0x198] sm:$0xff]
    %v208 = vld [vmem:[#allocation7 + $0x1a0] sm:$0xff]
    %v209 = vld [vmem:[#allocation7 + $0x1a8] sm:$0xff]
    %v210 = vld [vmem:[#allocation7 + $0x1b0] sm:$0xff]
    %v211 = vld [vmem:[#allocation7 + $0x1b8] sm:$0xff]
    %v212 = vld [vmem:[#allocation7 + $0x1c0] sm:$0xff]
    %v213 = vld [vmem:[#allocation7 + $0x1c8] sm:$0xff]
    %v214 = vld [vmem:[#allocation7 + $0x1d0] sm:$0xff]
    %v215 = vld [vmem:[#allocation7 + $0x1d8] sm:$0xff]
    %v216 = vld [vmem:[#allocation7 + $0x1e0] sm:$0xff]
    %v217 = vld [vmem:[#allocation7 + $0x1e8] sm:$0xff]
    %v218 = vld [vmem:[#allocation7 + $0x1f0] sm:$0xff]
    %v219 = vld [vmem:[#allocation7 + $0x1f8] sm:$0xff]
    %v220 = vld [vmem:[#allocation7 + $0x200] sm:$0xff]
    %v221 = vld [vmem:[#allocation7 + $0x208] sm:$0xff]
    %v222 = vld [vmem:[#allocation7 + $0x210] sm:$0xff]
    %v223 = vld [vmem:[#allocation7 + $0x218] sm:$0xff]
    %v224 = vld [vmem:[#allocation7 + $0x220] sm:$0xff]
    %v225 = vld [vmem:[#allocation7 + $0x228] sm:$0xff]
    %v226 = vld [vmem:[#allocation7 + $0x230] sm:$0xff]
    %v227 = vld [vmem:[#allocation7 + $0x238] sm:$0xff]
    %v228 = vld [vmem:[#allocation7 + $0x240] sm:$0xff]
    %v229 = vld [vmem:[#allocation7 + $0x248] sm:$0xff]
    %v230 = vld [vmem:[#allocation7 + $0x250] sm:$0xff]
    %v231 = vld [vmem:[#allocation7 + $0x258] sm:$0xff]
    %v232 = vld [vmem:[#allocation7 + $0x260] sm:$0xff]
    %v233 = vld [vmem:[#allocation7 + $0x268] sm:$0xff]
    %v234 = vld [vmem:[#allocation7 + $0x270] sm:$0xff]
    %v235 = vld [vmem:[#allocation7 + $0x278] sm:$0xff]
    %v236 = vld [vmem:[#allocation7 + $0x280] sm:$0xff]
    %v237 = vld [vmem:[#allocation7 + $0x288] sm:$0xff]
    %v238 = vld [vmem:[#allocation7 + $0x290] sm:$0xff]
    %v239 = vld [vmem:[#allocation7 + $0x298] sm:$0xff]
    %v240 = vld [vmem:[#allocation7 + $0x2a0] sm:$0xff]
    %v241 = vld [vmem:[#allocation7 + $0x2a8] sm:$0xff]
    %v242 = vld [vmem:[#allocation7 + $0x2b0] sm:$0xff]
    %v243 = vld [vmem:[#allocation7 + $0x2b8] sm:$0xff]
    %v244 = vld [vmem:[#allocation7 + $0x2c0] sm:$0xff]
    %v245 = vld [vmem:[#allocation7 + $0x2c8] sm:$0xff]
    %v246 = vld [vmem:[#allocation7 + $0x2d0] sm:$0xff]
    %v247 = vld [vmem:[#allocation7 + $0x2d8] sm:$0xff]
    %v248 = vld [vmem:[#allocation7 + $0x2e0] sm:$0xff]
    %v249 = vld [vmem:[#allocation7 + $0x2e8] sm:$0xff]
    %v250 = vld [vmem:[#allocation7 + $0x2f0] sm:$0xff]
    %v251 = vld [vmem:[#allocation7 + $0x2f8] sm:$0xff]
    %v252 = vld [vmem:[#allocation7 + $0x300] sm:$0xff]
    %v253 = vld [vmem:[#allocation7 + $0x308] sm:$0xff]
    %v254 = vld [vmem:[#allocation7 + $0x310] sm:$0xff]
    %v255 = vld [vmem:[#allocation7 + $0x318] sm:$0xff]
    %v256 = vld [vmem:[#allocation7 + $0x320] sm:$0xff]
    %v257 = vld [vmem:[#allocation7 + $0x328] sm:$0xff]
    %v258 = vld [vmem:[#allocation7 + $0x330] sm:$0xff]
    %v259 = vld [vmem:[#allocation7 + $0x338] sm:$0xff]
    %v260 = vld [vmem:[#allocation7 + $0x340] sm:$0xff]
    %v261 = vld [vmem:[#allocation7 + $0x348] sm:$0xff]
    %v262 = vld [vmem:[#allocation7 + $0x350] sm:$0xff]
    %v263 = vld [vmem:[#allocation7 + $0x358] sm:$0xff]
    %v264 = vld [vmem:[#allocation7 + $0x360] sm:$0xff]
    %v265 = vld [vmem:[#allocation7 + $0x368] sm:$0xff]
    %v266 = vld [vmem:[#allocation7 + $0x370] sm:$0xff]
    %v267 = vld [vmem:[#allocation7 + $0x378] sm:$0xff]
    %v268 = vld [vmem:[#allocation7 + $0x380] sm:$0xff]
    %v269 = vld [vmem:[#allocation7 + $0x388] sm:$0xff]
    %v270 = vld [vmem:[#allocation7 + $0x390] sm:$0xff]
    %v271 = vld [vmem:[#allocation7 + $0x398] sm:$0xff]
    %v272 = vld [vmem:[#allocation7 + $0x3a0] sm:$0xff]
    %v273 = vld [vmem:[#allocation7 + $0x3a8] sm:$0xff]
    %v274 = vld [vmem:[#allocation7 + $0x3b0] sm:$0xff]
    %v275 = vld [vmem:[#allocation7 + $0x3b8] sm:$0xff]
    %v276 = vld [vmem:[#allocation7 + $0x3c0] sm:$0xff]
    %v277 = vld [vmem:[#allocation7 + $0x3c8] sm:$0xff]
    %v278 = vld [vmem:[#allocation7 + $0x3d0] sm:$0xff]
    %v279 = vld [vmem:[#allocation7 + $0x3d8] sm:$0xff]
    %v280 = vld [vmem:[#allocation7 + $0x3e0] sm:$0xff]
    %v281 = vld [vmem:[#allocation7 + $0x3e8] sm:$0xff]
    %v282 = vld [vmem:[#allocation7 + $0x3f0] sm:$0xff]
    %v283 = vld [vmem:[#allocation7 + $0x3f8] sm:$0xff]
    %v284 = vld [vmem:[#allocation7 + $0x400] sm:$0xff]
    %v285 = vld [vmem:[#allocation7 + $0x408] sm:$0xff]
    %v286 = vld [vmem:[#allocation7 + $0x410] sm:$0xff]
    %v287 = vld [vmem:[#allocation7 + $0x418] sm:$0xff]
    %v288 = vld [vmem:[#allocation7 + $0x420] sm:$0xff]
    %v289 = vld [vmem:[#allocation7 + $0x428] sm:$0xff]
    %v290 = vld [vmem:[#allocation7 + $0x430] sm:$0xff]
    %v291 = vld [vmem:[#allocation7 + $0x438] sm:$0xff]
    %v292 = vld [vmem:[#allocation7 + $0x440] sm:$0xff]
    %v293 = vld [vmem:[#allocation7 + $0x448] sm:$0xff]
    %v294 = vld [vmem:[#allocation7 + $0x450] sm:$0xff]
    %v295 = vld [vmem:[#allocation7 + $0x458] sm:$0xff]
    %v296 = vld [vmem:[#allocation7 + $0x460] sm:$0xff]
    %v297 = vld [vmem:[#allocation7 + $0x468] sm:$0xff]
    %v298 = vld [vmem:[#allocation7 + $0x470] sm:$0xff]
    %v299 = vld [vmem:[#allocation7 + $0x478] sm:$0xff]
    %v300 = vld [vmem:[#allocation7 + $0x480] sm:$0xff]
    %v301 = vld [vmem:[#allocation7 + $0x488] sm:$0xff]
    %v302 = vld [vmem:[#allocation7 + $0x490] sm:$0xff]
    %v303 = vld [vmem:[#allocation7 + $0x498] sm:$0xff]
    %v304 = vld [vmem:[#allocation7 + $0x4a0] sm:$0xff]
    %v305 = vld [vmem:[#allocation7 + $0x4a8] sm:$0xff]
    %v306 = vld [vmem:[#allocation7 + $0x4b0] sm:$0xff]
    %v307 = vld [vmem:[#allocation7 + $0x4b8] sm:$0xff]
    %v308 = vld [vmem:[#allocation7 + $0x4c0] sm:$0xff]
    %v309 = vld [vmem:[#allocation7 + $0x4c8] sm:$0xff]
    %v310 = vld [vmem:[#allocation7 + $0x4d0] sm:$0xff]
    %v311 = vld [vmem:[#allocation7 + $0x4d8] sm:$0xff]
    %v312 = vld [vmem:[#allocation7 + $0x4e0] sm:$0xff]
    %v313 = vld [vmem:[#allocation7 + $0x4e8] sm:$0xff]
    %v314 = vld [vmem:[#allocation7 + $0x4f0] sm:$0xff]
    %v315 = vld [vmem:[#allocation7 + $0x4f8] sm:$0xff]
    %v316 = vld [vmem:[#allocation7 + $0x500] sm:$0xff]
    %v317 = vld [vmem:[#allocation7 + $0x508] sm:$0xff]
    %v318 = vld [vmem:[#allocation7 + $0x510] sm:$0xff]
    %v319 = vld [vmem:[#allocation7 + $0x518] sm:$0xff]
    %v320 = vld [vmem:[#allocation7 + $0x520] sm:$0xff]
    %v321 = vld [vmem:[#allocation7 + $0x528] sm:$0xff]
    %v322 = vld [vmem:[#allocation7 + $0x530] sm:$0xff]
    %v323 = vld [vmem:[#allocation7 + $0x538] sm:$0xff]
    %v324 = vld [vmem:[#allocation7 + $0x540] sm:$0xff]
    %v325 = vld [vmem:[#allocation7 + $0x548] sm:$0xff]
    %v326 = vld [vmem:[#allocation7 + $0x550] sm:$0xff]
    %v327 = vld [vmem:[#allocation7 + $0x558] sm:$0xff]
    %v328 = vld [vmem:[#allocation7 + $0x560] sm:$0xff]
    %v329 = vld [vmem:[#allocation7 + $0x568] sm:$0xff]
    %v330 = vld [vmem:[#allocation7 + $0x570] sm:$0xff]
    %v331 = vld [vmem:[#allocation7 + $0x578] sm:$0xff]
    %v332 = vld [vmem:[#allocation7 + $0x580] sm:$0xff]
    %v333 = vld [vmem:[#allocation7 + $0x588] sm:$0xff]
    %v334 = vld [vmem:[#allocation7 + $0x590] sm:$0xff]
    %v335 = vld [vmem:[#allocation7 + $0x598] sm:$0xff]
    %v336 = vld [vmem:[#allocation7 + $0x5a0] sm:$0xff]
    %v337 = vld [vmem:[#allocation7 + $0x5a8] sm:$0xff]
    %v338 = vld [vmem:[#allocation7 + $0x5b0] sm:$0xff]
    %v339 = vld [vmem:[#allocation7 + $0x5b8] sm:$0xff]
    %v340 = vld [vmem:[#allocation7 + $0x5c0] sm:$0xff]
    %v341 = vld [vmem:[#allocation7 + $0x5c8] sm:$0xff]
    %v342 = vld [vmem:[#allocation7 + $0x5d0] sm:$0xff]
    %v343 = vld [vmem:[#allocation7 + $0x5d8] sm:$0xff]
    %v344 = vld [vmem:[#allocation7 + $0x5e0] sm:$0xff]
    %v345 = vld [vmem:[#allocation7 + $0x5e8] sm:$0xff]
    %v346 = vld [vmem:[#allocation7 + $0x5f0] sm:$0xff]
    %v347 = vld [vmem:[#allocation7 + $0x5f8] sm:$0xff]
    %v348 = vld [vmem:[#allocation7 + $0x600] sm:$0xff]
    %v349 = vld [vmem:[#allocation7 + $0x608] sm:$0xff]
    %v350 = vld [vmem:[#allocation7 + $0x610] sm:$0xff]
    %v351 = vld [vmem:[#allocation7 + $0x618] sm:$0xff]
    %v352 = vld [vmem:[#allocation7 + $0x620] sm:$0xff]
    %v353 = vld [vmem:[#allocation7 + $0x628] sm:$0xff]
    %v354 = vld [vmem:[#allocation7 + $0x630] sm:$0xff]
    %v355 = vld [vmem:[#allocation7 + $0x638] sm:$0xff]
    %v356 = vld [vmem:[#allocation7 + $0x640] sm:$0xff]
    %v357 = vld [vmem:[#allocation7 + $0x648] sm:$0xff]
    %v358 = vld [vmem:[#allocation7 + $0x650] sm:$0xff]
    %v359 = vld [vmem:[#allocation7 + $0x658] sm:$0xff]
    %v360 = vld [vmem:[#allocation7 + $0x660] sm:$0xff]
    %v361 = vld [vmem:[#allocation7 + $0x668] sm:$0xff]
    %v362 = vld [vmem:[#allocation7 + $0x670] sm:$0xff]
    %v363 = vld [vmem:[#allocation7 + $0x678] sm:$0xff]
    %v364 = vld [vmem:[#allocation7 + $0x680] sm:$0xff]
    %v365 = vld [vmem:[#allocation7 + $0x688] sm:$0xff]
    %v366 = vld [vmem:[#allocation7 + $0x690] sm:$0xff]
    %v367 = vld [vmem:[#allocation7 + $0x698] sm:$0xff]
    %v368 = vld [vmem:[#allocation7 + $0x6a0] sm:$0xff]
    %v369 = vld [vmem:[#allocation7 + $0x6a8] sm:$0xff]
    %v370 = vld [vmem:[#allocation7 + $0x6b0] sm:$0xff]
    %v371 = vld [vmem:[#allocation7 + $0x6b8] sm:$0xff]
    %v372 = vld [vmem:[#allocation7 + $0x6c0] sm:$0xff]
    %v373 = vld [vmem:[#allocation7 + $0x6c8] sm:$0xff]
    %v374 = vld [vmem:[#allocation7 + $0x6d0] sm:$0xff]
    %v375 = vld [vmem:[#allocation7 + $0x6d8] sm:$0xff]
    %v376 = vld [vmem:[#allocation7 + $0x6e0] sm:$0xff]
    %v377 = vld [vmem:[#allocation7 + $0x6e8] sm:$0xff]
    %v378 = vld [vmem:[#allocation7 + $0x6f0] sm:$0xff]
    %v379 = vld [vmem:[#allocation7 + $0x6f8] sm:$0xff]
    %v380 = vld [vmem:[#allocation9] sm:$0xf]
    %v382 = vperm.slane %v380, 0
    %v383 = vperm.slane %v380, 1
    %v384 = vperm.slane %v380, 2
    %v385 = vperm.slane %v380, 3
    %v614 = vunpack.c.l.b16 %v156
    %v615 = vunpack.c.h.b16 %v156
    %v616 = vunpack.c.l.b16 %v157
    %v617 = vunpack.c.h.b16 %v157
    %v618 = vunpack.c.l.b16 %v158
    %v619 = vunpack.c.h.b16 %v158
    %v620 = vunpack.c.l.b16 %v159
    %v621 = vunpack.c.h.b16 %v159
    %v622 = vunpack.c.l.b16 %v160
    %v623 = vunpack.c.h.b16 %v160
    %v624 = vunpack.c.l.b16 %v161
    %v625 = vunpack.c.h.b16 %v161
    %v626 = vunpack.c.l.b16 %v162
    %v627 = vunpack.c.h.b16 %v162
    %v628 = vunpack.c.l.b16 %v163
    %v629 = vunpack.c.h.b16 %v163
    %v630 = vunpack.c.l.b16 %v164
    %v631 = vunpack.c.h.b16 %v164
    %v632 = vunpack.c.l.b16 %v165
    %v633 = vunpack.c.h.b16 %v165
    %v634 = vunpack.c.l.b16 %v166
    %v635 = vunpack.c.h.b16 %v166
    %v636 = vunpack.c.l.b16 %v167
    %v637 = vunpack.c.h.b16 %v167
    %v638 = vunpack.c.l.b16 %v168
    %v639 = vunpack.c.h.b16 %v168
    %v640 = vunpack.c.l.b16 %v169
    %v641 = vunpack.c.h.b16 %v169
    %v642 = vunpack.c.l.b16 %v170
    %v643 = vunpack.c.h.b16 %v170
    %v644 = vunpack.c.l.b16 %v171
    %v645 = vunpack.c.h.b16 %v171
    %v646 = vunpack.c.l.b16 %v172
    %v647 = vunpack.c.h.b16 %v172
    %v648 = vunpack.c.l.b16 %v173
    %v649 = vunpack.c.h.b16 %v173
    %v650 = vunpack.c.l.b16 %v174
    %v651 = vunpack.c.h.b16 %v174
    %v652 = vunpack.c.l.b16 %v175
    %v653 = vunpack.c.h.b16 %v175
    %v654 = vunpack.c.l.b16 %v176
    %v655 = vunpack.c.h.b16 %v176
    %v656 = vunpack.c.l.b16 %v177
    %v657 = vunpack.c.h.b16 %v177
    %v658 = vunpack.c.l.b16 %v178
    %v659 = vunpack.c.h.b16 %v178
    %v660 = vunpack.c.l.b16 %v179
    %v661 = vunpack.c.h.b16 %v179
    %v662 = vunpack.c.l.b16 %v180
    %v663 = vunpack.c.h.b16 %v180
    %v664 = vunpack.c.l.b16 %v181
    %v665 = vunpack.c.h.b16 %v181
    %v666 = vunpack.c.l.b16 %v182
    %v667 = vunpack.c.h.b16 %v182
    %v668 = vunpack.c.l.b16 %v183
    %v669 = vunpack.c.h.b16 %v183
    %v670 = vunpack.c.l.b16 %v184
    %v671 = vunpack.c.h.b16 %v184
    %v672 = vunpack.c.l.b16 %v185
    %v673 = vunpack.c.h.b16 %v185
    %v674 = vunpack.c.l.b16 %v186
    %v675 = vunpack.c.h.b16 %v186
    %v676 = vunpack.c.l.b16 %v187
    %v677 = vunpack.c.h.b16 %v187
    %v678 = vunpack.c.l.b16 %v188
    %v679 = vunpack.c.h.b16 %v188
    %v680 = vunpack.c.l.b16 %v189
    %v681 = vunpack.c.h.b16 %v189
    %v682 = vunpack.c.l.b16 %v190
    %v683 = vunpack.c.h.b16 %v190
    %v684 = vunpack.c.l.b16 %v191
    %v685 = vunpack.c.h.b16 %v191
    %v686 = vunpack.c.l.b16 %v192
    %v687 = vunpack.c.h.b16 %v192
    %v688 = vunpack.c.l.b16 %v193
    %v689 = vunpack.c.h.b16 %v193
    %v690 = vunpack.c.l.b16 %v194
    %v691 = vunpack.c.h.b16 %v194
    %v692 = vunpack.c.l.b16 %v195
    %v693 = vunpack.c.h.b16 %v195
    %v694 = vunpack.c.l.b16 %v196
    %v695 = vunpack.c.h.b16 %v196
    %v696 = vunpack.c.l.b16 %v197
    %v697 = vunpack.c.h.b16 %v197
    %v698 = vunpack.c.l.b16 %v198
    %v699 = vunpack.c.h.b16 %v198
    %v700 = vunpack.c.l.b16 %v199
    %v701 = vunpack.c.h.b16 %v199
    %v702 = vunpack.c.l.b16 %v200
    %v703 = vunpack.c.h.b16 %v200
    %v704 = vunpack.c.l.b16 %v201
    %v705 = vunpack.c.h.b16 %v201
    %v706 = vunpack.c.l.b16 %v202
    %v707 = vunpack.c.h.b16 %v202
    %v708 = vunpack.c.l.b16 %v203
    %v709 = vunpack.c.h.b16 %v203
    %v710 = vunpack.c.l.b16 %v204
    %v711 = vunpack.c.h.b16 %v204
    %v712 = vunpack.c.l.b16 %v205
    %v713 = vunpack.c.h.b16 %v205
    %v714 = vunpack.c.l.b16 %v206
    %v715 = vunpack.c.h.b16 %v206
    %v716 = vunpack.c.l.b16 %v207
    %v717 = vunpack.c.h.b16 %v207
    %v718 = vunpack.c.l.b16 %v208
    %v719 = vunpack.c.h.b16 %v208
    %v720 = vunpack.c.l.b16 %v209
    %v721 = vunpack.c.h.b16 %v209
    %v722 = vunpack.c.l.b16 %v210
    %v723 = vunpack.c.h.b16 %v210
    %v724 = vunpack.c.l.b16 %v211
    %v725 = vunpack.c.h.b16 %v211
    %v726 = vunpack.c.l.b16 %v212
    %v727 = vunpack.c.h.b16 %v212
    %v728 = vunpack.c.l.b16 %v213
    %v729 = vunpack.c.h.b16 %v213
    %v730 = vunpack.c.l.b16 %v214
    %v731 = vunpack.c.h.b16 %v214
    %v732 = vunpack.c.l.b16 %v215
    %v733 = vunpack.c.h.b16 %v215
    %v734 = vunpack.c.l.b16 %v216
    %v735 = vunpack.c.h.b16 %v216
    %v736 = vunpack.c.l.b16 %v217
    %v737 = vunpack.c.h.b16 %v217
    %v738 = vunpack.c.l.b16 %v218
    %v739 = vunpack.c.h.b16 %v218
    %v740 = vunpack.c.l.b16 %v219
    %v741 = vunpack.c.h.b16 %v219
    %v742 = vunpack.c.l.b16 %v220
    %v743 = vunpack.c.h.b16 %v220
    %v744 = vunpack.c.l.b16 %v221
    %v745 = vunpack.c.h.b16 %v221
    %v746 = vunpack.c.l.b16 %v222
    %v747 = vunpack.c.h.b16 %v222
    %v748 = vunpack.c.l.b16 %v223
    %v749 = vunpack.c.h.b16 %v223
    %v750 = vunpack.c.l.b16 %v224
    %v751 = vunpack.c.h.b16 %v224
    %v752 = vunpack.c.l.b16 %v225
    %v753 = vunpack.c.h.b16 %v225
    %v754 = vunpack.c.l.b16 %v226
    %v755 = vunpack.c.h.b16 %v226
    %v756 = vunpack.c.l.b16 %v227
    %v757 = vunpack.c.h.b16 %v227
    %v758 = vunpack.c.l.b16 %v228
    %v759 = vunpack.c.h.b16 %v228
    %v760 = vunpack.c.l.b16 %v229
    %v761 = vunpack.c.h.b16 %v229
    %v762 = vunpack.c.l.b16 %v230
    %v763 = vunpack.c.h.b16 %v230
    %v764 = vunpack.c.l.b16 %v231
    %v765 = vunpack.c.h.b16 %v231
    %v766 = vunpack.c.l.b16 %v232
    %v767 = vunpack.c.h.b16 %v232
    %v768 = vunpack.c.l.b16 %v233
    %v769 = vunpack.c.h.b16 %v233
    %v770 = vunpack.c.l.b16 %v234
    %v771 = vunpack.c.h.b16 %v234
    %v772 = vunpack.c.l.b16 %v235
    %v773 = vunpack.c.h.b16 %v235
    %v774 = vunpack.c.l.b16 %v236
    %v775 = vunpack.c.h.b16 %v236
    %v776 = vunpack.c.l.b16 %v237
    %v777 = vunpack.c.h.b16 %v237
    %v778 = vunpack.c.l.b16 %v238
    %v779 = vunpack.c.h.b16 %v238
    %v780 = vunpack.c.l.b16 %v239
    %v781 = vunpack.c.h.b16 %v239
    %v782 = vunpack.c.l.b16 %v240
    %v783 = vunpack.c.h.b16 %v240
    %v784 = vunpack.c.l.b16 %v241
    %v785 = vunpack.c.h.b16 %v241
    %v786 = vunpack.c.l.b16 %v242
    %v787 = vunpack.c.h.b16 %v242
    %v788 = vunpack.c.l.b16 %v243
    %v789 = vunpack.c.h.b16 %v243
    %v790 = vunpack.c.l.b16 %v244
    %v791 = vunpack.c.h.b16 %v244
    %v792 = vunpack.c.l.b16 %v245
    %v793 = vunpack.c.h.b16 %v245
    %v794 = vunpack.c.l.b16 %v246
    %v795 = vunpack.c.h.b16 %v246
    %v796 = vunpack.c.l.b16 %v247
    %v797 = vunpack.c.h.b16 %v247
    %v798 = vunpack.c.l.b16 %v248
    %v799 = vunpack.c.h.b16 %v248
    %v800 = vunpack.c.l.b16 %v249
    %v801 = vunpack.c.h.b16 %v249
    %v802 = vunpack.c.l.b16 %v250
    %v803 = vunpack.c.h.b16 %v250
    %v804 = vunpack.c.l.b16 %v251
    %v805 = vunpack.c.h.b16 %v251
    %v806 = vunpack.c.l.b16 %v252
    %v807 = vunpack.c.h.b16 %v252
    %v808 = vunpack.c.l.b16 %v253
    %v809 = vunpack.c.h.b16 %v253
    %v810 = vunpack.c.l.b16 %v254
    %v811 = vunpack.c.h.b16 %v254
    %v812 = vunpack.c.l.b16 %v255
    %v813 = vunpack.c.h.b16 %v255
    %v814 = vunpack.c.l.b16 %v256
    %v815 = vunpack.c.h.b16 %v256
    %v816 = vunpack.c.l.b16 %v257
    %v817 = vunpack.c.h.b16 %v257
    %v818 = vunpack.c.l.b16 %v258
    %v819 = vunpack.c.h.b16 %v258
    %v820 = vunpack.c.l.b16 %v259
    %v821 = vunpack.c.h.b16 %v259
    %v822 = vunpack.c.l.b16 %v260
    %v823 = vunpack.c.h.b16 %v260
    %v824 = vunpack.c.l.b16 %v261
    %v825 = vunpack.c.h.b16 %v261
    %v826 = vunpack.c.l.b16 %v262
    %v827 = vunpack.c.h.b16 %v262
    %v828 = vunpack.c.l.b16 %v263
    %v829 = vunpack.c.h.b16 %v263
    %v830 = vunpack.c.l.b16 %v264
    %v831 = vunpack.c.h.b16 %v264
    %v832 = vunpack.c.l.b16 %v265
    %v833 = vunpack.c.h.b16 %v265
    %v834 = vunpack.c.l.b16 %v266
    %v835 = vunpack.c.h.b16 %v266
    %v836 = vunpack.c.l.b16 %v267
    %v837 = vunpack.c.h.b16 %v267
    %v838 = vunpack.c.l.b16 %v268
    %v839 = vunpack.c.h.b16 %v268
    %v840 = vunpack.c.l.b16 %v269
    %v841 = vunpack.c.h.b16 %v269
    %v842 = vunpack.c.l.b16 %v270
    %v843 = vunpack.c.h.b16 %v270
    %v844 = vunpack.c.l.b16 %v271
    %v845 = vunpack.c.h.b16 %v271
    %v846 = vunpack.c.l.b16 %v272
    %v847 = vunpack.c.h.b16 %v272
    %v848 = vunpack.c.l.b16 %v273
    %v849 = vunpack.c.h.b16 %v273
    %v850 = vunpack.c.l.b16 %v274
    %v851 = vunpack.c.h.b16 %v274
    %v852 = vunpack.c.l.b16 %v275
    %v853 = vunpack.c.h.b16 %v275
    %v854 = vunpack.c.l.b16 %v276
    %v855 = vunpack.c.h.b16 %v276
    %v856 = vunpack.c.l.b16 %v277
    %v857 = vunpack.c.h.b16 %v277
    %v858 = vunpack.c.l.b16 %v278
    %v859 = vunpack.c.h.b16 %v278
    %v860 = vunpack.c.l.b16 %v279
    %v861 = vunpack.c.h.b16 %v279
    %v862 = vunpack.c.l.b16 %v280
    %v863 = vunpack.c.h.b16 %v280
    %v864 = vunpack.c.l.b16 %v281
    %v865 = vunpack.c.h.b16 %v281
    %v866 = vunpack.c.l.b16 %v282
    %v867 = vunpack.c.h.b16 %v282
    %v868 = vunpack.c.l.b16 %v283
    %v869 = vunpack.c.h.b16 %v283
    %v870 = vunpack.c.l.b16 %v284
    %v871 = vunpack.c.h.b16 %v284
    %v872 = vunpack.c.l.b16 %v285
    %v873 = vunpack.c.h.b16 %v285
    %v874 = vunpack.c.l.b16 %v286
    %v875 = vunpack.c.h.b16 %v286
    %v876 = vunpack.c.l.b16 %v287
    %v877 = vunpack.c.h.b16 %v287
    %v878 = vunpack.c.l.b16 %v288
    %v879 = vunpack.c.h.b16 %v288
    %v880 = vunpack.c.l.b16 %v289
    %v881 = vunpack.c.h.b16 %v289
    %v882 = vunpack.c.l.b16 %v290
    %v883 = vunpack.c.h.b16 %v290
    %v884 = vunpack.c.l.b16 %v291
    %v885 = vunpack.c.h.b16 %v291
    %v886 = vunpack.c.l.b16 %v292
    %v887 = vunpack.c.h.b16 %v292
    %v888 = vunpack.c.l.b16 %v293
    %v889 = vunpack.c.h.b16 %v293
    %v890 = vunpack.c.l.b16 %v294
    %v891 = vunpack.c.h.b16 %v294
    %v892 = vunpack.c.l.b16 %v295
    %v893 = vunpack.c.h.b16 %v295
    %v894 = vunpack.c.l.b16 %v296
    %v895 = vunpack.c.h.b16 %v296
    %v896 = vunpack.c.l.b16 %v297
    %v897 = vunpack.c.h.b16 %v297
    %v898 = vunpack.c.l.b16 %v298
    %v899 = vunpack.c.h.b16 %v298
    %v900 = vunpack.c.l.b16 %v299
    %v901 = vunpack.c.h.b16 %v299
    %v902 = vunpack.c.l.b16 %v300
    %v903 = vunpack.c.h.b16 %v300
    %v904 = vunpack.c.l.b16 %v301
    %v905 = vunpack.c.h.b16 %v301
    %v906 = vunpack.c.l.b16 %v302
    %v907 = vunpack.c.h.b16 %v302
    %v908 = vunpack.c.l.b16 %v303
    %v909 = vunpack.c.h.b16 %v303
    %v910 = vunpack.c.l.b16 %v304
    %v911 = vunpack.c.h.b16 %v304
    %v912 = vunpack.c.l.b16 %v305
    %v913 = vunpack.c.h.b16 %v305
    %v914 = vunpack.c.l.b16 %v306
    %v915 = vunpack.c.h.b16 %v306
    %v916 = vunpack.c.l.b16 %v307
    %v917 = vunpack.c.h.b16 %v307
    %v918 = vunpack.c.l.b16 %v308
    %v919 = vunpack.c.h.b16 %v308
    %v920 = vunpack.c.l.b16 %v309
    %v921 = vunpack.c.h.b16 %v309
    %v922 = vunpack.c.l.b16 %v310
    %v923 = vunpack.c.h.b16 %v310
    %v924 = vunpack.c.l.b16 %v311
    %v925 = vunpack.c.h.b16 %v311
    %v926 = vunpack.c.l.b16 %v312
    %v927 = vunpack.c.h.b16 %v312
    %v928 = vunpack.c.l.b16 %v313
    %v929 = vunpack.c.h.b16 %v313
    %v930 = vunpack.c.l.b16 %v314
    %v931 = vunpack.c.h.b16 %v314
    %v932 = vunpack.c.l.b16 %v315
    %v933 = vunpack.c.h.b16 %v315
    %v934 = vunpack.c.l.b16 %v316
    %v935 = vunpack.c.h.b16 %v316
    %v936 = vunpack.c.l.b16 %v317
    %v937 = vunpack.c.h.b16 %v317
    %v938 = vunpack.c.l.b16 %v318
    %v939 = vunpack.c.h.b16 %v318
    %v940 = vunpack.c.l.b16 %v319
    %v941 = vunpack.c.h.b16 %v319
    %v942 = vunpack.c.l.b16 %v320
    %v943 = vunpack.c.h.b16 %v320
    %v944 = vunpack.c.l.b16 %v321
    %v945 = vunpack.c.h.b16 %v321
    %v946 = vunpack.c.l.b16 %v322
    %v947 = vunpack.c.h.b16 %v322
    %v948 = vunpack.c.l.b16 %v323
    %v949 = vunpack.c.h.b16 %v323
    %v950 = vunpack.c.l.b16 %v324
    %v951 = vunpack.c.h.b16 %v324
    %v952 = vunpack.c.l.b16 %v325
    %v953 = vunpack.c.h.b16 %v325
    %v954 = vunpack.c.l.b16 %v326
    %v955 = vunpack.c.h.b16 %v326
    %v956 = vunpack.c.l.b16 %v327
    %v957 = vunpack.c.h.b16 %v327
    %v958 = vunpack.c.l.b16 %v328
    %v959 = vunpack.c.h.b16 %v328
    %v960 = vunpack.c.l.b16 %v329
    %v961 = vunpack.c.h.b16 %v329
    %v962 = vunpack.c.l.b16 %v330
    %v963 = vunpack.c.h.b16 %v330
    %v964 = vunpack.c.l.b16 %v331
    %v965 = vunpack.c.h.b16 %v331
    %v966 = vunpack.c.l.b16 %v332
    %v967 = vunpack.c.h.b16 %v332
    %v968 = vunpack.c.l.b16 %v333
    %v969 = vunpack.c.h.b16 %v333
    %v970 = vunpack.c.l.b16 %v334
    %v971 = vunpack.c.h.b16 %v334
    %v972 = vunpack.c.l.b16 %v335
    %v973 = vunpack.c.h.b16 %v335
    %v974 = vunpack.c.l.b16 %v336
    %v975 = vunpack.c.h.b16 %v336
    %v976 = vunpack.c.l.b16 %v337
    %v977 = vunpack.c.h.b16 %v337
    %v978 = vunpack.c.l.b16 %v338
    %v979 = vunpack.c.h.b16 %v338
    %v980 = vunpack.c.l.b16 %v339
    %v981 = vunpack.c.h.b16 %v339
    %v982 = vunpack.c.l.b16 %v340
    %v983 = vunpack.c.h.b16 %v340
    %v984 = vunpack.c.l.b16 %v341
    %v985 = vunpack.c.h.b16 %v341
    %v986 = vunpack.c.l.b16 %v342
    %v987 = vunpack.c.h.b16 %v342
    %v988 = vunpack.c.l.b16 %v343
    %v989 = vunpack.c.h.b16 %v343
    %v990 = vunpack.c.l.b16 %v344
    %v991 = vunpack.c.h.b16 %v344
    %v992 = vunpack.c.l.b16 %v345
    %v993 = vunpack.c.h.b16 %v345
    %v994 = vunpack.c.l.b16 %v346
    %v995 = vunpack.c.h.b16 %v346
    %v996 = vunpack.c.l.b16 %v347
    %v997 = vunpack.c.h.b16 %v347
    %v998 = vunpack.c.l.b16 %v348
    %v999 = vunpack.c.h.b16 %v348
    %v1000 = vunpack.c.l.b16 %v349
    %v1001 = vunpack.c.h.b16 %v349
    %v1002 = vunpack.c.l.b16 %v350
    %v1003 = vunpack.c.h.b16 %v350
    %v1004 = vunpack.c.l.b16 %v351
    %v1005 = vunpack.c.h.b16 %v351
    %v1006 = vunpack.c.l.b16 %v352
    %v1007 = vunpack.c.h.b16 %v352
    %v1008 = vunpack.c.l.b16 %v353
    %v1009 = vunpack.c.h.b16 %v353
    %v1010 = vunpack.c.l.b16 %v354
    %v1011 = vunpack.c.h.b16 %v354
    %v1012 = vunpack.c.l.b16 %v355
    %v1013 = vunpack.c.h.b16 %v355
    %v1014 = vunpack.c.l.b16 %v356
    %v1015 = vunpack.c.h.b16 %v356
    %v1016 = vunpack.c.l.b16 %v357
    %v1017 = vunpack.c.h.b16 %v357
    %v1018 = vunpack.c.l.b16 %v358
    %v1019 = vunpack.c.h.b16 %v358
    %v1020 = vunpack.c.l.b16 %v359
    %v1021 = vunpack.c.h.b16 %v359
    %v1022 = vunpack.c.l.b16 %v360
    %v1023 = vunpack.c.h.b16 %v360
    %v1024 = vunpack.c.l.b16 %v361
    %v1025 = vunpack.c.h.b16 %v361
    %v1026 = vunpack.c.l.b16 %v362
    %v1027 = vunpack.c.h.b16 %v362
    %v1028 = vunpack.c.l.b16 %v363
    %v1029 = vunpack.c.h.b16 %v363
    %v1030 = vunpack.c.l.b16 %v364
    %v1031 = vunpack.c.h.b16 %v364
    %v1032 = vunpack.c.l.b16 %v365
    %v1033 = vunpack.c.h.b16 %v365
    %v1034 = vunpack.c.l.b16 %v366
    %v1035 = vunpack.c.h.b16 %v366
    %v1036 = vunpack.c.l.b16 %v367
    %v1037 = vunpack.c.h.b16 %v367
    %v1038 = vunpack.c.l.b16 %v368
    %v1039 = vunpack.c.h.b16 %v368
    %v1040 = vunpack.c.l.b16 %v369
    %v1041 = vunpack.c.h.b16 %v369
    %v1042 = vunpack.c.l.b16 %v370
    %v1043 = vunpack.c.h.b16 %v370
    %v1044 = vunpack.c.l.b16 %v371
    %v1045 = vunpack.c.h.b16 %v371
    %v1046 = vunpack.c.l.b16 %v372
    %v1047 = vunpack.c.h.b16 %v372
    %v1048 = vunpack.c.l.b16 %v373
    %v1049 = vunpack.c.h.b16 %v373
    %v1050 = vunpack.c.l.b16 %v374
    %v1051 = vunpack.c.h.b16 %v374
    %v1052 = vunpack.c.l.b16 %v375
    %v1053 = vunpack.c.h.b16 %v375
    %v1054 = vunpack.c.l.b16 %v376
    %v1055 = vunpack.c.h.b16 %v376
    %v1056 = vunpack.c.l.b16 %v377
    %v1057 = vunpack.c.h.b16 %v377
    %v1058 = vunpack.c.l.b16 %v378
    %v1059 = vunpack.c.h.b16 %v378
    %v1060 = vunpack.c.l.b16 %v379
    %v1061 = vunpack.c.h.b16 %v379
    %v1062 = vpack.c.b16 %v618, %v614
    %v1063 = vpack.c.b16 %v619, %v615
    %v1064 = vpack.c.b16 %v620, %v616
    %v1065 = vpack.c.b16 %v621, %v617
    %v1066 = vpack.c.b16 %v626, %v622
    %v1067 = vpack.c.b16 %v627, %v623
    %v1068 = vpack.c.b16 %v628, %v624
    %v1069 = vpack.c.b16 %v629, %v625
    %v1070 = vpack.c.b16 %v634, %v630
    %v1071 = vpack.c.b16 %v635, %v631
    %v1072 = vpack.c.b16 %v636, %v632
    %v1073 = vpack.c.b16 %v637, %v633
    %v1074 = vpack.c.b16 %v642, %v638
    %v1075 = vpack.c.b16 %v643, %v639
    %v1076 = vpack.c.b16 %v644, %v640
    %v1077 = vpack.c.b16 %v645, %v641
    %v1078 = vpack.c.b16 %v650, %v646
    %v1079 = vpack.c.b16 %v651, %v647
    %v1080 = vpack.c.b16 %v652, %v648
    %v1081 = vpack.c.b16 %v653, %v649
    %v1082 = vpack.c.b16 %v658, %v654
    %v1083 = vpack.c.b16 %v659, %v655
    %v1084 = vpack.c.b16 %v660, %v656
    %v1085 = vpack.c.b16 %v661, %v657
    %v1086 = vpack.c.b16 %v666, %v662
    %v1087 = vpack.c.b16 %v667, %v663
    %v1088 = vpack.c.b16 %v668, %v664
    %v1089 = vpack.c.b16 %v669, %v665
    %v1090 = vpack.c.b16 %v674, %v670
    %v1091 = vpack.c.b16 %v675, %v671
    %v1092 = vpack.c.b16 %v676, %v672
    %v1093 = vpack.c.b16 %v677, %v673
    %v1094 = vpack.c.b16 %v682, %v678
    %v1095 = vpack.c.b16 %v683, %v679
    %v1096 = vpack.c.b16 %v684, %v680
    %v1097 = vpack.c.b16 %v685, %v681
    %v1098 = vpack.c.b16 %v690, %v686
    %v1099 = vpack.c.b16 %v691, %v687
    %v1100 = vpack.c.b16 %v692, %v688
    %v1101 = vpack.c.b16 %v693, %v689
    %v1102 = vpack.c.b16 %v698, %v694
    %v1103 = vpack.c.b16 %v699, %v695
    %v1104 = vpack.c.b16 %v700, %v696
    %v1105 = vpack.c.b16 %v701, %v697
    %v1106 = vpack.c.b16 %v706, %v702
    %v1107 = vpack.c.b16 %v707, %v703
    %v1108 = vpack.c.b16 %v708, %v704
    %v1109 = vpack.c.b16 %v709, %v705
    %v1110 = vpack.c.b16 %v714, %v710
    %v1111 = vpack.c.b16 %v715, %v711
    %v1112 = vpack.c.b16 %v716, %v712
    %v1113 = vpack.c.b16 %v717, %v713
    %v1114 = vpack.c.b16 %v722, %v718
    %v1115 = vpack.c.b16 %v723, %v719
    %v1116 = vpack.c.b16 %v724, %v720
    %v1117 = vpack.c.b16 %v725, %v721
    %v1118 = vpack.c.b16 %v730, %v726
    %v1119 = vpack.c.b16 %v731, %v727
    %v1120 = vpack.c.b16 %v732, %v728
    %v1121 = vpack.c.b16 %v733, %v729
    %v1122 = vpack.c.b16 %v738, %v734
    %v1123 = vpack.c.b16 %v739, %v735
    %v1124 = vpack.c.b16 %v740, %v736
    %v1125 = vpack.c.b16 %v741, %v737
    %v1126 = vpack.c.b16 %v746, %v742
    %v1127 = vpack.c.b16 %v747, %v743
    %v1128 = vpack.c.b16 %v748, %v744
    %v1129 = vpack.c.b16 %v749, %v745
    %v1130 = vpack.c.b16 %v754, %v750
    %v1131 = vpack.c.b16 %v755, %v751
    %v1132 = vpack.c.b16 %v756, %v752
    %v1133 = vpack.c.b16 %v757, %v753
    %v1134 = vpack.c.b16 %v762, %v758
    %v1135 = vpack.c.b16 %v763, %v759
    %v1136 = vpack.c.b16 %v764, %v760
    %v1137 = vpack.c.b16 %v765, %v761
    %v1138 = vpack.c.b16 %v770, %v766
    %v1139 = vpack.c.b16 %v771, %v767
    %v1140 = vpack.c.b16 %v772, %v768
    %v1141 = vpack.c.b16 %v773, %v769
    %v1142 = vpack.c.b16 %v778, %v774
    %v1143 = vpack.c.b16 %v779, %v775
    %v1144 = vpack.c.b16 %v780, %v776
    %v1145 = vpack.c.b16 %v781, %v777
    %v1146 = vpack.c.b16 %v786, %v782
    %v1147 = vpack.c.b16 %v787, %v783
    %v1148 = vpack.c.b16 %v788, %v784
    %v1149 = vpack.c.b16 %v789, %v785
    %v1150 = vpack.c.b16 %v794, %v790
    %v1151 = vpack.c.b16 %v795, %v791
    %v1152 = vpack.c.b16 %v796, %v792
    %v1153 = vpack.c.b16 %v797, %v793
    %v1154 = vpack.c.b16 %v802, %v798
    %v1155 = vpack.c.b16 %v803, %v799
    %v1156 = vpack.c.b16 %v804, %v800
    %v1157 = vpack.c.b16 %v805, %v801
    %v1158 = vpack.c.b16 %v810, %v806
    %v1159 = vpack.c.b16 %v811, %v807
    %v1160 = vpack.c.b16 %v812, %v808
    %v1161 = vpack.c.b16 %v813, %v809
    %v1162 = vpack.c.b16 %v818, %v814
    %v1163 = vpack.c.b16 %v819, %v815
    %v1164 = vpack.c.b16 %v820, %v816
    %v1165 = vpack.c.b16 %v821, %v817
    %v1166 = vpack.c.b16 %v826, %v822
    %v1167 = vpack.c.b16 %v827, %v823
    %v1168 = vpack.c.b16 %v828, %v824
    %v1169 = vpack.c.b16 %v829, %v825
    %v1170 = vpack.c.b16 %v834, %v830
    %v1171 = vpack.c.b16 %v835, %v831
    %v1172 = vpack.c.b16 %v836, %v832
    %v1173 = vpack.c.b16 %v837, %v833
    %v1174 = vpack.c.b16 %v842, %v838
    %v1175 = vpack.c.b16 %v843, %v839
    %v1176 = vpack.c.b16 %v844, %v840
    %v1177 = vpack.c.b16 %v845, %v841
    %v1178 = vpack.c.b16 %v850, %v846
    %v1179 = vpack.c.b16 %v851, %v847
    %v1180 = vpack.c.b16 %v852, %v848
    %v1181 = vpack.c.b16 %v853, %v849
    %v1182 = vpack.c.b16 %v858, %v854
    %v1183 = vpack.c.b16 %v859, %v855
    %v1184 = vpack.c.b16 %v860, %v856
    %v1185 = vpack.c.b16 %v861, %v857
    %v1186 = vpack.c.b16 %v866, %v862
    %v1187 = vpack.c.b16 %v867, %v863
    %v1188 = vpack.c.b16 %v868, %v864
    %v1189 = vpack.c.b16 %v869, %v865
    %v1190 = vpack.c.b16 %v874, %v870
    %v1191 = vpack.c.b16 %v875, %v871
    %v1192 = vpack.c.b16 %v876, %v872
    %v1193 = vpack.c.b16 %v877, %v873
    %v1194 = vpack.c.b16 %v882, %v878
    %v1195 = vpack.c.b16 %v883, %v879
    %v1196 = vpack.c.b16 %v884, %v880
    %v1197 = vpack.c.b16 %v885, %v881
    %v1198 = vpack.c.b16 %v890, %v886
    %v1199 = vpack.c.b16 %v891, %v887
    %v1200 = vpack.c.b16 %v892, %v888
    %v1201 = vpack.c.b16 %v893, %v889
    %v1202 = vpack.c.b16 %v898, %v894
    %v1203 = vpack.c.b16 %v899, %v895
    %v1204 = vpack.c.b16 %v900, %v896
    %v1205 = vpack.c.b16 %v901, %v897
    %v1206 = vpack.c.b16 %v906, %v902
    %v1207 = vpack.c.b16 %v907, %v903
    %v1208 = vpack.c.b16 %v908, %v904
    %v1209 = vpack.c.b16 %v909, %v905
    %v1210 = vpack.c.b16 %v914, %v910
    %v1211 = vpack.c.b16 %v915, %v911
    %v1212 = vpack.c.b16 %v916, %v912
    %v1213 = vpack.c.b16 %v917, %v913
    %v1214 = vpack.c.b16 %v922, %v918
    %v1215 = vpack.c.b16 %v923, %v919
    %v1216 = vpack.c.b16 %v924, %v920
    %v1217 = vpack.c.b16 %v925, %v921
    %v1218 = vpack.c.b16 %v930, %v926
    %v1219 = vpack.c.b16 %v931, %v927
    %v1220 = vpack.c.b16 %v932, %v928
    %v1221 = vpack.c.b16 %v933, %v929
    %v1222 = vpack.c.b16 %v938, %v934
    %v1223 = vpack.c.b16 %v939, %v935
    %v1224 = vpack.c.b16 %v940, %v936
    %v1225 = vpack.c.b16 %v941, %v937
    %v1226 = vpack.c.b16 %v946, %v942
    %v1227 = vpack.c.b16 %v947, %v943
    %v1228 = vpack.c.b16 %v948, %v944
    %v1229 = vpack.c.b16 %v949, %v945
    %v1230 = vpack.c.b16 %v954, %v950
    %v1231 = vpack.c.b16 %v955, %v951
    %v1232 = vpack.c.b16 %v956, %v952
    %v1233 = vpack.c.b16 %v957, %v953
    %v1234 = vpack.c.b16 %v962, %v958
    %v1235 = vpack.c.b16 %v963, %v959
    %v1236 = vpack.c.b16 %v964, %v960
    %v1237 = vpack.c.b16 %v965, %v961
    %v1238 = vpack.c.b16 %v970, %v966
    %v1239 = vpack.c.b16 %v971, %v967
    %v1240 = vpack.c.b16 %v972, %v968
    %v1241 = vpack.c.b16 %v973, %v969
    %v1242 = vpack.c.b16 %v978, %v974
    %v1243 = vpack.c.b16 %v979, %v975
    %v1244 = vpack.c.b16 %v980, %v976
    %v1245 = vpack.c.b16 %v981, %v977
    %v1246 = vpack.c.b16 %v986, %v982
    %v1247 = vpack.c.b16 %v987, %v983
    %v1248 = vpack.c.b16 %v988, %v984
    %v1249 = vpack.c.b16 %v989, %v985
    %v1250 = vpack.c.b16 %v994, %v990
    %v1251 = vpack.c.b16 %v995, %v991
    %v1252 = vpack.c.b16 %v996, %v992
    %v1253 = vpack.c.b16 %v997, %v993
    %v1254 = vpack.c.b16 %v1002, %v998
    %v1255 = vpack.c.b16 %v1003, %v999
    %v1256 = vpack.c.b16 %v1004, %v1000
    %v1257 = vpack.c.b16 %v1005, %v1001
    %v1258 = vpack.c.b16 %v1010, %v1006
    %v1259 = vpack.c.b16 %v1011, %v1007
    %v1260 = vpack.c.b16 %v1012, %v1008
    %v1261 = vpack.c.b16 %v1013, %v1009
    %v1262 = vpack.c.b16 %v1018, %v1014
    %v1263 = vpack.c.b16 %v1019, %v1015
    %v1264 = vpack.c.b16 %v1020, %v1016
    %v1265 = vpack.c.b16 %v1021, %v1017
    %v1266 = vpack.c.b16 %v1026, %v1022
    %v1267 = vpack.c.b16 %v1027, %v1023
    %v1268 = vpack.c.b16 %v1028, %v1024
    %v1269 = vpack.c.b16 %v1029, %v1025
    %v1270 = vpack.c.b16 %v1034, %v1030
    %v1271 = vpack.c.b16 %v1035, %v1031
    %v1272 = vpack.c.b16 %v1036, %v1032
    %v1273 = vpack.c.b16 %v1037, %v1033
    %v1274 = vpack.c.b16 %v1042, %v1038
    %v1275 = vpack.c.b16 %v1043, %v1039
    %v1276 = vpack.c.b16 %v1044, %v1040
    %v1277 = vpack.c.b16 %v1045, %v1041
    %v1278 = vpack.c.b16 %v1050, %v1046
    %v1279 = vpack.c.b16 %v1051, %v1047
    %v1280 = vpack.c.b16 %v1052, %v1048
    %v1281 = vpack.c.b16 %v1053, %v1049
    %v1282 = vpack.c.b16 %v1058, %v1054
    %v1283 = vpack.c.b16 %v1059, %v1055
    %v1284 = vpack.c.b16 %v1060, %v1056
    %v1285 = vpack.c.b16 %v1061, %v1057
    %1510 = vmatpush.bf16.msra.mxu0 %v1090
    %1511 = vmatpush.bf16.msra.mxu0 %v1086
    %1512 = vmatpush.bf16.msra.mxu0 %v1082
    %1513 = vmatpush.bf16.msra.mxu0 %v1078
    %1514 = vmatpush.bf16.msra.mxu0 %v1074
    %1515 = vmatpush.bf16.msra.mxu0 %v1070
    %1516 = vmatpush.bf16.msra.mxu0 %v1066
    %1517 = vmatpush.bf16.msra.mxu0 %v1062
    %1518 = vmatmul.bf16.gmra.mxu0 %v149
    %v1519 = vpop.f32.mrf.mxu0
    %v1520 = vadd.f32 %v382, %v1519
    %v1521 = vpop.f32.mrf.mxu0
    %1522 = vdwg.mxu0
    %1523 = vmatpush.bf16.msra.mxu0 %v1122
    %1524 = vmatpush.bf16.msra.mxu0 %v1118
    %1525 = vmatpush.bf16.msra.mxu0 %v1114
    %1526 = vmatpush.bf16.msra.mxu0 %v1110
    %1527 = vmatpush.bf16.msra.mxu0 %v1106
    %1528 = vmatpush.bf16.msra.mxu0 %v1102
    %1529 = vmatpush.bf16.msra.mxu0 %v1098
    %1530 = vmatpush.bf16.msra.mxu0 %v1094
    %1531 = vmatmul.bf16.gmra.mxu0 %v150
    %v1532 = vpop.f32.mrf.mxu0
    %v1533 = vadd.f32 %v1520, %v1532
    %v1534 = vpop.f32.mrf.mxu0
    %1535 = vdwg.mxu0
    %1536 = vmatpush.bf16.msra.mxu0 %v1154
    %1537 = vmatpush.bf16.msra.mxu0 %v1150
    %1538 = vmatpush.bf16.msra.mxu0 %v1146
    %1539 = vmatpush.bf16.msra.mxu0 %v1142
    %1540 = vmatpush.bf16.msra.mxu0 %v1138
    %1541 = vmatpush.bf16.msra.mxu0 %v1134
    %1542 = vmatpush.bf16.msra.mxu0 %v1130
    %1543 = vmatpush.bf16.msra.mxu0 %v1126
    %1544 = vmatmul.bf16.gmra.mxu0 %v151
    %v1545 = vpop.f32.mrf.mxu0
    %v1546 = vadd.f32 %v1533, %v1545
    %v1547 = vpop.f32.mrf.mxu0
    %1548 = vdwg.mxu0
    %1549 = vmatpush.bf16.msra.mxu0 %v1186
    %1550 = vmatpush.bf16.msra.mxu0 %v1182
    %1551 = vmatpush.bf16.msra.mxu0 %v1178
    %1552 = vmatpush.bf16.msra.mxu0 %v1174
    %1553 = vmatpush.bf16.msra.mxu0 %v1170
    %1554 = vmatpush.bf16.msra.mxu0 %v1166
    %1555 = vmatpush.bf16.msra.mxu0 %v1162
    %1556 = vmatpush.bf16.msra.mxu0 %v1158
    %1557 = vmatmul.bf16.gmra.mxu0 %v152
    %v1558 = vpop.f32.mrf.mxu0
    %v1559 = vadd.f32 %v1546, %v1558
    %v1560 = vpop.f32.mrf.mxu0
    %1561 = vdwg.mxu0
    %1562 = vmatpush.bf16.msra.mxu0 %v1218
    %1563 = vmatpush.bf16.msra.mxu0 %v1214
    %1564 = vmatpush.bf16.msra.mxu0 %v1210
    %1565 = vmatpush.bf16.msra.mxu0 %v1206
    %1566 = vmatpush.bf16.msra.mxu0 %v1202
    %1567 = vmatpush.bf16.msra.mxu0 %v1198
    %1568 = vmatpush.bf16.msra.mxu0 %v1194
    %1569 = vmatpush.bf16.msra.mxu0 %v1190
    %1570 = vmatmul.bf16.gmra.mxu0 %v153
    %v1571 = vpop.f32.mrf.mxu0
    %v1572 = vadd.f32 %v1559, %v1571
    %v1573 = vpop.f32.mrf.mxu0
    %1574 = vdwg.mxu0
    %1575 = vmatpush.bf16.msra.mxu0 %v1250
    %1576 = vmatpush.bf16.msra.mxu0 %v1246
    %1577 = vmatpush.bf16.msra.mxu0 %v1242
    %1578 = vmatpush.bf16.msra.mxu0 %v1238
    %1579 = vmatpush.bf16.msra.mxu0 %v1234
    %1580 = vmatpush.bf16.msra.mxu0 %v1230
    %1581 = vmatpush.bf16.msra.mxu0 %v1226
    %1582 = vmatpush.bf16.msra.mxu0 %v1222
    %1583 = vmatmul.bf16.gmra.mxu0 %v154
    %v1584 = vpop.f32.mrf.mxu0
    %v1585 = vadd.f32 %v1572, %v1584
    %v1586 = vpop.f32.mrf.mxu0
    %1587 = vdwg.mxu0
    %1588 = vmatpush.bf16.msra.mxu0 %v1282
    %1589 = vmatpush.bf16.msra.mxu0 %v1278
    %1590 = vmatpush.bf16.msra.mxu0 %v1274
    %1591 = vmatpush.bf16.msra.mxu0 %v1270
    %1592 = vmatpush.bf16.msra.mxu0 %v1266
    %1593 = vmatpush.bf16.msra.mxu0 %v1262
    %1594 = vmatpush.bf16.msra.mxu0 %v1258
    %1595 = vmatpush.bf16.msra.mxu0 %v1254
    %1596 = vmatmul.bf16.gmra.mxu0 %v155
    %v1597 = vpop.f32.mrf.mxu0
    %v1598 = vadd.f32 %v1585, %v1597
    %v1599 = vpop.f32.mrf.mxu0
    %1600 = vdwg.mxu0
    %1601 = vmatpush.bf16.msra.mxu0 %v1091
    %1602 = vmatpush.bf16.msra.mxu0 %v1087
    %1603 = vmatpush.bf16.msra.mxu0 %v1083
    %1604 = vmatpush.bf16.msra.mxu0 %v1079
    %1605 = vmatpush.bf16.msra.mxu0 %v1075
    %1606 = vmatpush.bf16.msra.mxu0 %v1071
    %1607 = vmatpush.bf16.msra.mxu0 %v1067
    %1608 = vmatpush.bf16.msra.mxu0 %v1063
    %1609 = vmatmul.bf16.gmra.mxu0 %v149
    %v1610 = vpop.f32.mrf.mxu0
    %v1611 = vadd.f32 %v383, %v1610
    %v1612 = vpop.f32.mrf.mxu0
    %1613 = vdwg.mxu0
    %1614 = vmatpush.bf16.msra.mxu0 %v1123
    %1615 = vmatpush.bf16.msra.mxu0 %v1119
    %1616 = vmatpush.bf16.msra.mxu0 %v1115
    %1617 = vmatpush.bf16.msra.mxu0 %v1111
    %1618 = vmatpush.bf16.msra.mxu0 %v1107
    %1619 = vmatpush.bf16.msra.mxu0 %v1103
    %1620 = vmatpush.bf16.msra.mxu0 %v1099
    %1621 = vmatpush.bf16.msra.mxu0 %v1095
    %1622 = vmatmul.bf16.gmra.mxu0 %v150
    %v1623 = vpop.f32.mrf.mxu0
    %v1624 = vadd.f32 %v1611, %v1623
    %v1625 = vpop.f32.mrf.mxu0
    %1626 = vdwg.mxu0
    %1627 = vmatpush.bf16.msra.mxu0 %v1155
    %1628 = vmatpush.bf16.msra.mxu0 %v1151
    %1629 = vmatpush.bf16.msra.mxu0 %v1147
    %1630 = vmatpush.bf16.msra.mxu0 %v1143
    %1631 = vmatpush.bf16.msra.mxu0 %v1139
    %1632 = vmatpush.bf16.msra.mxu0 %v1135
    %1633 = vmatpush.bf16.msra.mxu0 %v1131
    %1634 = vmatpush.bf16.msra.mxu0 %v1127
    %1635 = vmatmul.bf16.gmra.mxu0 %v151
    %v1636 = vpop.f32.mrf.mxu0
    %v1637 = vadd.f32 %v1624, %v1636
    %v1638 = vpop.f32.mrf.mxu0
    %1639 = vdwg.mxu0
    %1640 = vmatpush.bf16.msra.mxu0 %v1187
    %1641 = vmatpush.bf16.msra.mxu0 %v1183
    %1642 = vmatpush.bf16.msra.mxu0 %v1179
    %1643 = vmatpush.bf16.msra.mxu0 %v1175
    %1644 = vmatpush.bf16.msra.mxu0 %v1171
    %1645 = vmatpush.bf16.msra.mxu0 %v1167
    %1646 = vmatpush.bf16.msra.mxu0 %v1163
    %1647 = vmatpush.bf16.msra.mxu0 %v1159
    %1648 = vmatmul.bf16.gmra.mxu0 %v152
    %v1649 = vpop.f32.mrf.mxu0
    %v1650 = vadd.f32 %v1637, %v1649
    %v1651 = vpop.f32.mrf.mxu0
    %1652 = vdwg.mxu0
    %1653 = vmatpush.bf16.msra.mxu0 %v1219
    %1654 = vmatpush.bf16.msra.mxu0 %v1215
    %1655 = vmatpush.bf16.msra.mxu0 %v1211
    %1656 = vmatpush.bf16.msra.mxu0 %v1207
    %1657 = vmatpush.bf16.msra.mxu0 %v1203
    %1658 = vmatpush.bf16.msra.mxu0 %v1199
    %1659 = vmatpush.bf16.msra.mxu0 %v1195
    %1660 = vmatpush.bf16.msra.mxu0 %v1191
    %1661 = vmatmul.bf16.gmra.mxu0 %v153
    %v1662 = vpop.f32.mrf.mxu0
    %v1663 = vadd.f32 %v1650, %v1662
    %v1664 = vpop.f32.mrf.mxu0
    %1665 = vdwg.mxu0
    %1666 = vmatpush.bf16.msra.mxu0 %v1251
    %1667 = vmatpush.bf16.msra.mxu0 %v1247
    %1668 = vmatpush.bf16.msra.mxu0 %v1243
    %1669 = vmatpush.bf16.msra.mxu0 %v1239
    %1670 = vmatpush.bf16.msra.mxu0 %v1235
    %1671 = vmatpush.bf16.msra.mxu0 %v1231
    %1672 = vmatpush.bf16.msra.mxu0 %v1227
    %1673 = vmatpush.bf16.msra.mxu0 %v1223
    %1674 = vmatmul.bf16.gmra.mxu0 %v154
    %v1675 = vpop.f32.mrf.mxu0
    %v1676 = vadd.f32 %v1663, %v1675
    %v1677 = vpop.f32.mrf.mxu0
    %1678 = vdwg.mxu0
    %1679 = vmatpush.bf16.msra.mxu0 %v1283
    %1680 = vmatpush.bf16.msra.mxu0 %v1279
    %1681 = vmatpush.bf16.msra.mxu0 %v1275
    %1682 = vmatpush.bf16.msra.mxu0 %v1271
    %1683 = vmatpush.bf16.msra.mxu0 %v1267
    %1684 = vmatpush.bf16.msra.mxu0 %v1263
    %1685 = vmatpush.bf16.msra.mxu0 %v1259
    %1686 = vmatpush.bf16.msra.mxu0 %v1255
    %1687 = vmatmul.bf16.gmra.mxu0 %v155
    %v1688 = vpop.f32.mrf.mxu0
    %v1689 = vadd.f32 %v1676, %v1688
    %v1690 = vpop.f32.mrf.mxu0
    %1691 = vdwg.mxu0
    %1692 = vmatpush.bf16.msra.mxu0 %v1092
    %1693 = vmatpush.bf16.msra.mxu0 %v1088
    %1694 = vmatpush.bf16.msra.mxu0 %v1084
    %1695 = vmatpush.bf16.msra.mxu0 %v1080
    %1696 = vmatpush.bf16.msra.mxu0 %v1076
    %1697 = vmatpush.bf16.msra.mxu0 %v1072
    %1698 = vmatpush.bf16.msra.mxu0 %v1068
    %1699 = vmatpush.bf16.msra.mxu0 %v1064
    %1700 = vmatmul.bf16.gmra.mxu0 %v149
    %v1701 = vpop.f32.mrf.mxu0
    %v1702 = vadd.f32 %v384, %v1701
    %v1703 = vpop.f32.mrf.mxu0
    %1704 = vdwg.mxu0
    %1705 = vmatpush.bf16.msra.mxu0 %v1124
    %1706 = vmatpush.bf16.msra.mxu0 %v1120
    %1707 = vmatpush.bf16.msra.mxu0 %v1116
    %1708 = vmatpush.bf16.msra.mxu0 %v1112
    %1709 = vmatpush.bf16.msra.mxu0 %v1108
    %1710 = vmatpush.bf16.msra.mxu0 %v1104
    %1711 = vmatpush.bf16.msra.mxu0 %v1100
    %1712 = vmatpush.bf16.msra.mxu0 %v1096
    %1713 = vmatmul.bf16.gmra.mxu0 %v150
    %v1714 = vpop.f32.mrf.mxu0
    %v1715 = vadd.f32 %v1702, %v1714
    %v1716 = vpop.f32.mrf.mxu0
    %1717 = vdwg.mxu0
    %1718 = vmatpush.bf16.msra.mxu0 %v1156
    %1719 = vmatpush.bf16.msra.mxu0 %v1152
    %1720 = vmatpush.bf16.msra.mxu0 %v1148
    %1721 = vmatpush.bf16.msra.mxu0 %v1144
    %1722 = vmatpush.bf16.msra.mxu0 %v1140
    %1723 = vmatpush.bf16.msra.mxu0 %v1136
    %1724 = vmatpush.bf16.msra.mxu0 %v1132
    %1725 = vmatpush.bf16.msra.mxu0 %v1128
    %1726 = vmatmul.bf16.gmra.mxu0 %v151
    %v1727 = vpop.f32.mrf.mxu0
    %v1728 = vadd.f32 %v1715, %v1727
    %v1729 = vpop.f32.mrf.mxu0
    %1730 = vdwg.mxu0
    %1731 = vmatpush.bf16.msra.mxu0 %v1188
    %1732 = vmatpush.bf16.msra.mxu0 %v1184
    %1733 = vmatpush.bf16.msra.mxu0 %v1180
    %1734 = vmatpush.bf16.msra.mxu0 %v1176
    %1735 = vmatpush.bf16.msra.mxu0 %v1172
    %1736 = vmatpush.bf16.msra.mxu0 %v1168
    %1737 = vmatpush.bf16.msra.mxu0 %v1164
    %1738 = vmatpush.bf16.msra.mxu0 %v1160
    %1739 = vmatmul.bf16.gmra.mxu0 %v152
    %v1740 = vpop.f32.mrf.mxu0
    %v1741 = vadd.f32 %v1728, %v1740
    %v1742 = vpop.f32.mrf.mxu0
    %1743 = vdwg.mxu0
    %1744 = vmatpush.bf16.msra.mxu0 %v1220
    %1745 = vmatpush.bf16.msra.mxu0 %v1216
    %1746 = vmatpush.bf16.msra.mxu0 %v1212
    %1747 = vmatpush.bf16.msra.mxu0 %v1208
    %1748 = vmatpush.bf16.msra.mxu0 %v1204
    %1749 = vmatpush.bf16.msra.mxu0 %v1200
    %1750 = vmatpush.bf16.msra.mxu0 %v1196
    %1751 = vmatpush.bf16.msra.mxu0 %v1192
    %1752 = vmatmul.bf16.gmra.mxu0 %v153
    %v1753 = vpop.f32.mrf.mxu0
    %v1754 = vadd.f32 %v1741, %v1753
    %v1755 = vpop.f32.mrf.mxu0
    %1756 = vdwg.mxu0
    %1757 = vmatpush.bf16.msra.mxu0 %v1252
    %1758 = vmatpush.bf16.msra.mxu0 %v1248
    %1759 = vmatpush.bf16.msra.mxu0 %v1244
    %1760 = vmatpush.bf16.msra.mxu0 %v1240
    %1761 = vmatpush.bf16.msra.mxu0 %v1236
    %1762 = vmatpush.bf16.msra.mxu0 %v1232
    %1763 = vmatpush.bf16.msra.mxu0 %v1228
    %1764 = vmatpush.bf16.msra.mxu0 %v1224
    %1765 = vmatmul.bf16.gmra.mxu0 %v154
    %v1766 = vpop.f32.mrf.mxu0
    %v1767 = vadd.f32 %v1754, %v1766
    %v1768 = vpop.f32.mrf.mxu0
    %1769 = vdwg.mxu0
    %1770 = vmatpush.bf16.msra.mxu0 %v1284
    %1771 = vmatpush.bf16.msra.mxu0 %v1280
    %1772 = vmatpush.bf16.msra.mxu0 %v1276
    %1773 = vmatpush.bf16.msra.mxu0 %v1272
    %1774 = vmatpush.bf16.msra.mxu0 %v1268
    %1775 = vmatpush.bf16.msra.mxu0 %v1264
    %1776 = vmatpush.bf16.msra.mxu0 %v1260
    %1777 = vmatpush.bf16.msra.mxu0 %v1256
    %1778 = vmatmul.bf16.gmra.mxu0 %v155
    %v1779 = vpop.f32.mrf.mxu0
    %v1780 = vadd.f32 %v1767, %v1779
    %v1781 = vpop.f32.mrf.mxu0
    %1782 = vdwg.mxu0
    %1783 = vmatpush.bf16.msra.mxu0 %v1093
    %1784 = vmatpush.bf16.msra.mxu0 %v1089
    %1785 = vmatpush.bf16.msra.mxu0 %v1085
    %1786 = vmatpush.bf16.msra.mxu0 %v1081
    %1787 = vmatpush.bf16.msra.mxu0 %v1077
    %1788 = vmatpush.bf16.msra.mxu0 %v1073
    %1789 = vmatpush.bf16.msra.mxu0 %v1069
    %1790 = vmatpush.bf16.msra.mxu0 %v1065
    %1791 = vmatmul.bf16.gmra.mxu0 %v149
    %v1792 = vpop.f32.mrf.mxu0
    %v1793 = vadd.f32 %v385, %v1792
    %v1794 = vpop.f32.mrf.mxu0
    %1795 = vdwg.mxu0
    %1796 = vmatpush.bf16.msra.mxu0 %v1125
    %1797 = vmatpush.bf16.msra.mxu0 %v1121
    %1798 = vmatpush.bf16.msra.mxu0 %v1117
    %1799 = vmatpush.bf16.msra.mxu0 %v1113
    %1800 = vmatpush.bf16.msra.mxu0 %v1109
    %1801 = vmatpush.bf16.msra.mxu0 %v1105
    %1802 = vmatpush.bf16.msra.mxu0 %v1101
    %1803 = vmatpush.bf16.msra.mxu0 %v1097
    %1804 = vmatmul.bf16.gmra.mxu0 %v150
    %v1805 = vpop.f32.mrf.mxu0
    %v1806 = vadd.f32 %v1793, %v1805
    %v1807 = vpop.f32.mrf.mxu0
    %1808 = vdwg.mxu0
    %1809 = vmatpush.bf16.msra.mxu0 %v1157
    %1810 = vmatpush.bf16.msra.mxu0 %v1153
    %1811 = vmatpush.bf16.msra.mxu0 %v1149
    %1812 = vmatpush.bf16.msra.mxu0 %v1145
    %1813 = vmatpush.bf16.msra.mxu0 %v1141
    %1814 = vmatpush.bf16.msra.mxu0 %v1137
    %1815 = vmatpush.bf16.msra.mxu0 %v1133
    %1816 = vmatpush.bf16.msra.mxu0 %v1129
    %1817 = vmatmul.bf16.gmra.mxu0 %v151
    %v1818 = vpop.f32.mrf.mxu0
    %v1819 = vadd.f32 %v1806, %v1818
    %v1820 = vpop.f32.mrf.mxu0
    %1821 = vdwg.mxu0
    %1822 = vmatpush.bf16.msra.mxu0 %v1189
    %1823 = vmatpush.bf16.msra.mxu0 %v1185
    %1824 = vmatpush.bf16.msra.mxu0 %v1181
    %1825 = vmatpush.bf16.msra.mxu0 %v1177
    %1826 = vmatpush.bf16.msra.mxu0 %v1173
    %1827 = vmatpush.bf16.msra.mxu0 %v1169
    %1828 = vmatpush.bf16.msra.mxu0 %v1165
    %1829 = vmatpush.bf16.msra.mxu0 %v1161
    %1830 = vmatmul.bf16.gmra.mxu0 %v152
    %v1831 = vpop.f32.mrf.mxu0
    %v1832 = vadd.f32 %v1819, %v1831
    %v1833 = vpop.f32.mrf.mxu0
    %1834 = vdwg.mxu0
    %1835 = vmatpush.bf16.msra.mxu0 %v1221
    %1836 = vmatpush.bf16.msra.mxu0 %v1217
    %1837 = vmatpush.bf16.msra.mxu0 %v1213
    %1838 = vmatpush.bf16.msra.mxu0 %v1209
    %1839 = vmatpush.bf16.msra.mxu0 %v1205
    %1840 = vmatpush.bf16.msra.mxu0 %v1201
    %1841 = vmatpush.bf16.msra.mxu0 %v1197
    %1842 = vmatpush.bf16.msra.mxu0 %v1193
    %1843 = vmatmul.bf16.gmra.mxu0 %v153
    %v1844 = vpop.f32.mrf.mxu0
    %v1845 = vadd.f32 %v1832, %v1844
    %v1846 = vpop.f32.mrf.mxu0
    %1847 = vdwg.mxu0
    %1848 = vmatpush.bf16.msra.mxu0 %v1253
    %1849 = vmatpush.bf16.msra.mxu0 %v1249
    %1850 = vmatpush.bf16.msra.mxu0 %v1245
    %1851 = vmatpush.bf16.msra.mxu0 %v1241
    %1852 = vmatpush.bf16.msra.mxu0 %v1237
    %1853 = vmatpush.bf16.msra.mxu0 %v1233
    %1854 = vmatpush.bf16.msra.mxu0 %v1229
    %1855 = vmatpush.bf16.msra.mxu0 %v1225
    %1856 = vmatmul.bf16.gmra.mxu0 %v154
    %v1857 = vpop.f32.mrf.mxu0
    %v1858 = vadd.f32 %v1845, %v1857
    %v1859 = vpop.f32.mrf.mxu0
    %1860 = vdwg.mxu0
    %1861 = vmatpush.bf16.msra.mxu0 %v1285
    %1862 = vmatpush.bf16.msra.mxu0 %v1281
    %1863 = vmatpush.bf16.msra.mxu0 %v1277
    %1864 = vmatpush.bf16.msra.mxu0 %v1273
    %1865 = vmatpush.bf16.msra.mxu0 %v1269
    %1866 = vmatpush.bf16.msra.mxu0 %v1265
    %1867 = vmatpush.bf16.msra.mxu0 %v1261
    %1868 = vmatpush.bf16.msra.mxu0 %v1257
    %1869 = vmatmul.bf16.gmra.mxu0 %v155
    %v1870 = vpop.f32.mrf.mxu0
    %v1871 = vadd.f32 %v1858, %v1870
    %v1872 = vpop.f32.mrf.mxu0
    %1873 = vdwg.mxu0
    %v1874 = vmax.f32 %v1598, 0.0
    %v1875 = vmax.f32 %v1689, 0.0
    %v1876 = vmax.f32 %v1780, 0.0
    %v1877 = vmax.f32 %v1871, 0.0
    %v1878 = vpack.c.bf16 %v1874, %v1874
    %v1879 = vpack.c.bf16 %v1875, %v1875
    %v1880 = vpack.c.bf16 %v1876, %v1876
    %v1881 = vpack.c.bf16 %v1877, %v1877
    %v1882 = vld [vmem:[#allocation10] sm:$0xf]
    %v1883 = vld [vmem:[#allocation10 + $0x4] sm:$0xf]
    %v1884 = vld [vmem:[#allocation10 + $0x8] sm:$0xf]
    %v1885 = vld [vmem:[#allocation10 + $0xc] sm:$0xf]
    %v1886 = vld [vmem:[#allocation10 + $0x10] sm:$0xf]
    %v1887 = vld [vmem:[#allocation10 + $0x14] sm:$0xf]
    %v1888 = vld [vmem:[#allocation10 + $0x18] sm:$0xf]
    %v1889 = vld [vmem:[#allocation10 + $0x1c] sm:$0xf]
    %v1890 = vld [vmem:[#allocation10 + $0x20] sm:$0xf]
    %v1891 = vld [vmem:[#allocation10 + $0x24] sm:$0xf]
    %v1892 = vld [vmem:[#allocation10 + $0x28] sm:$0xf]
    %v1893 = vld [vmem:[#allocation10 + $0x2c] sm:$0xf]
    %v1894 = vld [vmem:[#allocation10 + $0x30] sm:$0xf]
    %v1895 = vld [vmem:[#allocation10 + $0x34] sm:$0xf]
    %v1896 = vld [vmem:[#allocation10 + $0x38] sm:$0xf]
    %v1897 = vld [vmem:[#allocation10 + $0x3c] sm:$0xf]
    %v1898 = vld [vmem:[#allocation10 + $0x40] sm:$0xf]
    %v1899 = vld [vmem:[#allocation10 + $0x44] sm:$0xf]
    %v1900 = vld [vmem:[#allocation10 + $0x48] sm:$0xf]
    %v1901 = vld [vmem:[#allocation10 + $0x4c] sm:$0xf]
    %v1902 = vld [vmem:[#allocation10 + $0x50] sm:$0xf]
    %v1903 = vld [vmem:[#allocation10 + $0x54] sm:$0xf]
    %v1904 = vld [vmem:[#allocation10 + $0x58] sm:$0xf]
    %v1905 = vld [vmem:[#allocation10 + $0x5c] sm:$0xf]
    %v1906 = vld [vmem:[#allocation10 + $0x60] sm:$0xf]
    %v1907 = vld [vmem:[#allocation10 + $0x64] sm:$0xf]
    %v1908 = vld [vmem:[#allocation10 + $0x68] sm:$0xf]
    %v1909 = vld [vmem:[#allocation10 + $0x6c] sm:$0xf]
    %v1910 = vld [vmem:[#allocation10 + $0x70] sm:$0xf]
    %v1911 = vld [vmem:[#allocation10 + $0x74] sm:$0xf]
    %v1912 = vld [vmem:[#allocation10 + $0x78] sm:$0xf]
    %v1913 = vld [vmem:[#allocation10 + $0x7c] sm:$0xf]
    %v1914 = vld [vmem:[#allocation10 + $0x80] sm:$0xf]
    %v1915 = vld [vmem:[#allocation10 + $0x84] sm:$0xf]
    %v1916 = vld [vmem:[#allocation10 + $0x88] sm:$0xf]
    %v1917 = vld [vmem:[#allocation10 + $0x8c] sm:$0xf]
    %v1918 = vld [vmem:[#allocation10 + $0x90] sm:$0xf]
    %v1919 = vld [vmem:[#allocation10 + $0x94] sm:$0xf]
    %v1920 = vld [vmem:[#allocation10 + $0x98] sm:$0xf]
    %v1921 = vld [vmem:[#allocation10 + $0x9c] sm:$0xf]
    %v1922 = vld [vmem:[#allocation10 + $0xa0] sm:$0xf]
    %v1923 = vld [vmem:[#allocation10 + $0xa4] sm:$0xf]
    %v1924 = vld [vmem:[#allocation10 + $0xa8] sm:$0xf]
    %v1925 = vld [vmem:[#allocation10 + $0xac] sm:$0xf]
    %v1926 = vld [vmem:[#allocation10 + $0xb0] sm:$0xf]
    %v1927 = vld [vmem:[#allocation10 + $0xb4] sm:$0xf]
    %v1928 = vld [vmem:[#allocation10 + $0xb8] sm:$0xf]
    %v1929 = vld [vmem:[#allocation10 + $0xbc] sm:$0xf]
    %v1930 = vld [vmem:[#allocation10 + $0xc0] sm:$0xf]
    %v1931 = vld [vmem:[#allocation10 + $0xc4] sm:$0xf]
    %v1932 = vld [vmem:[#allocation10 + $0xc8] sm:$0xf]
    %v1933 = vld [vmem:[#allocation10 + $0xcc] sm:$0xf]
    %v1934 = vld [vmem:[#allocation10 + $0xd0] sm:$0xf]
    %v1935 = vld [vmem:[#allocation10 + $0xd4] sm:$0xf]
    %v1936 = vld [vmem:[#allocation10 + $0xd8] sm:$0xf]
    %v1937 = vld [vmem:[#allocation10 + $0xdc] sm:$0xf]
    %v1938 = vld [vmem:[#allocation10 + $0xe0] sm:$0xf]
    %v1939 = vld [vmem:[#allocation10 + $0xe4] sm:$0xf]
    %v1940 = vld [vmem:[#allocation10 + $0xe8] sm:$0xf]
    %v1941 = vld [vmem:[#allocation10 + $0xec] sm:$0xf]
    %v1942 = vld [vmem:[#allocation10 + $0xf0] sm:$0xf]
    %v1943 = vld [vmem:[#allocation10 + $0xf4] sm:$0xf]
    %v1944 = vld [vmem:[#allocation10 + $0xf8] sm:$0xf]
    %v1945 = vld [vmem:[#allocation10 + $0xfc] sm:$0xf]
    %v1946 = vld [vmem:[%s5] sm:$0x1]
    %v1948 = vperm.slane %v1946, 0
    %v2014 = vunpack.c.l.b16 %v1882
    %v2015 = vunpack.c.l.b16 %v1883
    %v2016 = vunpack.c.l.b16 %v1884
    %v2017 = vunpack.c.l.b16 %v1885
    %v2018 = vunpack.c.l.b16 %v1886
    %v2019 = vunpack.c.l.b16 %v1887
    %v2020 = vunpack.c.l.b16 %v1888
    %v2021 = vunpack.c.l.b16 %v1889
    %v2022 = vunpack.c.l.b16 %v1890
    %v2023 = vunpack.c.l.b16 %v1891
    %v2024 = vunpack.c.l.b16 %v1892
    %v2025 = vunpack.c.l.b16 %v1893
    %v2026 = vunpack.c.l.b16 %v1894
    %v2027 = vunpack.c.l.b16 %v1895
    %v2028 = vunpack.c.l.b16 %v1896
    %v2029 = vunpack.c.l.b16 %v1897
    %v2030 = vunpack.c.l.b16 %v1898
    %v2031 = vunpack.c.l.b16 %v1899
    %v2032 = vunpack.c.l.b16 %v1900
    %v2033 = vunpack.c.l.b16 %v1901
    %v2034 = vunpack.c.l.b16 %v1902
    %v2035 = vunpack.c.l.b16 %v1903
    %v2036 = vunpack.c.l.b16 %v1904
    %v2037 = vunpack.c.l.b16 %v1905
    %v2038 = vunpack.c.l.b16 %v1906
    %v2039 = vunpack.c.l.b16 %v1907
    %v2040 = vunpack.c.l.b16 %v1908
    %v2041 = vunpack.c.l.b16 %v1909
    %v2042 = vunpack.c.l.b16 %v1910
    %v2043 = vunpack.c.l.b16 %v1911
    %v2044 = vunpack.c.l.b16 %v1912
    %v2045 = vunpack.c.l.b16 %v1913
    %v2046 = vunpack.c.l.b16 %v1914
    %v2047 = vunpack.c.l.b16 %v1915
    %v2048 = vunpack.c.l.b16 %v1916
    %v2049 = vunpack.c.l.b16 %v1917
    %v2050 = vunpack.c.l.b16 %v1918
    %v2051 = vunpack.c.l.b16 %v1919
    %v2052 = vunpack.c.l.b16 %v1920
    %v2053 = vunpack.c.l.b16 %v1921
    %v2054 = vunpack.c.l.b16 %v1922
    %v2055 = vunpack.c.l.b16 %v1923
    %v2056 = vunpack.c.l.b16 %v1924
    %v2057 = vunpack.c.l.b16 %v1925
    %v2058 = vunpack.c.l.b16 %v1926
    %v2059 = vunpack.c.l.b16 %v1927
    %v2060 = vunpack.c.l.b16 %v1928
    %v2061 = vunpack.c.l.b16 %v1929
    %v2062 = vunpack.c.l.b16 %v1930
    %v2063 = vunpack.c.l.b16 %v1931
    %v2064 = vunpack.c.l.b16 %v1932
    %v2065 = vunpack.c.l.b16 %v1933
    %v2066 = vunpack.c.l.b16 %v1934
    %v2067 = vunpack.c.l.b16 %v1935
    %v2068 = vunpack.c.l.b16 %v1936
    %v2069 = vunpack.c.l.b16 %v1937
    %v2070 = vunpack.c.l.b16 %v1938
    %v2071 = vunpack.c.l.b16 %v1939
    %v2072 = vunpack.c.l.b16 %v1940
    %v2073 = vunpack.c.l.b16 %v1941
    %v2074 = vunpack.c.l.b16 %v1942
    %v2075 = vunpack.c.l.b16 %v1943
    %v2076 = vunpack.c.l.b16 %v1944
    %v2077 = vunpack.c.l.b16 %v1945
    %v2078 = vpack.c.b16 %v2015, %v2014
    %v2079 = vpack.c.b16 %v2017, %v2016
    %v2080 = vpack.c.b16 %v2019, %v2018
    %v2081 = vpack.c.b16 %v2021, %v2020
    %v2082 = vpack.c.b16 %v2023, %v2022
    %v2083 = vpack.c.b16 %v2025, %v2024
    %v2084 = vpack.c.b16 %v2027, %v2026
    %v2085 = vpack.c.b16 %v2029, %v2028
    %v2086 = vpack.c.b16 %v2031, %v2030
    %v2087 = vpack.c.b16 %v2033, %v2032
    %v2088 = vpack.c.b16 %v2035, %v2034
    %v2089 = vpack.c.b16 %v2037, %v2036
    %v2090 = vpack.c.b16 %v2039, %v2038
    %v2091 = vpack.c.b16 %v2041, %v2040
    %v2092 = vpack.c.b16 %v2043, %v2042
    %v2093 = vpack.c.b16 %v2045, %v2044
    %v2094 = vpack.c.b16 %v2047, %v2046
    %v2095 = vpack.c.b16 %v2049, %v2048
    %v2096 = vpack.c.b16 %v2051, %v2050
    %v2097 = vpack.c.b16 %v2053, %v2052
    %v2098 = vpack.c.b16 %v2055, %v2054
    %v2099 = vpack.c.b16 %v2057, %v2056
    %v2100 = vpack.c.b16 %v2059, %v2058
    %v2101 = vpack.c.b16 %v2061, %v2060
    %v2102 = vpack.c.b16 %v2063, %v2062
    %v2103 = vpack.c.b16 %v2065, %v2064
    %v2104 = vpack.c.b16 %v2067, %v2066
    %v2105 = vpack.c.b16 %v2069, %v2068
    %v2106 = vpack.c.b16 %v2071, %v2070
    %v2107 = vpack.c.b16 %v2073, %v2072
    %v2108 = vpack.c.b16 %v2075, %v2074
    %v2109 = vpack.c.b16 %v2077, %v2076
    %2142 = vmatpush.bf16.msra.mxu0 %v2085
    %2143 = vmatpush.bf16.msra.mxu0 %v2084
    %2144 = vmatpush.bf16.msra.mxu0 %v2083
    %2145 = vmatpush.bf16.msra.mxu0 %v2082
    %2146 = vmatpush.bf16.msra.mxu0 %v2081
    %2147 = vmatpush.bf16.msra.mxu0 %v2080
    %2148 = vmatpush.bf16.msra.mxu0 %v2079
    %2149 = vmatpush.bf16.msra.mxu0 %v2078
    %2150 = vmatmul.bf16.gmra.mxu0 %v1878
    %v2151 = vpop.f32.mrf.mxu0
    %v2152 = vadd.f32 %v1948, %v2151
    %v2153 = vpop.f32.mrf.mxu0
    %2154 = vdwg.mxu0
    %2155 = vmatpush.bf16.msra.mxu0 %v2093
    %2156 = vmatpush.bf16.msra.mxu0 %v2092
    %2157 = vmatpush.bf16.msra.mxu0 %v2091
    %2158 = vmatpush.bf16.msra.mxu0 %v2090
    %2159 = vmatpush.bf16.msra.mxu0 %v2089
    %2160 = vmatpush.bf16.msra.mxu0 %v2088
    %2161 = vmatpush.bf16.msra.mxu0 %v2087
    %2162 = vmatpush.bf16.msra.mxu0 %v2086
    %2163 = vmatmul.bf16.gmra.mxu0 %v1879
    %v2164 = vpop.f32.mrf.mxu0
    %v2165 = vadd.f32 %v2152, %v2164
    %v2166 = vpop.f32.mrf.mxu0
    %2167 = vdwg.mxu0
    %2168 = vmatpush.bf16.msra.mxu0 %v2101
    %2169 = vmatpush.bf16.msra.mxu0 %v2100
    %2170 = vmatpush.bf16.msra.mxu0 %v2099
    %2171 = vmatpush.bf16.msra.mxu0 %v2098
    %2172 = vmatpush.bf16.msra.mxu0 %v2097
    %2173 = vmatpush.bf16.msra.mxu0 %v2096
    %2174 = vmatpush.bf16.msra.mxu0 %v2095
    %2175 = vmatpush.bf16.msra.mxu0 %v2094
    %2176 = vmatmul.bf16.gmra.mxu0 %v1880
    %v2177 = vpop.f32.mrf.mxu0
    %v2178 = vadd.f32 %v2165, %v2177
    %v2179 = vpop.f32.mrf.mxu0
    %2180 = vdwg.mxu0
    %2181 = vmatpush.bf16.msra.mxu0 %v2109
    %2182 = vmatpush.bf16.msra.mxu0 %v2108
    %2183 = vmatpush.bf16.msra.mxu0 %v2107
    %2184 = vmatpush.bf16.msra.mxu0 %v2106
    %2185 = vmatpush.bf16.msra.mxu0 %v2105
    %2186 = vmatpush.bf16.msra.mxu0 %v2104
    %2187 = vmatpush.bf16.msra.mxu0 %v2103
    %2188 = vmatpush.bf16.msra.mxu0 %v2102
    %2189 = vmatmul.bf16.gmra.mxu0 %v1881
    %v2190 = vpop.f32.mrf.mxu0
    %v2191 = vadd.f32 %v2178, %v2190
    %v2192 = vpop.f32.mrf.mxu0
    %2193 = vdwg.mxu0
    %2194 = vst [vmem:[#allocation17] sm:$0xff] %v2191
    %v2195 = vpack.c.bf16 %v2191, %v2191
    %v2196 = vld [vmem:[#allocation12] sm:$0xff]
    %v2197 = vld [vmem:[#allocation12 + $0x8] sm:$0xff]
    %v2198 = vld [vmem:[#allocation12 + $0x10] sm:$0xff]
    %v2199 = vld [vmem:[#allocation12 + $0x18] sm:$0xff]
    %v2200 = vld [vmem:[#allocation12 + $0x20] sm:$0xff]
    %v2201 = vld [vmem:[#allocation12 + $0x28] sm:$0xff]
    %v2202 = vld [vmem:[#allocation12 + $0x30] sm:$0xff]
    %v2203 = vld [vmem:[#allocation12 + $0x38] sm:$0xff]
    %v2204 = vld [vmem:[#allocation12 + $0x40] sm:$0xff]
    %v2205 = vld [vmem:[#allocation12 + $0x48] sm:$0xff]
    %v2206 = vld [vmem:[#allocation12 + $0x50] sm:$0xff]
    %v2207 = vld [vmem:[#allocation12 + $0x58] sm:$0xff]
    %v2208 = vld [vmem:[#allocation12 + $0x60] sm:$0xff]
    %v2209 = vld [vmem:[#allocation12 + $0x68] sm:$0xff]
    %v2210 = vld [vmem:[#allocation12 + $0x70] sm:$0xff]
    %v2211 = vld [vmem:[#allocation12 + $0x78] sm:$0xff]
    %v2212 = vld [vmem:[#allocation12 + $0x80] sm:$0xff]
    %v2213 = vld [vmem:[#allocation12 + $0x88] sm:$0xff]
    %v2214 = vld [vmem:[#allocation12 + $0x90] sm:$0xff]
    %v2215 = vld [vmem:[#allocation12 + $0x98] sm:$0xff]
    %v2216 = vld [vmem:[#allocation12 + $0xa0] sm:$0xff]
    %v2217 = vld [vmem:[#allocation12 + $0xa8] sm:$0xff]
    %v2218 = vld [vmem:[#allocation12 + $0xb0] sm:$0xff]
    %v2219 = vld [vmem:[#allocation12 + $0xb8] sm:$0xff]
    %v2220 = vld [vmem:[#allocation12 + $0xc0] sm:$0xff]
    %v2221 = vld [vmem:[#allocation12 + $0xc8] sm:$0xff]
    %v2222 = vld [vmem:[#allocation12 + $0xd0] sm:$0xff]
    %v2223 = vld [vmem:[#allocation12 + $0xd8] sm:$0xff]
    %v2224 = vld [vmem:[#allocation12 + $0xe0] sm:$0xff]
    %v2225 = vld [vmem:[#allocation12 + $0xe8] sm:$0xff]
    %v2226 = vld [vmem:[#allocation12 + $0xf0] sm:$0xff]
    %v2227 = vld [vmem:[#allocation12 + $0xf8] sm:$0xff]
    %v2228 = vld [vmem:[#allocation13] sm:$0xf]
    %v2230 = vperm.slane %v2228, 0
    %v2231 = vperm.slane %v2228, 1
    %v2232 = vperm.slane %v2228, 2
    %v2233 = vperm.slane %v2228, 3
    %v2270 = vunpack.c.l.b16 %v2196
    %v2271 = vunpack.c.h.b16 %v2196
    %v2272 = vunpack.c.l.b16 %v2197
    %v2273 = vunpack.c.h.b16 %v2197
    %v2274 = vunpack.c.l.b16 %v2198
    %v2275 = vunpack.c.h.b16 %v2198
    %v2276 = vunpack.c.l.b16 %v2199
    %v2277 = vunpack.c.h.b16 %v2199
    %v2278 = vunpack.c.l.b16 %v2200
    %v2279 = vunpack.c.h.b16 %v2200
    %v2280 = vunpack.c.l.b16 %v2201
    %v2281 = vunpack.c.h.b16 %v2201
    %v2282 = vunpack.c.l.b16 %v2202
    %v2283 = vunpack.c.h.b16 %v2202
    %v2284 = vunpack.c.l.b16 %v2203
    %v2285 = vunpack.c.h.b16 %v2203
    %v2286 = vunpack.c.l.b16 %v2204
    %v2287 = vunpack.c.h.b16 %v2204
    %v2288 = vunpack.c.l.b16 %v2205
    %v2289 = vunpack.c.h.b16 %v2205
    %v2290 = vunpack.c.l.b16 %v2206
    %v2291 = vunpack.c.h.b16 %v2206
    %v2292 = vunpack.c.l.b16 %v2207
    %v2293 = vunpack.c.h.b16 %v2207
    %v2294 = vunpack.c.l.b16 %v2208
    %v2295 = vunpack.c.h.b16 %v2208
    %v2296 = vunpack.c.l.b16 %v2209
    %v2297 = vunpack.c.h.b16 %v2209
    %v2298 = vunpack.c.l.b16 %v2210
    %v2299 = vunpack.c.h.b16 %v2210
    %v2300 = vunpack.c.l.b16 %v2211
    %v2301 = vunpack.c.h.b16 %v2211
    %v2302 = vunpack.c.l.b16 %v2212
    %v2303 = vunpack.c.h.b16 %v2212
    %v2304 = vunpack.c.l.b16 %v2213
    %v2305 = vunpack.c.h.b16 %v2213
    %v2306 = vunpack.c.l.b16 %v2214
    %v2307 = vunpack.c.h.b16 %v2214
    %v2308 = vunpack.c.l.b16 %v2215
    %v2309 = vunpack.c.h.b16 %v2215
    %v2310 = vunpack.c.l.b16 %v2216
    %v2311 = vunpack.c.h.b16 %v2216
    %v2312 = vunpack.c.l.b16 %v2217
    %v2313 = vunpack.c.h.b16 %v2217
    %v2314 = vunpack.c.l.b16 %v2218
    %v2315 = vunpack.c.h.b16 %v2218
    %v2316 = vunpack.c.l.b16 %v2219
    %v2317 = vunpack.c.h.b16 %v2219
    %v2318 = vunpack.c.l.b16 %v2220
    %v2319 = vunpack.c.h.b16 %v2220
    %v2320 = vunpack.c.l.b16 %v2221
    %v2321 = vunpack.c.h.b16 %v2221
    %v2322 = vunpack.c.l.b16 %v2222
    %v2323 = vunpack.c.h.b16 %v2222
    %v2324 = vunpack.c.l.b16 %v2223
    %v2325 = vunpack.c.h.b16 %v2223
    %v2326 = vunpack.c.l.b16 %v2224
    %v2327 = vunpack.c.h.b16 %v2224
    %v2328 = vunpack.c.l.b16 %v2225
    %v2329 = vunpack.c.h.b16 %v2225
    %v2330 = vunpack.c.l.b16 %v2226
    %v2331 = vunpack.c.h.b16 %v2226
    %v2332 = vunpack.c.l.b16 %v2227
    %v2333 = vunpack.c.h.b16 %v2227
    %v2334 = vpack.c.b16 %v2274, %v2270
    %v2335 = vpack.c.b16 %v2275, %v2271
    %v2336 = vpack.c.b16 %v2276, %v2272
    %v2337 = vpack.c.b16 %v2277, %v2273
    %v2338 = vpack.c.b16 %v2282, %v2278
    %v2339 = vpack.c.b16 %v2283, %v2279
    %v2340 = vpack.c.b16 %v2284, %v2280
    %v2341 = vpack.c.b16 %v2285, %v2281
    %v2342 = vpack.c.b16 %v2290, %v2286
    %v2343 = vpack.c.b16 %v2291, %v2287
    %v2344 = vpack.c.b16 %v2292, %v2288
    %v2345 = vpack.c.b16 %v2293, %v2289
    %v2346 = vpack.c.b16 %v2298, %v2294
    %v2347 = vpack.c.b16 %v2299, %v2295
    %v2348 = vpack.c.b16 %v2300, %v2296
    %v2349 = vpack.c.b16 %v2301, %v2297
    %v2350 = vpack.c.b16 %v2306, %v2302
    %v2351 = vpack.c.b16 %v2307, %v2303
    %v2352 = vpack.c.b16 %v2308, %v2304
    %v2353 = vpack.c.b16 %v2309, %v2305
    %v2354 = vpack.c.b16 %v2314, %v2310
    %v2355 = vpack.c.b16 %v2315, %v2311
    %v2356 = vpack.c.b16 %v2316, %v2312
    %v2357 = vpack.c.b16 %v2317, %v2313
    %v2358 = vpack.c.b16 %v2322, %v2318
    %v2359 = vpack.c.b16 %v2323, %v2319
    %v2360 = vpack.c.b16 %v2324, %v2320
    %v2361 = vpack.c.b16 %v2325, %v2321
    %v2362 = vpack.c.b16 %v2330, %v2326
    %v2363 = vpack.c.b16 %v2331, %v2327
    %v2364 = vpack.c.b16 %v2332, %v2328
    %v2365 = vpack.c.b16 %v2333, %v2329
    %2398 = vmatpush.bf16.msra.mxu0 %v2362
    %2399 = vmatpush.bf16.msra.mxu0 %v2358
    %2400 = vmatpush.bf16.msra.mxu0 %v2354
    %2401 = vmatpush.bf16.msra.mxu0 %v2350
    %2402 = vmatpush.bf16.msra.mxu0 %v2346
    %2403 = vmatpush.bf16.msra.mxu0 %v2342
    %2404 = vmatpush.bf16.msra.mxu0 %v2338
    %2405 = vmatpush.bf16.msra.mxu0 %v2334
    %2406 = vmatmul.bf16.gmra.mxu0 %v2195
    %v2407 = vpop.f32.mrf.mxu0
    %v2408 = vadd.f32 %v2230, %v2407
    %v2409 = vpop.f32.mrf.mxu0
    %2410 = vdwg.mxu0
    %2411 = vmatpush.bf16.msra.mxu0 %v2363
    %2412 = vmatpush.bf16.msra.mxu0 %v2359
    %2413 = vmatpush.bf16.msra.mxu0 %v2355
    %2414 = vmatpush.bf16.msra.mxu0 %v2351
    %2415 = vmatpush.bf16.msra.mxu0 %v2347
    %2416 = vmatpush.bf16.msra.mxu0 %v2343
    %2417 = vmatpush.bf16.msra.mxu0 %v2339
    %2418 = vmatpush.bf16.msra.mxu0 %v2335
    %2419 = vmatmul.bf16.gmra.mxu0 %v2195
    %v2420 = vpop.f32.mrf.mxu0
    %v2421 = vadd.f32 %v2231, %v2420
    %v2422 = vpop.f32.mrf.mxu0
    %2423 = vdwg.mxu0
    %2424 = vmatpush.bf16.msra.mxu0 %v2364
    %2425 = vmatpush.bf16.msra.mxu0 %v2360
    %2426 = vmatpush.bf16.msra.mxu0 %v2356
    %2427 = vmatpush.bf16.msra.mxu0 %v2352
    %2428 = vmatpush.bf16.msra.mxu0 %v2348
    %2429 = vmatpush.bf16.msra.mxu0 %v2344
    %2430 = vmatpush.bf16.msra.mxu0 %v2340
    %2431 = vmatpush.bf16.msra.mxu0 %v2336
    %2432 = vmatmul.bf16.gmra.mxu0 %v2195
    %v2433 = vpop.f32.mrf.mxu0
    %v2434 = vadd.f32 %v2232, %v2433
    %v2435 = vpop.f32.mrf.mxu0
    %2436 = vdwg.mxu0
    %2437 = vmatpush.bf16.msra.mxu0 %v2365
    %2438 = vmatpush.bf16.msra.mxu0 %v2361
    %2439 = vmatpush.bf16.msra.mxu0 %v2357
    %2440 = vmatpush.bf16.msra.mxu0 %v2353
    %2441 = vmatpush.bf16.msra.mxu0 %v2349
    %2442 = vmatpush.bf16.msra.mxu0 %v2345
    %2443 = vmatpush.bf16.msra.mxu0 %v2341
    %2444 = vmatpush.bf16.msra.mxu0 %v2337
    %2445 = vmatmul.bf16.gmra.mxu0 %v2195
    %v2446 = vpop.f32.mrf.mxu0
    %v2447 = vadd.f32 %v2233, %v2446
    %v2448 = vpop.f32.mrf.mxu0
    %2449 = vdwg.mxu0
    %v2450 = vmax.f32 %v2408, 0.0
    %v2451 = vmax.f32 %v2421, 0.0
    %v2452 = vmax.f32 %v2434, 0.0
    %v2453 = vmax.f32 %v2447, 0.0
    %v2454 = vpack.c.bf16 %v2450, %v2450
    %v2455 = vpack.c.bf16 %v2451, %v2451
    %v2456 = vpack.c.bf16 %v2452, %v2452
    %v2457 = vpack.c.bf16 %v2453, %v2453
    %v2458 = vld [vmem:[#allocation15] sm:$0xff]
    %v2459 = vld [vmem:[#allocation15 + $0x8] sm:$0xff]
    %v2460 = vld [vmem:[#allocation15 + $0x10] sm:$0xff]
    %v2461 = vld [vmem:[#allocation15 + $0x18] sm:$0xf]
    %v2462 = vld [vmem:[#allocation15 + $0x1c] sm:$0xff]
    %v2463 = vld [vmem:[#allocation15 + $0x24] sm:$0xff]
    %v2464 = vld [vmem:[#allocation15 + $0x2c] sm:$0xff]
    %v2465 = vld [vmem:[#allocation15 + $0x34] sm:$0xf]
    %v2466 = vld [vmem:[#allocation15 + $0x38] sm:$0xff]
    %v2467 = vld [vmem:[#allocation15 + $0x40] sm:$0xff]
    %v2468 = vld [vmem:[#allocation15 + $0x48] sm:$0xff]
    %v2469 = vld [vmem:[#allocation15 + $0x50] sm:$0xf]
    %v2470 = vld [vmem:[#allocation15 + $0x54] sm:$0xff]
    %v2471 = vld [vmem:[#allocation15 + $0x5c] sm:$0xff]
    %v2472 = vld [vmem:[#allocation15 + $0x64] sm:$0xff]
    %v2473 = vld [vmem:[#allocation15 + $0x6c] sm:$0xf]
    %v2474 = vld [vmem:[#allocation15 + $0x70] sm:$0xff]
    %v2475 = vld [vmem:[#allocation15 + $0x78] sm:$0xff]
    %v2476 = vld [vmem:[#allocation15 + $0x80] sm:$0xff]
    %v2477 = vld [vmem:[#allocation15 + $0x88] sm:$0xf]
    %v2478 = vld [vmem:[#allocation15 + $0x8c] sm:$0xff]
    %v2479 = vld [vmem:[#allocation15 + $0x94] sm:$0xff]
    %v2480 = vld [vmem:[#allocation15 + $0x9c] sm:$0xff]
    %v2481 = vld [vmem:[#allocation15 + $0xa4] sm:$0xf]
    %v2482 = vld [vmem:[#allocation15 + $0xa8] sm:$0xff]
    %v2483 = vld [vmem:[#allocation15 + $0xb0] sm:$0xff]
    %v2484 = vld [vmem:[#allocation15 + $0xb8] sm:$0xff]
    %v2485 = vld [vmem:[#allocation15 + $0xc0] sm:$0xf]
    %v2486 = vld [vmem:[#allocation15 + $0xc4] sm:$0xff]
    %v2487 = vld [vmem:[#allocation15 + $0xcc] sm:$0xff]
    %v2488 = vld [vmem:[#allocation15 + $0xd4] sm:$0xff]
    %v2489 = vld [vmem:[#allocation15 + $0xdc] sm:$0xf]
    %v2490 = vld [vmem:[#allocation15 + $0xe0] sm:$0xff]
    %v2491 = vld [vmem:[#allocation15 + $0xe8] sm:$0xff]
    %v2492 = vld [vmem:[#allocation15 + $0xf0] sm:$0xff]
    %v2493 = vld [vmem:[#allocation15 + $0xf8] sm:$0xf]
    %v2494 = vld [vmem:[#allocation15 + $0xfc] sm:$0xff]
    %v2495 = vld [vmem:[#allocation15 + $0x104] sm:$0xff]
    %v2496 = vld [vmem:[#allocation15 + $0x10c] sm:$0xff]
    %v2497 = vld [vmem:[#allocation15 + $0x114] sm:$0xf]
    %v2498 = vld [vmem:[#allocation15 + $0x118] sm:$0xff]
    %v2499 = vld [vmem:[#allocation15 + $0x120] sm:$0xff]
    %v2500 = vld [vmem:[#allocation15 + $0x128] sm:$0xff]
    %v2501 = vld [vmem:[#allocation15 + $0x130] sm:$0xf]
    %v2502 = vld [vmem:[#allocation15 + $0x134] sm:$0xff]
    %v2503 = vld [vmem:[#allocation15 + $0x13c] sm:$0xff]
    %v2504 = vld [vmem:[#allocation15 + $0x144] sm:$0xff]
    %v2505 = vld [vmem:[#allocation15 + $0x14c] sm:$0xf]
    %v2506 = vld [vmem:[#allocation15 + $0x150] sm:$0xff]
    %v2507 = vld [vmem:[#allocation15 + $0x158] sm:$0xff]
    %v2508 = vld [vmem:[#allocation15 + $0x160] sm:$0xff]
    %v2509 = vld [vmem:[#allocation15 + $0x168] sm:$0xf]
    %v2510 = vld [vmem:[#allocation15 + $0x16c] sm:$0xff]
    %v2511 = vld [vmem:[#allocation15 + $0x174] sm:$0xff]
    %v2512 = vld [vmem:[#allocation15 + $0x17c] sm:$0xff]
    %v2513 = vld [vmem:[#allocation15 + $0x184] sm:$0xf]
    %v2514 = vld [vmem:[#allocation15 + $0x188] sm:$0xff]
    %v2515 = vld [vmem:[#allocation15 + $0x190] sm:$0xff]
    %v2516 = vld [vmem:[#allocation15 + $0x198] sm:$0xff]
    %v2517 = vld [vmem:[#allocation15 + $0x1a0] sm:$0xf]
    %v2518 = vld [vmem:[#allocation15 + $0x1a4] sm:$0xff]
    %v2519 = vld [vmem:[#allocation15 + $0x1ac] sm:$0xff]
    %v2520 = vld [vmem:[#allocation15 + $0x1b4] sm:$0xff]
    %v2521 = vld [vmem:[#allocation15 + $0x1bc] sm:$0xf]
    %v2522 = vld [vmem:[#allocation15 + $0x1c0] sm:$0xff]
    %v2523 = vld [vmem:[#allocation15 + $0x1c8] sm:$0xff]
    %v2524 = vld [vmem:[#allocation15 + $0x1d0] sm:$0xff]
    %v2525 = vld [vmem:[#allocation15 + $0x1d8] sm:$0xf]
    %v2526 = vld [vmem:[#allocation15 + $0x1dc] sm:$0xff]
    %v2527 = vld [vmem:[#allocation15 + $0x1e4] sm:$0xff]
    %v2528 = vld [vmem:[#allocation15 + $0x1ec] sm:$0xff]
    %v2529 = vld [vmem:[#allocation15 + $0x1f4] sm:$0xf]
    %v2530 = vld [vmem:[#allocation15 + $0x1f8] sm:$0xff]
    %v2531 = vld [vmem:[#allocation15 + $0x200] sm:$0xff]
    %v2532 = vld [vmem:[#allocation15 + $0x208] sm:$0xff]
    %v2533 = vld [vmem:[#allocation15 + $0x210] sm:$0xf]
    %v2534 = vld [vmem:[#allocation15 + $0x214] sm:$0xff]
    %v2535 = vld [vmem:[#allocation15 + $0x21c] sm:$0xff]
    %v2536 = vld [vmem:[#allocation15 + $0x224] sm:$0xff]
    %v2537 = vld [vmem:[#allocation15 + $0x22c] sm:$0xf]
    %v2538 = vld [vmem:[#allocation15 + $0x230] sm:$0xff]
    %v2539 = vld [vmem:[#allocation15 + $0x238] sm:$0xff]
    %v2540 = vld [vmem:[#allocation15 + $0x240] sm:$0xff]
    %v2541 = vld [vmem:[#allocation15 + $0x248] sm:$0xf]
    %v2542 = vld [vmem:[#allocation15 + $0x24c] sm:$0xff]
    %v2543 = vld [vmem:[#allocation15 + $0x254] sm:$0xff]
    %v2544 = vld [vmem:[#allocation15 + $0x25c] sm:$0xff]
    %v2545 = vld [vmem:[#allocation15 + $0x264] sm:$0xf]
    %v2546 = vld [vmem:[#allocation15 + $0x268] sm:$0xff]
    %v2547 = vld [vmem:[#allocation15 + $0x270] sm:$0xff]
    %v2548 = vld [vmem:[#allocation15 + $0x278] sm:$0xff]
    %v2549 = vld [vmem:[#allocation15 + $0x280] sm:$0xf]
    %v2550 = vld [vmem:[#allocation15 + $0x284] sm:$0xff]
    %v2551 = vld [vmem:[#allocation15 + $0x28c] sm:$0xff]
    %v2552 = vld [vmem:[#allocation15 + $0x294] sm:$0xff]
    %v2553 = vld [vmem:[#allocation15 + $0x29c] sm:$0xf]
    %v2554 = vld [vmem:[#allocation15 + $0x2a0] sm:$0xff]
    %v2555 = vld [vmem:[#allocation15 + $0x2a8] sm:$0xff]
    %v2556 = vld [vmem:[#allocation15 + $0x2b0] sm:$0xff]
    %v2557 = vld [vmem:[#allocation15 + $0x2b8] sm:$0xf]
    %v2558 = vld [vmem:[#allocation15 + $0x2bc] sm:$0xff]
    %v2559 = vld [vmem:[#allocation15 + $0x2c4] sm:$0xff]
    %v2560 = vld [vmem:[#allocation15 + $0x2cc] sm:$0xff]
    %v2561 = vld [vmem:[#allocation15 + $0x2d4] sm:$0xf]
    %v2562 = vld [vmem:[#allocation15 + $0x2d8] sm:$0xff]
    %v2563 = vld [vmem:[#allocation15 + $0x2e0] sm:$0xff]
    %v2564 = vld [vmem:[#allocation15 + $0x2e8] sm:$0xff]
    %v2565 = vld [vmem:[#allocation15 + $0x2f0] sm:$0xf]
    %v2566 = vld [vmem:[#allocation15 + $0x2f4] sm:$0xff]
    %v2567 = vld [vmem:[#allocation15 + $0x2fc] sm:$0xff]
    %v2568 = vld [vmem:[#allocation15 + $0x304] sm:$0xff]
    %v2569 = vld [vmem:[#allocation15 + $0x30c] sm:$0xf]
    %v2570 = vld [vmem:[#allocation15 + $0x310] sm:$0xff]
    %v2571 = vld [vmem:[#allocation15 + $0x318] sm:$0xff]
    %v2572 = vld [vmem:[#allocation15 + $0x320] sm:$0xff]
    %v2573 = vld [vmem:[#allocation15 + $0x328] sm:$0xf]
    %v2574 = vld [vmem:[#allocation15 + $0x32c] sm:$0xff]
    %v2575 = vld [vmem:[#allocation15 + $0x334] sm:$0xff]
    %v2576 = vld [vmem:[#allocation15 + $0x33c] sm:$0xff]
    %v2577 = vld [vmem:[#allocation15 + $0x344] sm:$0xf]
    %v2578 = vld [vmem:[#allocation15 + $0x348] sm:$0xff]
    %v2579 = vld [vmem:[#allocation15 + $0x350] sm:$0xff]
    %v2580 = vld [vmem:[#allocation15 + $0x358] sm:$0xff]
    %v2581 = vld [vmem:[#allocation15 + $0x360] sm:$0xf]
    %v2582 = vld [vmem:[#allocation15 + $0x364] sm:$0xff]
    %v2583 = vld [vmem:[#allocation15 + $0x36c] sm:$0xff]
    %v2584 = vld [vmem:[#allocation15 + $0x374] sm:$0xff]
    %v2585 = vld [vmem:[#allocation15 + $0x37c] sm:$0xf]
    %v2586 = vld [vmem:[#allocation15 + $0x380] sm:$0xff]
    %v2587 = vld [vmem:[#allocation15 + $0x388] sm:$0xff]
    %v2588 = vld [vmem:[#allocation15 + $0x390] sm:$0xff]
    %v2589 = vld [vmem:[#allocation15 + $0x398] sm:$0xf]
    %v2590 = vld [vmem:[#allocation15 + $0x39c] sm:$0xff]
    %v2591 = vld [vmem:[#allocation15 + $0x3a4] sm:$0xff]
    %v2592 = vld [vmem:[#allocation15 + $0x3ac] sm:$0xff]
    %v2593 = vld [vmem:[#allocation15 + $0x3b4] sm:$0xf]
    %v2594 = vld [vmem:[#allocation15 + $0x3b8] sm:$0xff]
    %v2595 = vld [vmem:[#allocation15 + $0x3c0] sm:$0xff]
    %v2596 = vld [vmem:[#allocation15 + $0x3c8] sm:$0xff]
    %v2597 = vld [vmem:[#allocation15 + $0x3d0] sm:$0xf]
    %v2598 = vld [vmem:[#allocation15 + $0x3d4] sm:$0xff]
    %v2599 = vld [vmem:[#allocation15 + $0x3dc] sm:$0xff]
    %v2600 = vld [vmem:[#allocation15 + $0x3e4] sm:$0xff]
    %v2601 = vld [vmem:[#allocation15 + $0x3ec] sm:$0xf]
    %v2602 = vld [vmem:[#allocation15 + $0x3f0] sm:$0xff]
    %v2603 = vld [vmem:[#allocation15 + $0x3f8] sm:$0xff]
    %v2604 = vld [vmem:[#allocation15 + $0x400] sm:$0xff]
    %v2605 = vld [vmem:[#allocation15 + $0x408] sm:$0xf]
    %v2606 = vld [vmem:[#allocation15 + $0x40c] sm:$0xff]
    %v2607 = vld [vmem:[#allocation15 + $0x414] sm:$0xff]
    %v2608 = vld [vmem:[#allocation15 + $0x41c] sm:$0xff]
    %v2609 = vld [vmem:[#allocation15 + $0x424] sm:$0xf]
    %v2610 = vld [vmem:[#allocation15 + $0x428] sm:$0xff]
    %v2611 = vld [vmem:[#allocation15 + $0x430] sm:$0xff]
    %v2612 = vld [vmem:[#allocation15 + $0x438] sm:$0xff]
    %v2613 = vld [vmem:[#allocation15 + $0x440] sm:$0xf]
    %v2614 = vld [vmem:[#allocation15 + $0x444] sm:$0xff]
    %v2615 = vld [vmem:[#allocation15 + $0x44c] sm:$0xff]
    %v2616 = vld [vmem:[#allocation15 + $0x454] sm:$0xff]
    %v2617 = vld [vmem:[#allocation15 + $0x45c] sm:$0xf]
    %v2618 = vld [vmem:[#allocation15 + $0x460] sm:$0xff]
    %v2619 = vld [vmem:[#allocation15 + $0x468] sm:$0xff]
    %v2620 = vld [vmem:[#allocation15 + $0x470] sm:$0xff]
    %v2621 = vld [vmem:[#allocation15 + $0x478] sm:$0xf]
    %v2622 = vld [vmem:[#allocation15 + $0x47c] sm:$0xff]
    %v2623 = vld [vmem:[#allocation15 + $0x484] sm:$0xff]
    %v2624 = vld [vmem:[#allocation15 + $0x48c] sm:$0xff]
    %v2625 = vld [vmem:[#allocation15 + $0x494] sm:$0xf]
    %v2626 = vld [vmem:[#allocation15 + $0x498] sm:$0xff]
    %v2627 = vld [vmem:[#allocation15 + $0x4a0] sm:$0xff]
    %v2628 = vld [vmem:[#allocation15 + $0x4a8] sm:$0xff]
    %v2629 = vld [vmem:[#allocation15 + $0x4b0] sm:$0xf]
    %v2630 = vld [vmem:[#allocation15 + $0x4b4] sm:$0xff]
    %v2631 = vld [vmem:[#allocation15 + $0x4bc] sm:$0xff]
    %v2632 = vld [vmem:[#allocation15 + $0x4c4] sm:$0xff]
    %v2633 = vld [vmem:[#allocation15 + $0x4cc] sm:$0xf]
    %v2634 = vld [vmem:[#allocation15 + $0x4d0] sm:$0xff]
    %v2635 = vld [vmem:[#allocation15 + $0x4d8] sm:$0xff]
    %v2636 = vld [vmem:[#allocation15 + $0x4e0] sm:$0xff]
    %v2637 = vld [vmem:[#allocation15 + $0x4e8] sm:$0xf]
    %v2638 = vld [vmem:[#allocation15 + $0x4ec] sm:$0xff]
    %v2639 = vld [vmem:[#allocation15 + $0x4f4] sm:$0xff]
    %v2640 = vld [vmem:[#allocation15 + $0x4fc] sm:$0xff]
    %v2641 = vld [vmem:[#allocation15 + $0x504] sm:$0xf]
    %v2642 = vld [vmem:[#allocation15 + $0x508] sm:$0xff]
    %v2643 = vld [vmem:[#allocation15 + $0x510] sm:$0xff]
    %v2644 = vld [vmem:[#allocation15 + $0x518] sm:$0xff]
    %v2645 = vld [vmem:[#allocation15 + $0x520] sm:$0xf]
    %v2646 = vld [vmem:[#allocation15 + $0x524] sm:$0xff]
    %v2647 = vld [vmem:[#allocation15 + $0x52c] sm:$0xff]
    %v2648 = vld [vmem:[#allocation15 + $0x534] sm:$0xff]
    %v2649 = vld [vmem:[#allocation15 + $0x53c] sm:$0xf]
    %v2650 = vld [vmem:[#allocation15 + $0x540] sm:$0xff]
    %v2651 = vld [vmem:[#allocation15 + $0x548] sm:$0xff]
    %v2652 = vld [vmem:[#allocation15 + $0x550] sm:$0xff]
    %v2653 = vld [vmem:[#allocation15 + $0x558] sm:$0xf]
    %v2654 = vld [vmem:[#allocation15 + $0x55c] sm:$0xff]
    %v2655 = vld [vmem:[#allocation15 + $0x564] sm:$0xff]
    %v2656 = vld [vmem:[#allocation15 + $0x56c] sm:$0xff]
    %v2657 = vld [vmem:[#allocation15 + $0x574] sm:$0xf]
    %v2658 = vld [vmem:[#allocation15 + $0x578] sm:$0xff]
    %v2659 = vld [vmem:[#allocation15 + $0x580] sm:$0xff]
    %v2660 = vld [vmem:[#allocation15 + $0x588] sm:$0xff]
    %v2661 = vld [vmem:[#allocation15 + $0x590] sm:$0xf]
    %v2662 = vld [vmem:[#allocation15 + $0x594] sm:$0xff]
    %v2663 = vld [vmem:[#allocation15 + $0x59c] sm:$0xff]
    %v2664 = vld [vmem:[#allocation15 + $0x5a4] sm:$0xff]
    %v2665 = vld [vmem:[#allocation15 + $0x5ac] sm:$0xf]
    %v2666 = vld [vmem:[#allocation15 + $0x5b0] sm:$0xff]
    %v2667 = vld [vmem:[#allocation15 + $0x5b8] sm:$0xff]
    %v2668 = vld [vmem:[#allocation15 + $0x5c0] sm:$0xff]
    %v2669 = vld [vmem:[#allocation15 + $0x5c8] sm:$0xf]
    %v2670 = vld [vmem:[#allocation15 + $0x5cc] sm:$0xff]
    %v2671 = vld [vmem:[#allocation15 + $0x5d4] sm:$0xff]
    %v2672 = vld [vmem:[#allocation15 + $0x5dc] sm:$0xff]
    %v2673 = vld [vmem:[#allocation15 + $0x5e4] sm:$0xf]
    %v2674 = vld [vmem:[#allocation15 + $0x5e8] sm:$0xff]
    %v2675 = vld [vmem:[#allocation15 + $0x5f0] sm:$0xff]
    %v2676 = vld [vmem:[#allocation15 + $0x5f8] sm:$0xff]
    %v2677 = vld [vmem:[#allocation15 + $0x600] sm:$0xf]
    %v2678 = vld [vmem:[#allocation15 + $0x604] sm:$0xff]
    %v2679 = vld [vmem:[#allocation15 + $0x60c] sm:$0xff]
    %v2680 = vld [vmem:[#allocation15 + $0x614] sm:$0xff]
    %v2681 = vld [vmem:[#allocation15 + $0x61c] sm:$0xf]
    %v2682 = vld [vmem:[#allocation15 + $0x620] sm:$0xff]
    %v2683 = vld [vmem:[#allocation15 + $0x628] sm:$0xff]
    %v2684 = vld [vmem:[#allocation15 + $0x630] sm:$0xff]
    %v2685 = vld [vmem:[#allocation15 + $0x638] sm:$0xf]
    %v2686 = vld [vmem:[#allocation15 + $0x63c] sm:$0xff]
    %v2687 = vld [vmem:[#allocation15 + $0x644] sm:$0xff]
    %v2688 = vld [vmem:[#allocation15 + $0x64c] sm:$0xff]
    %v2689 = vld [vmem:[#allocation15 + $0x654] sm:$0xf]
    %v2690 = vld [vmem:[#allocation15 + $0x658] sm:$0xff]
    %v2691 = vld [vmem:[#allocation15 + $0x660] sm:$0xff]
    %v2692 = vld [vmem:[#allocation15 + $0x668] sm:$0xff]
    %v2693 = vld [vmem:[#allocation15 + $0x670] sm:$0xf]
    %v2694 = vld [vmem:[#allocation15 + $0x674] sm:$0xff]
    %v2695 = vld [vmem:[#allocation15 + $0x67c] sm:$0xff]
    %v2696 = vld [vmem:[#allocation15 + $0x684] sm:$0xff]
    %v2697 = vld [vmem:[#allocation15 + $0x68c] sm:$0xf]
    %v2698 = vld [vmem:[#allocation15 + $0x690] sm:$0xff]
    %v2699 = vld [vmem:[#allocation15 + $0x698] sm:$0xff]
    %v2700 = vld [vmem:[#allocation15 + $0x6a0] sm:$0xff]
    %v2701 = vld [vmem:[#allocation15 + $0x6a8] sm:$0xf]
    %v2702 = vld [vmem:[#allocation15 + $0x6ac] sm:$0xff]
    %v2703 = vld [vmem:[#allocation15 + $0x6b4] sm:$0xff]
    %v2704 = vld [vmem:[#allocation15 + $0x6bc] sm:$0xff]
    %v2705 = vld [vmem:[#allocation15 + $0x6c4] sm:$0xf]
    %v2706 = vld [vmem:[#allocation15 + $0x6c8] sm:$0xff]
    %v2707 = vld [vmem:[#allocation15 + $0x6d0] sm:$0xff]
    %v2708 = vld [vmem:[#allocation15 + $0x6d8] sm:$0xff]
    %v2709 = vld [vmem:[#allocation15 + $0x6e0] sm:$0xf]
    %v2710 = vld [vmem:[#allocation15 + $0x6e4] sm:$0xff]
    %v2711 = vld [vmem:[#allocation15 + $0x6ec] sm:$0xff]
    %v2712 = vld [vmem:[#allocation15 + $0x6f4] sm:$0xff]
    %v2713 = vld [vmem:[#allocation15 + $0x6fc] sm:$0xf]
    %v2714 = vld [vmem:[%s9] sm:$0xff]
    %v2716 = vperm.slane %v2714, 0
    %v2717 = vperm.slane %v2714, 1
    %v2718 = vperm.slane %v2714, 2
    %v2719 = vperm.slane %v2714, 3
    %v2720 = vperm.slane %v2714, 4
    %v2721 = vperm.slane %v2714, 5
    %v2722 = vperm.slane %v2714, 6
    %v2986 = vunpack.c.l.b16 %v2458
    %v2987 = vunpack.c.h.b16 %v2458
    %v2988 = vunpack.c.l.b16 %v2459
    %v2989 = vunpack.c.h.b16 %v2459
    %v2990 = vunpack.c.l.b16 %v2460
    %v2991 = vunpack.c.h.b16 %v2460
    %v2992 = vunpack.c.l.b16 %v2461
    %v2993 = vunpack.c.l.b16 %v2462
    %v2994 = vunpack.c.h.b16 %v2462
    %v2995 = vunpack.c.l.b16 %v2463
    %v2996 = vunpack.c.h.b16 %v2463
    %v2997 = vunpack.c.l.b16 %v2464
    %v2998 = vunpack.c.h.b16 %v2464
    %v2999 = vunpack.c.l.b16 %v2465
    %v3000 = vunpack.c.l.b16 %v2466
    %v3001 = vunpack.c.h.b16 %v2466
    %v3002 = vunpack.c.l.b16 %v2467
    %v3003 = vunpack.c.h.b16 %v2467
    %v3004 = vunpack.c.l.b16 %v2468
    %v3005 = vunpack.c.h.b16 %v2468
    %v3006 = vunpack.c.l.b16 %v2469
    %v3007 = vunpack.c.l.b16 %v2470
    %v3008 = vunpack.c.h.b16 %v2470
    %v3009 = vunpack.c.l.b16 %v2471
    %v3010 = vunpack.c.h.b16 %v2471
    %v3011 = vunpack.c.l.b16 %v2472
    %v3012 = vunpack.c.h.b16 %v2472
    %v3013 = vunpack.c.l.b16 %v2473
    %v3014 = vunpack.c.l.b16 %v2474
    %v3015 = vunpack.c.h.b16 %v2474
    %v3016 = vunpack.c.l.b16 %v2475
    %v3017 = vunpack.c.h.b16 %v2475
    %v3018 = vunpack.c.l.b16 %v2476
    %v3019 = vunpack.c.h.b16 %v2476
    %v3020 = vunpack.c.l.b16 %v2477
    %v3021 = vunpack.c.l.b16 %v2478
    %v3022 = vunpack.c.h.b16 %v2478
    %v3023 = vunpack.c.l.b16 %v2479
    %v3024 = vunpack.c.h.b16 %v2479
    %v3025 = vunpack.c.l.b16 %v2480
    %v3026 = vunpack.c.h.b16 %v2480
    %v3027 = vunpack.c.l.b16 %v2481
    %v3028 = vunpack.c.l.b16 %v2482
    %v3029 = vunpack.c.h.b16 %v2482
    %v3030 = vunpack.c.l.b16 %v2483
    %v3031 = vunpack.c.h.b16 %v2483
    %v3032 = vunpack.c.l.b16 %v2484
    %v3033 = vunpack.c.h.b16 %v2484
    %v3034 = vunpack.c.l.b16 %v2485
    %v3035 = vunpack.c.l.b16 %v2486
    %v3036 = vunpack.c.h.b16 %v2486
    %v3037 = vunpack.c.l.b16 %v2487
    %v3038 = vunpack.c.h.b16 %v2487
    %v3039 = vunpack.c.l.b16 %v2488
    %v3040 = vunpack.c.h.b16 %v2488
    %v3041 = vunpack.c.l.b16 %v2489
    %v3042 = vunpack.c.l.b16 %v2490
    %v3043 = vunpack.c.h.b16 %v2490
    %v3044 = vunpack.c.l.b16 %v2491
    %v3045 = vunpack.c.h.b16 %v2491
    %v3046 = vunpack.c.l.b16 %v2492
    %v3047 = vunpack.c.h.b16 %v2492
    %v3048 = vunpack.c.l.b16 %v2493
    %v3049 = vunpack.c.l.b16 %v2494
    %v3050 = vunpack.c.h.b16 %v2494
    %v3051 = vunpack.c.l.b16 %v2495
    %v3052 = vunpack.c.h.b16 %v2495
    %v3053 = vunpack.c.l.b16 %v2496
    %v3054 = vunpack.c.h.b16 %v2496
    %v3055 = vunpack.c.l.b16 %v2497
    %v3056 = vunpack.c.l.b16 %v2498
    %v3057 = vunpack.c.h.b16 %v2498
    %v3058 = vunpack.c.l.b16 %v2499
    %v3059 = vunpack.c.h.b16 %v2499
    %v3060 = vunpack.c.l.b16 %v2500
    %v3061 = vunpack.c.h.b16 %v2500
    %v3062 = vunpack.c.l.b16 %v2501
    %v3063 = vunpack.c.l.b16 %v2502
    %v3064 = vunpack.c.h.b16 %v2502
    %v3065 = vunpack.c.l.b16 %v2503
    %v3066 = vunpack.c.h.b16 %v2503
    %v3067 = vunpack.c.l.b16 %v2504
    %v3068 = vunpack.c.h.b16 %v2504
    %v3069 = vunpack.c.l.b16 %v2505
    %v3070 = vunpack.c.l.b16 %v2506
    %v3071 = vunpack.c.h.b16 %v2506
    %v3072 = vunpack.c.l.b16 %v2507
    %v3073 = vunpack.c.h.b16 %v2507
    %v3074 = vunpack.c.l.b16 %v2508
    %v3075 = vunpack.c.h.b16 %v2508
    %v3076 = vunpack.c.l.b16 %v2509
    %v3077 = vunpack.c.l.b16 %v2510
    %v3078 = vunpack.c.h.b16 %v2510
    %v3079 = vunpack.c.l.b16 %v2511
    %v3080 = vunpack.c.h.b16 %v2511
    %v3081 = vunpack.c.l.b16 %v2512
    %v3082 = vunpack.c.h.b16 %v2512
    %v3083 = vunpack.c.l.b16 %v2513
    %v3084 = vunpack.c.l.b16 %v2514
    %v3085 = vunpack.c.h.b16 %v2514
    %v3086 = vunpack.c.l.b16 %v2515
    %v3087 = vunpack.c.h.b16 %v2515
    %v3088 = vunpack.c.l.b16 %v2516
    %v3089 = vunpack.c.h.b16 %v2516
    %v3090 = vunpack.c.l.b16 %v2517
    %v3091 = vunpack.c.l.b16 %v2518
    %v3092 = vunpack.c.h.b16 %v2518
    %v3093 = vunpack.c.l.b16 %v2519
    %v3094 = vunpack.c.h.b16 %v2519
    %v3095 = vunpack.c.l.b16 %v2520
    %v3096 = vunpack.c.h.b16 %v2520
    %v3097 = vunpack.c.l.b16 %v2521
    %v3098 = vunpack.c.l.b16 %v2522
    %v3099 = vunpack.c.h.b16 %v2522
    %v3100 = vunpack.c.l.b16 %v2523
    %v3101 = vunpack.c.h.b16 %v2523
    %v3102 = vunpack.c.l.b16 %v2524
    %v3103 = vunpack.c.h.b16 %v2524
    %v3104 = vunpack.c.l.b16 %v2525
    %v3105 = vunpack.c.l.b16 %v2526
    %v3106 = vunpack.c.h.b16 %v2526
    %v3107 = vunpack.c.l.b16 %v2527
    %v3108 = vunpack.c.h.b16 %v2527
    %v3109 = vunpack.c.l.b16 %v2528
    %v3110 = vunpack.c.h.b16 %v2528
    %v3111 = vunpack.c.l.b16 %v2529
    %v3112 = vunpack.c.l.b16 %v2530
    %v3113 = vunpack.c.h.b16 %v2530
    %v3114 = vunpack.c.l.b16 %v2531
    %v3115 = vunpack.c.h.b16 %v2531
    %v3116 = vunpack.c.l.b16 %v2532
    %v3117 = vunpack.c.h.b16 %v2532
    %v3118 = vunpack.c.l.b16 %v2533
    %v3119 = vunpack.c.l.b16 %v2534
    %v3120 = vunpack.c.h.b16 %v2534
    %v3121 = vunpack.c.l.b16 %v2535
    %v3122 = vunpack.c.h.b16 %v2535
    %v3123 = vunpack.c.l.b16 %v2536
    %v3124 = vunpack.c.h.b16 %v2536
    %v3125 = vunpack.c.l.b16 %v2537
    %v3126 = vunpack.c.l.b16 %v2538
    %v3127 = vunpack.c.h.b16 %v2538
    %v3128 = vunpack.c.l.b16 %v2539
    %v3129 = vunpack.c.h.b16 %v2539
    %v3130 = vunpack.c.l.b16 %v2540
    %v3131 = vunpack.c.h.b16 %v2540
    %v3132 = vunpack.c.l.b16 %v2541
    %v3133 = vunpack.c.l.b16 %v2542
    %v3134 = vunpack.c.h.b16 %v2542
    %v3135 = vunpack.c.l.b16 %v2543
    %v3136 = vunpack.c.h.b16 %v2543
    %v3137 = vunpack.c.l.b16 %v2544
    %v3138 = vunpack.c.h.b16 %v2544
    %v3139 = vunpack.c.l.b16 %v2545
    %v3140 = vunpack.c.l.b16 %v2546
    %v3141 = vunpack.c.h.b16 %v2546
    %v3142 = vunpack.c.l.b16 %v2547
    %v3143 = vunpack.c.h.b16 %v2547
    %v3144 = vunpack.c.l.b16 %v2548
    %v3145 = vunpack.c.h.b16 %v2548
    %v3146 = vunpack.c.l.b16 %v2549
    %v3147 = vunpack.c.l.b16 %v2550
    %v3148 = vunpack.c.h.b16 %v2550
    %v3149 = vunpack.c.l.b16 %v2551
    %v3150 = vunpack.c.h.b16 %v2551
    %v3151 = vunpack.c.l.b16 %v2552
    %v3152 = vunpack.c.h.b16 %v2552
    %v3153 = vunpack.c.l.b16 %v2553
    %v3154 = vunpack.c.l.b16 %v2554
    %v3155 = vunpack.c.h.b16 %v2554
    %v3156 = vunpack.c.l.b16 %v2555
    %v3157 = vunpack.c.h.b16 %v2555
    %v3158 = vunpack.c.l.b16 %v2556
    %v3159 = vunpack.c.h.b16 %v2556
    %v3160 = vunpack.c.l.b16 %v2557
    %v3161 = vunpack.c.l.b16 %v2558
    %v3162 = vunpack.c.h.b16 %v2558
    %v3163 = vunpack.c.l.b16 %v2559
    %v3164 = vunpack.c.h.b16 %v2559
    %v3165 = vunpack.c.l.b16 %v2560
    %v3166 = vunpack.c.h.b16 %v2560
    %v3167 = vunpack.c.l.b16 %v2561
    %v3168 = vunpack.c.l.b16 %v2562
    %v3169 = vunpack.c.h.b16 %v2562
    %v3170 = vunpack.c.l.b16 %v2563
    %v3171 = vunpack.c.h.b16 %v2563
    %v3172 = vunpack.c.l.b16 %v2564
    %v3173 = vunpack.c.h.b16 %v2564
    %v3174 = vunpack.c.l.b16 %v2565
    %v3175 = vunpack.c.l.b16 %v2566
    %v3176 = vunpack.c.h.b16 %v2566
    %v3177 = vunpack.c.l.b16 %v2567
    %v3178 = vunpack.c.h.b16 %v2567
    %v3179 = vunpack.c.l.b16 %v2568
    %v3180 = vunpack.c.h.b16 %v2568
    %v3181 = vunpack.c.l.b16 %v2569
    %v3182 = vunpack.c.l.b16 %v2570
    %v3183 = vunpack.c.h.b16 %v2570
    %v3184 = vunpack.c.l.b16 %v2571
    %v3185 = vunpack.c.h.b16 %v2571
    %v3186 = vunpack.c.l.b16 %v2572
    %v3187 = vunpack.c.h.b16 %v2572
    %v3188 = vunpack.c.l.b16 %v2573
    %v3189 = vunpack.c.l.b16 %v2574
    %v3190 = vunpack.c.h.b16 %v2574
    %v3191 = vunpack.c.l.b16 %v2575
    %v3192 = vunpack.c.h.b16 %v2575
    %v3193 = vunpack.c.l.b16 %v2576
    %v3194 = vunpack.c.h.b16 %v2576
    %v3195 = vunpack.c.l.b16 %v2577
    %v3196 = vunpack.c.l.b16 %v2578
    %v3197 = vunpack.c.h.b16 %v2578
    %v3198 = vunpack.c.l.b16 %v2579
    %v3199 = vunpack.c.h.b16 %v2579
    %v3200 = vunpack.c.l.b16 %v2580
    %v3201 = vunpack.c.h.b16 %v2580
    %v3202 = vunpack.c.l.b16 %v2581
    %v3203 = vunpack.c.l.b16 %v2582
    %v3204 = vunpack.c.h.b16 %v2582
    %v3205 = vunpack.c.l.b16 %v2583
    %v3206 = vunpack.c.h.b16 %v2583
    %v3207 = vunpack.c.l.b16 %v2584
    %v3208 = vunpack.c.h.b16 %v2584
    %v3209 = vunpack.c.l.b16 %v2585
    %v3210 = vunpack.c.l.b16 %v2586
    %v3211 = vunpack.c.h.b16 %v2586
    %v3212 = vunpack.c.l.b16 %v2587
    %v3213 = vunpack.c.h.b16 %v2587
    %v3214 = vunpack.c.l.b16 %v2588
    %v3215 = vunpack.c.h.b16 %v2588
    %v3216 = vunpack.c.l.b16 %v2589
    %v3217 = vunpack.c.l.b16 %v2590
    %v3218 = vunpack.c.h.b16 %v2590
    %v3219 = vunpack.c.l.b16 %v2591
    %v3220 = vunpack.c.h.b16 %v2591
    %v3221 = vunpack.c.l.b16 %v2592
    %v3222 = vunpack.c.h.b16 %v2592
    %v3223 = vunpack.c.l.b16 %v2593
    %v3224 = vunpack.c.l.b16 %v2594
    %v3225 = vunpack.c.h.b16 %v2594
    %v3226 = vunpack.c.l.b16 %v2595
    %v3227 = vunpack.c.h.b16 %v2595
    %v3228 = vunpack.c.l.b16 %v2596
    %v3229 = vunpack.c.h.b16 %v2596
    %v3230 = vunpack.c.l.b16 %v2597
    %v3231 = vunpack.c.l.b16 %v2598
    %v3232 = vunpack.c.h.b16 %v2598
    %v3233 = vunpack.c.l.b16 %v2599
    %v3234 = vunpack.c.h.b16 %v2599
    %v3235 = vunpack.c.l.b16 %v2600
    %v3236 = vunpack.c.h.b16 %v2600
    %v3237 = vunpack.c.l.b16 %v2601
    %v3238 = vunpack.c.l.b16 %v2602
    %v3239 = vunpack.c.h.b16 %v2602
    %v3240 = vunpack.c.l.b16 %v2603
    %v3241 = vunpack.c.h.b16 %v2603
    %v3242 = vunpack.c.l.b16 %v2604
    %v3243 = vunpack.c.h.b16 %v2604
    %v3244 = vunpack.c.l.b16 %v2605
    %v3245 = vunpack.c.l.b16 %v2606
    %v3246 = vunpack.c.h.b16 %v2606
    %v3247 = vunpack.c.l.b16 %v2607
    %v3248 = vunpack.c.h.b16 %v2607
    %v3249 = vunpack.c.l.b16 %v2608
    %v3250 = vunpack.c.h.b16 %v2608
    %v3251 = vunpack.c.l.b16 %v2609
    %v3252 = vunpack.c.l.b16 %v2610
    %v3253 = vunpack.c.h.b16 %v2610
    %v3254 = vunpack.c.l.b16 %v2611
    %v3255 = vunpack.c.h.b16 %v2611
    %v3256 = vunpack.c.l.b16 %v2612
    %v3257 = vunpack.c.h.b16 %v2612
    %v3258 = vunpack.c.l.b16 %v2613
    %v3259 = vunpack.c.l.b16 %v2614
    %v3260 = vunpack.c.h.b16 %v2614
    %v3261 = vunpack.c.l.b16 %v2615
    %v3262 = vunpack.c.h.b16 %v2615
    %v3263 = vunpack.c.l.b16 %v2616
    %v3264 = vunpack.c.h.b16 %v2616
    %v3265 = vunpack.c.l.b16 %v2617
    %v3266 = vunpack.c.l.b16 %v2618
    %v3267 = vunpack.c.h.b16 %v2618
    %v3268 = vunpack.c.l.b16 %v2619
    %v3269 = vunpack.c.h.b16 %v2619
    %v3270 = vunpack.c.l.b16 %v2620
    %v3271 = vunpack.c.h.b16 %v2620
    %v3272 = vunpack.c.l.b16 %v2621
    %v3273 = vunpack.c.l.b16 %v2622
    %v3274 = vunpack.c.h.b16 %v2622
    %v3275 = vunpack.c.l.b16 %v2623
    %v3276 = vunpack.c.h.b16 %v2623
    %v3277 = vunpack.c.l.b16 %v2624
    %v3278 = vunpack.c.h.b16 %v2624
    %v3279 = vunpack.c.l.b16 %v2625
    %v3280 = vunpack.c.l.b16 %v2626
    %v3281 = vunpack.c.h.b16 %v2626
    %v3282 = vunpack.c.l.b16 %v2627
    %v3283 = vunpack.c.h.b16 %v2627
    %v3284 = vunpack.c.l.b16 %v2628
    %v3285 = vunpack.c.h.b16 %v2628
    %v3286 = vunpack.c.l.b16 %v2629
    %v3287 = vunpack.c.l.b16 %v2630
    %v3288 = vunpack.c.h.b16 %v2630
    %v3289 = vunpack.c.l.b16 %v2631
    %v3290 = vunpack.c.h.b16 %v2631
    %v3291 = vunpack.c.l.b16 %v2632
    %v3292 = vunpack.c.h.b16 %v2632
    %v3293 = vunpack.c.l.b16 %v2633
    %v3294 = vunpack.c.l.b16 %v2634
    %v3295 = vunpack.c.h.b16 %v2634
    %v3296 = vunpack.c.l.b16 %v2635
    %v3297 = vunpack.c.h.b16 %v2635
    %v3298 = vunpack.c.l.b16 %v2636
    %v3299 = vunpack.c.h.b16 %v2636
    %v3300 = vunpack.c.l.b16 %v2637
    %v3301 = vunpack.c.l.b16 %v2638
    %v3302 = vunpack.c.h.b16 %v2638
    %v3303 = vunpack.c.l.b16 %v2639
    %v3304 = vunpack.c.h.b16 %v2639
    %v3305 = vunpack.c.l.b16 %v2640
    %v3306 = vunpack.c.h.b16 %v2640
    %v3307 = vunpack.c.l.b16 %v2641
    %v3308 = vunpack.c.l.b16 %v2642
    %v3309 = vunpack.c.h.b16 %v2642
    %v3310 = vunpack.c.l.b16 %v2643
    %v3311 = vunpack.c.h.b16 %v2643
    %v3312 = vunpack.c.l.b16 %v2644
    %v3313 = vunpack.c.h.b16 %v2644
    %v3314 = vunpack.c.l.b16 %v2645
    %v3315 = vunpack.c.l.b16 %v2646
    %v3316 = vunpack.c.h.b16 %v2646
    %v3317 = vunpack.c.l.b16 %v2647
    %v3318 = vunpack.c.h.b16 %v2647
    %v3319 = vunpack.c.l.b16 %v2648
    %v3320 = vunpack.c.h.b16 %v2648
    %v3321 = vunpack.c.l.b16 %v2649
    %v3322 = vunpack.c.l.b16 %v2650
    %v3323 = vunpack.c.h.b16 %v2650
    %v3324 = vunpack.c.l.b16 %v2651
    %v3325 = vunpack.c.h.b16 %v2651
    %v3326 = vunpack.c.l.b16 %v2652
    %v3327 = vunpack.c.h.b16 %v2652
    %v3328 = vunpack.c.l.b16 %v2653
    %v3329 = vunpack.c.l.b16 %v2654
    %v3330 = vunpack.c.h.b16 %v2654
    %v3331 = vunpack.c.l.b16 %v2655
    %v3332 = vunpack.c.h.b16 %v2655
    %v3333 = vunpack.c.l.b16 %v2656
    %v3334 = vunpack.c.h.b16 %v2656
    %v3335 = vunpack.c.l.b16 %v2657
    %v3336 = vunpack.c.l.b16 %v2658
    %v3337 = vunpack.c.h.b16 %v2658
    %v3338 = vunpack.c.l.b16 %v2659
    %v3339 = vunpack.c.h.b16 %v2659
    %v3340 = vunpack.c.l.b16 %v2660
    %v3341 = vunpack.c.h.b16 %v2660
    %v3342 = vunpack.c.l.b16 %v2661
    %v3343 = vunpack.c.l.b16 %v2662
    %v3344 = vunpack.c.h.b16 %v2662
    %v3345 = vunpack.c.l.b16 %v2663
    %v3346 = vunpack.c.h.b16 %v2663
    %v3347 = vunpack.c.l.b16 %v2664
    %v3348 = vunpack.c.h.b16 %v2664
    %v3349 = vunpack.c.l.b16 %v2665
    %v3350 = vunpack.c.l.b16 %v2666
    %v3351 = vunpack.c.h.b16 %v2666
    %v3352 = vunpack.c.l.b16 %v2667
    %v3353 = vunpack.c.h.b16 %v2667
    %v3354 = vunpack.c.l.b16 %v2668
    %v3355 = vunpack.c.h.b16 %v2668
    %v3356 = vunpack.c.l.b16 %v2669
    %v3357 = vunpack.c.l.b16 %v2670
    %v3358 = vunpack.c.h.b16 %v2670
    %v3359 = vunpack.c.l.b16 %v2671
    %v3360 = vunpack.c.h.b16 %v2671
    %v3361 = vunpack.c.l.b16 %v2672
    %v3362 = vunpack.c.h.b16 %v2672
    %v3363 = vunpack.c.l.b16 %v2673
    %v3364 = vunpack.c.l.b16 %v2674
    %v3365 = vunpack.c.h.b16 %v2674
    %v3366 = vunpack.c.l.b16 %v2675
    %v3367 = vunpack.c.h.b16 %v2675
    %v3368 = vunpack.c.l.b16 %v2676
    %v3369 = vunpack.c.h.b16 %v2676
    %v3370 = vunpack.c.l.b16 %v2677
    %v3371 = vunpack.c.l.b16 %v2678
    %v3372 = vunpack.c.h.b16 %v2678
    %v3373 = vunpack.c.l.b16 %v2679
    %v3374 = vunpack.c.h.b16 %v2679
    %v3375 = vunpack.c.l.b16 %v2680
    %v3376 = vunpack.c.h.b16 %v2680
    %v3377 = vunpack.c.l.b16 %v2681
    %v3378 = vunpack.c.l.b16 %v2682
    %v3379 = vunpack.c.h.b16 %v2682
    %v3380 = vunpack.c.l.b16 %v2683
    %v3381 = vunpack.c.h.b16 %v2683
    %v3382 = vunpack.c.l.b16 %v2684
    %v3383 = vunpack.c.h.b16 %v2684
    %v3384 = vunpack.c.l.b16 %v2685
    %v3385 = vunpack.c.l.b16 %v2686
    %v3386 = vunpack.c.h.b16 %v2686
    %v3387 = vunpack.c.l.b16 %v2687
    %v3388 = vunpack.c.h.b16 %v2687
    %v3389 = vunpack.c.l.b16 %v2688
    %v3390 = vunpack.c.h.b16 %v2688
    %v3391 = vunpack.c.l.b16 %v2689
    %v3392 = vunpack.c.l.b16 %v2690
    %v3393 = vunpack.c.h.b16 %v2690
    %v3394 = vunpack.c.l.b16 %v2691
    %v3395 = vunpack.c.h.b16 %v2691
    %v3396 = vunpack.c.l.b16 %v2692
    %v3397 = vunpack.c.h.b16 %v2692
    %v3398 = vunpack.c.l.b16 %v2693
    %v3399 = vunpack.c.l.b16 %v2694
    %v3400 = vunpack.c.h.b16 %v2694
    %v3401 = vunpack.c.l.b16 %v2695
    %v3402 = vunpack.c.h.b16 %v2695
    %v3403 = vunpack.c.l.b16 %v2696
    %v3404 = vunpack.c.h.b16 %v2696
    %v3405 = vunpack.c.l.b16 %v2697
    %v3406 = vunpack.c.l.b16 %v2698
    %v3407 = vunpack.c.h.b16 %v2698
    %v3408 = vunpack.c.l.b16 %v2699
    %v3409 = vunpack.c.h.b16 %v2699
    %v3410 = vunpack.c.l.b16 %v2700
    %v3411 = vunpack.c.h.b16 %v2700
    %v3412 = vunpack.c.l.b16 %v2701
    %v3413 = vunpack.c.l.b16 %v2702
    %v3414 = vunpack.c.h.b16 %v2702
    %v3415 = vunpack.c.l.b16 %v2703
    %v3416 = vunpack.c.h.b16 %v2703
    %v3417 = vunpack.c.l.b16 %v2704
    %v3418 = vunpack.c.h.b16 %v2704
    %v3419 = vunpack.c.l.b16 %v2705
    %v3420 = vunpack.c.l.b16 %v2706
    %v3421 = vunpack.c.h.b16 %v2706
    %v3422 = vunpack.c.l.b16 %v2707
    %v3423 = vunpack.c.h.b16 %v2707
    %v3424 = vunpack.c.l.b16 %v2708
    %v3425 = vunpack.c.h.b16 %v2708
    %v3426 = vunpack.c.l.b16 %v2709
    %v3427 = vunpack.c.l.b16 %v2710
    %v3428 = vunpack.c.h.b16 %v2710
    %v3429 = vunpack.c.l.b16 %v2711
    %v3430 = vunpack.c.h.b16 %v2711
    %v3431 = vunpack.c.l.b16 %v2712
    %v3432 = vunpack.c.h.b16 %v2712
    %v3433 = vunpack.c.l.b16 %v2713
    %v3434 = vpack.c.b16 %v2993, %v2986
    %v3435 = vpack.c.b16 %v2994, %v2987
    %v3436 = vpack.c.b16 %v2995, %v2988
    %v3437 = vpack.c.b16 %v2996, %v2989
    %v3438 = vpack.c.b16 %v2997, %v2990
    %v3439 = vpack.c.b16 %v2998, %v2991
    %v3440 = vpack.c.b16 %v2999, %v2992
    %v3441 = vpack.c.b16 %v3007, %v3000
    %v3442 = vpack.c.b16 %v3008, %v3001
    %v3443 = vpack.c.b16 %v3009, %v3002
    %v3444 = vpack.c.b16 %v3010, %v3003
    %v3445 = vpack.c.b16 %v3011, %v3004
    %v3446 = vpack.c.b16 %v3012, %v3005
    %v3447 = vpack.c.b16 %v3013, %v3006
    %v3448 = vpack.c.b16 %v3021, %v3014
    %v3449 = vpack.c.b16 %v3022, %v3015
    %v3450 = vpack.c.b16 %v3023, %v3016
    %v3451 = vpack.c.b16 %v3024, %v3017
    %v3452 = vpack.c.b16 %v3025, %v3018
    %v3453 = vpack.c.b16 %v3026, %v3019
    %v3454 = vpack.c.b16 %v3027, %v3020
    %v3455 = vpack.c.b16 %v3035, %v3028
    %v3456 = vpack.c.b16 %v3036, %v3029
    %v3457 = vpack.c.b16 %v3037, %v3030
    %v3458 = vpack.c.b16 %v3038, %v3031
    %v3459 = vpack.c.b16 %v3039, %v3032
    %v3460 = vpack.c.b16 %v3040, %v3033
    %v3461 = vpack.c.b16 %v3041, %v3034
    %v3462 = vpack.c.b16 %v3049, %v3042
    %v3463 = vpack.c.b16 %v3050, %v3043
    %v3464 = vpack.c.b16 %v3051, %v3044
    %v3465 = vpack.c.b16 %v3052, %v3045
    %v3466 = vpack.c.b16 %v3053, %v3046
    %v3467 = vpack.c.b16 %v3054, %v3047
    %v3468 = vpack.c.b16 %v3055, %v3048
    %v3469 = vpack.c.b16 %v3063, %v3056
    %v3470 = vpack.c.b16 %v3064, %v3057
    %v3471 = vpack.c.b16 %v3065, %v3058
    %v3472 = vpack.c.b16 %v3066, %v3059
    %v3473 = vpack.c.b16 %v3067, %v3060
    %v3474 = vpack.c.b16 %v3068, %v3061
    %v3475 = vpack.c.b16 %v3069, %v3062
    %v3476 = vpack.c.b16 %v3077, %v3070
    %v3477 = vpack.c.b16 %v3078, %v3071
    %v3478 = vpack.c.b16 %v3079, %v3072
    %v3479 = vpack.c.b16 %v3080, %v3073
    %v3480 = vpack.c.b16 %v3081, %v3074
    %v3481 = vpack.c.b16 %v3082, %v3075
    %v3482 = vpack.c.b16 %v3083, %v3076
    %v3483 = vpack.c.b16 %v3091, %v3084
    %v3484 = vpack.c.b16 %v3092, %v3085
    %v3485 = vpack.c.b16 %v3093, %v3086
    %v3486 = vpack.c.b16 %v3094, %v3087
    %v3487 = vpack.c.b16 %v3095, %v3088
    %v3488 = vpack.c.b16 %v3096, %v3089
    %v3489 = vpack.c.b16 %v3097, %v3090
    %v3490 = vpack.c.b16 %v3105, %v3098
    %v3491 = vpack.c.b16 %v3106, %v3099
    %v3492 = vpack.c.b16 %v3107, %v3100
    %v3493 = vpack.c.b16 %v3108, %v3101
    %v3494 = vpack.c.b16 %v3109, %v3102
    %v3495 = vpack.c.b16 %v3110, %v3103
    %v3496 = vpack.c.b16 %v3111, %v3104
    %v3497 = vpack.c.b16 %v3119, %v3112
    %v3498 = vpack.c.b16 %v3120, %v3113
    %v3499 = vpack.c.b16 %v3121, %v3114
    %v3500 = vpack.c.b16 %v3122, %v3115
    %v3501 = vpack.c.b16 %v3123, %v3116
    %v3502 = vpack.c.b16 %v3124, %v3117
    %v3503 = vpack.c.b16 %v3125, %v3118
    %v3504 = vpack.c.b16 %v3133, %v3126
    %v3505 = vpack.c.b16 %v3134, %v3127
    %v3506 = vpack.c.b16 %v3135, %v3128
    %v3507 = vpack.c.b16 %v3136, %v3129
    %v3508 = vpack.c.b16 %v3137, %v3130
    %v3509 = vpack.c.b16 %v3138, %v3131
    %v3510 = vpack.c.b16 %v3139, %v3132
    %v3511 = vpack.c.b16 %v3147, %v3140
    %v3512 = vpack.c.b16 %v3148, %v3141
    %v3513 = vpack.c.b16 %v3149, %v3142
    %v3514 = vpack.c.b16 %v3150, %v3143
    %v3515 = vpack.c.b16 %v3151, %v3144
    %v3516 = vpack.c.b16 %v3152, %v3145
    %v3517 = vpack.c.b16 %v3153, %v3146
    %v3518 = vpack.c.b16 %v3161, %v3154
    %v3519 = vpack.c.b16 %v3162, %v3155
    %v3520 = vpack.c.b16 %v3163, %v3156
    %v3521 = vpack.c.b16 %v3164, %v3157
    %v3522 = vpack.c.b16 %v3165, %v3158
    %v3523 = vpack.c.b16 %v3166, %v3159
    %v3524 = vpack.c.b16 %v3167, %v3160
    %v3525 = vpack.c.b16 %v3175, %v3168
    %v3526 = vpack.c.b16 %v3176, %v3169
    %v3527 = vpack.c.b16 %v3177, %v3170
    %v3528 = vpack.c.b16 %v3178, %v3171
    %v3529 = vpack.c.b16 %v3179, %v3172
    %v3530 = vpack.c.b16 %v3180, %v3173
    %v3531 = vpack.c.b16 %v3181, %v3174
    %v3532 = vpack.c.b16 %v3189, %v3182
    %v3533 = vpack.c.b16 %v3190, %v3183
    %v3534 = vpack.c.b16 %v3191, %v3184
    %v3535 = vpack.c.b16 %v3192, %v3185
    %v3536 = vpack.c.b16 %v3193, %v3186
    %v3537 = vpack.c.b16 %v3194, %v3187
    %v3538 = vpack.c.b16 %v3195, %v3188
    %v3539 = vpack.c.b16 %v3203, %v3196
    %v3540 = vpack.c.b16 %v3204, %v3197
    %v3541 = vpack.c.b16 %v3205, %v3198
    %v3542 = vpack.c.b16 %v3206, %v3199
    %v3543 = vpack.c.b16 %v3207, %v3200
    %v3544 = vpack.c.b16 %v3208, %v3201
    %v3545 = vpack.c.b16 %v3209, %v3202
    %v3546 = vpack.c.b16 %v3217, %v3210
    %v3547 = vpack.c.b16 %v3218, %v3211
    %v3548 = vpack.c.b16 %v3219, %v3212
    %v3549 = vpack.c.b16 %v3220, %v3213
    %v3550 = vpack.c.b16 %v3221, %v3214
    %v3551 = vpack.c.b16 %v3222, %v3215
    %v3552 = vpack.c.b16 %v3223, %v3216
    %v3553 = vpack.c.b16 %v3231, %v3224
    %v3554 = vpack.c.b16 %v3232, %v3225
    %v3555 = vpack.c.b16 %v3233, %v3226
    %v3556 = vpack.c.b16 %v3234, %v3227
    %v3557 = vpack.c.b16 %v3235, %v3228
    %v3558 = vpack.c.b16 %v3236, %v3229
    %v3559 = vpack.c.b16 %v3237, %v3230
    %v3560 = vpack.c.b16 %v3245, %v3238
    %v3561 = vpack.c.b16 %v3246, %v3239
    %v3562 = vpack.c.b16 %v3247, %v3240
    %v3563 = vpack.c.b16 %v3248, %v3241
    %v3564 = vpack.c.b16 %v3249, %v3242
    %v3565 = vpack.c.b16 %v3250, %v3243
    %v3566 = vpack.c.b16 %v3251, %v3244
    %v3567 = vpack.c.b16 %v3259, %v3252
    %v3568 = vpack.c.b16 %v3260, %v3253
    %v3569 = vpack.c.b16 %v3261, %v3254
    %v3570 = vpack.c.b16 %v3262, %v3255
    %v3571 = vpack.c.b16 %v3263, %v3256
    %v3572 = vpack.c.b16 %v3264, %v3257
    %v3573 = vpack.c.b16 %v3265, %v3258
    %v3574 = vpack.c.b16 %v3273, %v3266
    %v3575 = vpack.c.b16 %v3274, %v3267
    %v3576 = vpack.c.b16 %v3275, %v3268
    %v3577 = vpack.c.b16 %v3276, %v3269
    %v3578 = vpack.c.b16 %v3277, %v3270
    %v3579 = vpack.c.b16 %v3278, %v3271
    %v3580 = vpack.c.b16 %v3279, %v3272
    %v3581 = vpack.c.b16 %v3287, %v3280
    %v3582 = vpack.c.b16 %v3288, %v3281
    %v3583 = vpack.c.b16 %v3289, %v3282
    %v3584 = vpack.c.b16 %v3290, %v3283
    %v3585 = vpack.c.b16 %v3291, %v3284
    %v3586 = vpack.c.b16 %v3292, %v3285
    %v3587 = vpack.c.b16 %v3293, %v3286
    %v3588 = vpack.c.b16 %v3301, %v3294
    %v3589 = vpack.c.b16 %v3302, %v3295
    %v3590 = vpack.c.b16 %v3303, %v3296
    %v3591 = vpack.c.b16 %v3304, %v3297
    %v3592 = vpack.c.b16 %v3305, %v3298
    %v3593 = vpack.c.b16 %v3306, %v3299
    %v3594 = vpack.c.b16 %v3307, %v3300
    %v3595 = vpack.c.b16 %v3315, %v3308
    %v3596 = vpack.c.b16 %v3316, %v3309
    %v3597 = vpack.c.b16 %v3317, %v3310
    %v3598 = vpack.c.b16 %v3318, %v3311
    %v3599 = vpack.c.b16 %v3319, %v3312
    %v3600 = vpack.c.b16 %v3320, %v3313
    %v3601 = vpack.c.b16 %v3321, %v3314
    %v3602 = vpack.c.b16 %v3329, %v3322
    %v3603 = vpack.c.b16 %v3330, %v3323
    %v3604 = vpack.c.b16 %v3331, %v3324
    %v3605 = vpack.c.b16 %v3332, %v3325
    %v3606 = vpack.c.b16 %v3333, %v3326
    %v3607 = vpack.c.b16 %v3334, %v3327
    %v3608 = vpack.c.b16 %v3335, %v3328
    %v3609 = vpack.c.b16 %v3343, %v3336
    %v3610 = vpack.c.b16 %v3344, %v3337
    %v3611 = vpack.c.b16 %v3345, %v3338
    %v3612 = vpack.c.b16 %v3346, %v3339
    %v3613 = vpack.c.b16 %v3347, %v3340
    %v3614 = vpack.c.b16 %v3348, %v3341
    %v3615 = vpack.c.b16 %v3349, %v3342
    %v3616 = vpack.c.b16 %v3357, %v3350
    %v3617 = vpack.c.b16 %v3358, %v3351
    %v3618 = vpack.c.b16 %v3359, %v3352
    %v3619 = vpack.c.b16 %v3360, %v3353
    %v3620 = vpack.c.b16 %v3361, %v3354
    %v3621 = vpack.c.b16 %v3362, %v3355
    %v3622 = vpack.c.b16 %v3363, %v3356
    %v3623 = vpack.c.b16 %v3371, %v3364
    %v3624 = vpack.c.b16 %v3372, %v3365
    %v3625 = vpack.c.b16 %v3373, %v3366
    %v3626 = vpack.c.b16 %v3374, %v3367
    %v3627 = vpack.c.b16 %v3375, %v3368
    %v3628 = vpack.c.b16 %v3376, %v3369
    %v3629 = vpack.c.b16 %v3377, %v3370
    %v3630 = vpack.c.b16 %v3385, %v3378
    %v3631 = vpack.c.b16 %v3386, %v3379
    %v3632 = vpack.c.b16 %v3387, %v3380
    %v3633 = vpack.c.b16 %v3388, %v3381
    %v3634 = vpack.c.b16 %v3389, %v3382
    %v3635 = vpack.c.b16 %v3390, %v3383
    %v3636 = vpack.c.b16 %v3391, %v3384
    %v3637 = vpack.c.b16 %v3399, %v3392
    %v3638 = vpack.c.b16 %v3400, %v3393
    %v3639 = vpack.c.b16 %v3401, %v3394
    %v3640 = vpack.c.b16 %v3402, %v3395
    %v3641 = vpack.c.b16 %v3403, %v3396
    %v3642 = vpack.c.b16 %v3404, %v3397
    %v3643 = vpack.c.b16 %v3405, %v3398
    %v3644 = vpack.c.b16 %v3413, %v3406
    %v3645 = vpack.c.b16 %v3414, %v3407
    %v3646 = vpack.c.b16 %v3415, %v3408
    %v3647 = vpack.c.b16 %v3416, %v3409
    %v3648 = vpack.c.b16 %v3417, %v3410
    %v3649 = vpack.c.b16 %v3418, %v3411
    %v3650 = vpack.c.b16 %v3419, %v3412
    %v3651 = vpack.c.b16 %v3427, %v3420
    %v3652 = vpack.c.b16 %v3428, %v3421
    %v3653 = vpack.c.b16 %v3429, %v3422
    %v3654 = vpack.c.b16 %v3430, %v3423
    %v3655 = vpack.c.b16 %v3431, %v3424
    %v3656 = vpack.c.b16 %v3432, %v3425
    %v3657 = vpack.c.b16 %v3433, %v3426
    %3882 = vmatpush.bf16.msra.mxu0 %v3483
    %3883 = vmatpush.bf16.msra.mxu0 %v3476
    %3884 = vmatpush.bf16.msra.mxu0 %v3469
    %3885 = vmatpush.bf16.msra.mxu0 %v3462
    %3886 = vmatpush.bf16.msra.mxu0 %v3455
    %3887 = vmatpush.bf16.msra.mxu0 %v3448
    %3888 = vmatpush.bf16.msra.mxu0 %v3441
    %3889 = vmatpush.bf16.msra.mxu0 %v3434
    %3890 = vmatmul.bf16.gmra.mxu0 %v2454
    %v3891 = vpop.f32.mrf.mxu0
    %v3892 = vadd.f32 %v2716, %v3891
    %v3893 = vpop.f32.mrf.mxu0
    %3894 = vdwg.mxu0
    %3895 = vmatpush.bf16.msra.mxu0 %v3539
    %3896 = vmatpush.bf16.msra.mxu0 %v3532
    %3897 = vmatpush.bf16.msra.mxu0 %v3525
    %3898 = vmatpush.bf16.msra.mxu0 %v3518
    %3899 = vmatpush.bf16.msra.mxu0 %v3511
    %3900 = vmatpush.bf16.msra.mxu0 %v3504
    %3901 = vmatpush.bf16.msra.mxu0 %v3497
    %3902 = vmatpush.bf16.msra.mxu0 %v3490
    %3903 = vmatmul.bf16.gmra.mxu0 %v2455
    %v3904 = vpop.f32.mrf.mxu0
    %v3905 = vadd.f32 %v3892, %v3904
    %v3906 = vpop.f32.mrf.mxu0
    %3907 = vdwg.mxu0
    %3908 = vmatpush.bf16.msra.mxu0 %v3595
    %3909 = vmatpush.bf16.msra.mxu0 %v3588
    %3910 = vmatpush.bf16.msra.mxu0 %v3581
    %3911 = vmatpush.bf16.msra.mxu0 %v3574
    %3912 = vmatpush.bf16.msra.mxu0 %v3567
    %3913 = vmatpush.bf16.msra.mxu0 %v3560
    %3914 = vmatpush.bf16.msra.mxu0 %v3553
    %3915 = vmatpush.bf16.msra.mxu0 %v3546
    %3916 = vmatmul.bf16.gmra.mxu0 %v2456
    %v3917 = vpop.f32.mrf.mxu0
    %v3918 = vadd.f32 %v3905, %v3917
    %v3919 = vpop.f32.mrf.mxu0
    %3920 = vdwg.mxu0
    %3921 = vmatpush.bf16.msra.mxu0 %v3651
    %3922 = vmatpush.bf16.msra.mxu0 %v3644
    %3923 = vmatpush.bf16.msra.mxu0 %v3637
    %3924 = vmatpush.bf16.msra.mxu0 %v3630
    %3925 = vmatpush.bf16.msra.mxu0 %v3623
    %3926 = vmatpush.bf16.msra.mxu0 %v3616
    %3927 = vmatpush.bf16.msra.mxu0 %v3609
    %3928 = vmatpush.bf16.msra.mxu0 %v3602
    %3929 = vmatmul.bf16.gmra.mxu0 %v2457
    %v3930 = vpop.f32.mrf.mxu0
    %v3931 = vadd.f32 %v3918, %v3930
    %v3932 = vpop.f32.mrf.mxu0
    %3933 = vdwg.mxu0
    %3934 = vmatpush.bf16.msra.mxu0 %v3484
    %3935 = vmatpush.bf16.msra.mxu0 %v3477
    %3936 = vmatpush.bf16.msra.mxu0 %v3470
    %3937 = vmatpush.bf16.msra.mxu0 %v3463
    %3938 = vmatpush.bf16.msra.mxu0 %v3456
    %3939 = vmatpush.bf16.msra.mxu0 %v3449
    %3940 = vmatpush.bf16.msra.mxu0 %v3442
    %3941 = vmatpush.bf16.msra.mxu0 %v3435
    %3942 = vmatmul.bf16.gmra.mxu0 %v2454
    %v3943 = vpop.f32.mrf.mxu0
    %v3944 = vadd.f32 %v2717, %v3943
    %v3945 = vpop.f32.mrf.mxu0
    %3946 = vdwg.mxu0
    %3947 = vmatpush.bf16.msra.mxu0 %v3540
    %3948 = vmatpush.bf16.msra.mxu0 %v3533
    %3949 = vmatpush.bf16.msra.mxu0 %v3526
    %3950 = vmatpush.bf16.msra.mxu0 %v3519
    %3951 = vmatpush.bf16.msra.mxu0 %v3512
    %3952 = vmatpush.bf16.msra.mxu0 %v3505
    %3953 = vmatpush.bf16.msra.mxu0 %v3498
    %3954 = vmatpush.bf16.msra.mxu0 %v3491
    %3955 = vmatmul.bf16.gmra.mxu0 %v2455
    %v3956 = vpop.f32.mrf.mxu0
    %v3957 = vadd.f32 %v3944, %v3956
    %v3958 = vpop.f32.mrf.mxu0
    %3959 = vdwg.mxu0
    %3960 = vmatpush.bf16.msra.mxu0 %v3596
    %3961 = vmatpush.bf16.msra.mxu0 %v3589
    %3962 = vmatpush.bf16.msra.mxu0 %v3582
    %3963 = vmatpush.bf16.msra.mxu0 %v3575
    %3964 = vmatpush.bf16.msra.mxu0 %v3568
    %3965 = vmatpush.bf16.msra.mxu0 %v3561
    %3966 = vmatpush.bf16.msra.mxu0 %v3554
    %3967 = vmatpush.bf16.msra.mxu0 %v3547
    %3968 = vmatmul.bf16.gmra.mxu0 %v2456
    %v3969 = vpop.f32.mrf.mxu0
    %v3970 = vadd.f32 %v3957, %v3969
    %v3971 = vpop.f32.mrf.mxu0
    %3972 = vdwg.mxu0
    %3973 = vmatpush.bf16.msra.mxu0 %v3652
    %3974 = vmatpush.bf16.msra.mxu0 %v3645
    %3975 = vmatpush.bf16.msra.mxu0 %v3638
    %3976 = vmatpush.bf16.msra.mxu0 %v3631
    %3977 = vmatpush.bf16.msra.mxu0 %v3624
    %3978 = vmatpush.bf16.msra.mxu0 %v3617
    %3979 = vmatpush.bf16.msra.mxu0 %v3610
    %3980 = vmatpush.bf16.msra.mxu0 %v3603
    %3981 = vmatmul.bf16.gmra.mxu0 %v2457
    %v3982 = vpop.f32.mrf.mxu0
    %v3983 = vadd.f32 %v3970, %v3982
    %v3984 = vpop.f32.mrf.mxu0
    %3985 = vdwg.mxu0
    %3986 = vmatpush.bf16.msra.mxu0 %v3485
    %3987 = vmatpush.bf16.msra.mxu0 %v3478
    %3988 = vmatpush.bf16.msra.mxu0 %v3471
    %3989 = vmatpush.bf16.msra.mxu0 %v3464
    %3990 = vmatpush.bf16.msra.mxu0 %v3457
    %3991 = vmatpush.bf16.msra.mxu0 %v3450
    %3992 = vmatpush.bf16.msra.mxu0 %v3443
    %3993 = vmatpush.bf16.msra.mxu0 %v3436
    %3994 = vmatmul.bf16.gmra.mxu0 %v2454
    %v3995 = vpop.f32.mrf.mxu0
    %v3996 = vadd.f32 %v2718, %v3995
    %v3997 = vpop.f32.mrf.mxu0
    %3998 = vdwg.mxu0
    %3999 = vmatpush.bf16.msra.mxu0 %v3541
    %4000 = vmatpush.bf16.msra.mxu0 %v3534
    %4001 = vmatpush.bf16.msra.mxu0 %v3527
    %4002 = vmatpush.bf16.msra.mxu0 %v3520
    %4003 = vmatpush.bf16.msra.mxu0 %v3513
    %4004 = vmatpush.bf16.msra.mxu0 %v3506
    %4005 = vmatpush.bf16.msra.mxu0 %v3499
    %4006 = vmatpush.bf16.msra.mxu0 %v3492
    %4007 = vmatmul.bf16.gmra.mxu0 %v2455
    %v4008 = vpop.f32.mrf.mxu0
    %v4009 = vadd.f32 %v3996, %v4008
    %v4010 = vpop.f32.mrf.mxu0
    %4011 = vdwg.mxu0
    %4012 = vmatpush.bf16.msra.mxu0 %v3597
    %4013 = vmatpush.bf16.msra.mxu0 %v3590
    %4014 = vmatpush.bf16.msra.mxu0 %v3583
    %4015 = vmatpush.bf16.msra.mxu0 %v3576
    %4016 = vmatpush.bf16.msra.mxu0 %v3569
    %4017 = vmatpush.bf16.msra.mxu0 %v3562
    %4018 = vmatpush.bf16.msra.mxu0 %v3555
    %4019 = vmatpush.bf16.msra.mxu0 %v3548
    %4020 = vmatmul.bf16.gmra.mxu0 %v2456
    %v4021 = vpop.f32.mrf.mxu0
    %v4022 = vadd.f32 %v4009, %v4021
    %v4023 = vpop.f32.mrf.mxu0
    %4024 = vdwg.mxu0
    %4025 = vmatpush.bf16.msra.mxu0 %v3653
    %4026 = vmatpush.bf16.msra.mxu0 %v3646
    %4027 = vmatpush.bf16.msra.mxu0 %v3639
    %4028 = vmatpush.bf16.msra.mxu0 %v3632
    %4029 = vmatpush.bf16.msra.mxu0 %v3625
    %4030 = vmatpush.bf16.msra.mxu0 %v3618
    %4031 = vmatpush.bf16.msra.mxu0 %v3611
    %4032 = vmatpush.bf16.msra.mxu0 %v3604
    %4033 = vmatmul.bf16.gmra.mxu0 %v2457
    %v4034 = vpop.f32.mrf.mxu0
    %v4035 = vadd.f32 %v4022, %v4034
    %v4036 = vpop.f32.mrf.mxu0
    %4037 = vdwg.mxu0
    %4038 = vmatpush.bf16.msra.mxu0 %v3486
    %4039 = vmatpush.bf16.msra.mxu0 %v3479
    %4040 = vmatpush.bf16.msra.mxu0 %v3472
    %4041 = vmatpush.bf16.msra.mxu0 %v3465
    %4042 = vmatpush.bf16.msra.mxu0 %v3458
    %4043 = vmatpush.bf16.msra.mxu0 %v3451
    %4044 = vmatpush.bf16.msra.mxu0 %v3444
    %4045 = vmatpush.bf16.msra.mxu0 %v3437
    %4046 = vmatmul.bf16.gmra.mxu0 %v2454
    %v4047 = vpop.f32.mrf.mxu0
    %v4048 = vadd.f32 %v2719, %v4047
    %v4049 = vpop.f32.mrf.mxu0
    %4050 = vdwg.mxu0
    %4051 = vmatpush.bf16.msra.mxu0 %v3542
    %4052 = vmatpush.bf16.msra.mxu0 %v3535
    %4053 = vmatpush.bf16.msra.mxu0 %v3528
    %4054 = vmatpush.bf16.msra.mxu0 %v3521
    %4055 = vmatpush.bf16.msra.mxu0 %v3514
    %4056 = vmatpush.bf16.msra.mxu0 %v3507
    %4057 = vmatpush.bf16.msra.mxu0 %v3500
    %4058 = vmatpush.bf16.msra.mxu0 %v3493
    %4059 = vmatmul.bf16.gmra.mxu0 %v2455
    %v4060 = vpop.f32.mrf.mxu0
    %v4061 = vadd.f32 %v4048, %v4060
    %v4062 = vpop.f32.mrf.mxu0
    %4063 = vdwg.mxu0
    %4064 = vmatpush.bf16.msra.mxu0 %v3598
    %4065 = vmatpush.bf16.msra.mxu0 %v3591
    %4066 = vmatpush.bf16.msra.mxu0 %v3584
    %4067 = vmatpush.bf16.msra.mxu0 %v3577
    %4068 = vmatpush.bf16.msra.mxu0 %v3570
    %4069 = vmatpush.bf16.msra.mxu0 %v3563
    %4070 = vmatpush.bf16.msra.mxu0 %v3556
    %4071 = vmatpush.bf16.msra.mxu0 %v3549
    %4072 = vmatmul.bf16.gmra.mxu0 %v2456
    %v4073 = vpop.f32.mrf.mxu0
    %v4074 = vadd.f32 %v4061, %v4073
    %v4075 = vpop.f32.mrf.mxu0
    %4076 = vdwg.mxu0
    %4077 = vmatpush.bf16.msra.mxu0 %v3654
    %4078 = vmatpush.bf16.msra.mxu0 %v3647
    %4079 = vmatpush.bf16.msra.mxu0 %v3640
    %4080 = vmatpush.bf16.msra.mxu0 %v3633
    %4081 = vmatpush.bf16.msra.mxu0 %v3626
    %4082 = vmatpush.bf16.msra.mxu0 %v3619
    %4083 = vmatpush.bf16.msra.mxu0 %v3612
    %4084 = vmatpush.bf16.msra.mxu0 %v3605
    %4085 = vmatmul.bf16.gmra.mxu0 %v2457
    %v4086 = vpop.f32.mrf.mxu0
    %v4087 = vadd.f32 %v4074, %v4086
    %v4088 = vpop.f32.mrf.mxu0
    %4089 = vdwg.mxu0
    %4090 = vmatpush.bf16.msra.mxu0 %v3487
    %4091 = vmatpush.bf16.msra.mxu0 %v3480
    %4092 = vmatpush.bf16.msra.mxu0 %v3473
    %4093 = vmatpush.bf16.msra.mxu0 %v3466
    %4094 = vmatpush.bf16.msra.mxu0 %v3459
    %4095 = vmatpush.bf16.msra.mxu0 %v3452
    %4096 = vmatpush.bf16.msra.mxu0 %v3445
    %4097 = vmatpush.bf16.msra.mxu0 %v3438
    %4098 = vmatmul.bf16.gmra.mxu0 %v2454
    %v4099 = vpop.f32.mrf.mxu0
    %v4100 = vadd.f32 %v2720, %v4099
    %v4101 = vpop.f32.mrf.mxu0
    %4102 = vdwg.mxu0
    %4103 = vmatpush.bf16.msra.mxu0 %v3543
    %4104 = vmatpush.bf16.msra.mxu0 %v3536
    %4105 = vmatpush.bf16.msra.mxu0 %v3529
    %4106 = vmatpush.bf16.msra.mxu0 %v3522
    %4107 = vmatpush.bf16.msra.mxu0 %v3515
    %4108 = vmatpush.bf16.msra.mxu0 %v3508
    %4109 = vmatpush.bf16.msra.mxu0 %v3501
    %4110 = vmatpush.bf16.msra.mxu0 %v3494
    %4111 = vmatmul.bf16.gmra.mxu0 %v2455
    %v4112 = vpop.f32.mrf.mxu0
    %v4113 = vadd.f32 %v4100, %v4112
    %v4114 = vpop.f32.mrf.mxu0
    %4115 = vdwg.mxu0
    %4116 = vmatpush.bf16.msra.mxu0 %v3599
    %4117 = vmatpush.bf16.msra.mxu0 %v3592
    %4118 = vmatpush.bf16.msra.mxu0 %v3585
    %4119 = vmatpush.bf16.msra.mxu0 %v3578
    %4120 = vmatpush.bf16.msra.mxu0 %v3571
    %4121 = vmatpush.bf16.msra.mxu0 %v3564
    %4122 = vmatpush.bf16.msra.mxu0 %v3557
    %4123 = vmatpush.bf16.msra.mxu0 %v3550
    %4124 = vmatmul.bf16.gmra.mxu0 %v2456
    %v4125 = vpop.f32.mrf.mxu0
    %v4126 = vadd.f32 %v4113, %v4125
    %v4127 = vpop.f32.mrf.mxu0
    %4128 = vdwg.mxu0
    %4129 = vmatpush.bf16.msra.mxu0 %v3655
    %4130 = vmatpush.bf16.msra.mxu0 %v3648
    %4131 = vmatpush.bf16.msra.mxu0 %v3641
    %4132 = vmatpush.bf16.msra.mxu0 %v3634
    %4133 = vmatpush.bf16.msra.mxu0 %v3627
    %4134 = vmatpush.bf16.msra.mxu0 %v3620
    %4135 = vmatpush.bf16.msra.mxu0 %v3613
    %4136 = vmatpush.bf16.msra.mxu0 %v3606
    %4137 = vmatmul.bf16.gmra.mxu0 %v2457
    %v4138 = vpop.f32.mrf.mxu0
    %v4139 = vadd.f32 %v4126, %v4138
    %v4140 = vpop.f32.mrf.mxu0
    %4141 = vdwg.mxu0
    %4142 = vmatpush.bf16.msra.mxu0 %v3488
    %4143 = vmatpush.bf16.msra.mxu0 %v3481
    %4144 = vmatpush.bf16.msra.mxu0 %v3474
    %4145 = vmatpush.bf16.msra.mxu0 %v3467
    %4146 = vmatpush.bf16.msra.mxu0 %v3460
    %4147 = vmatpush.bf16.msra.mxu0 %v3453
    %4148 = vmatpush.bf16.msra.mxu0 %v3446
    %4149 = vmatpush.bf16.msra.mxu0 %v3439
    %4150 = vmatmul.bf16.gmra.mxu0 %v2454
    %v4151 = vpop.f32.mrf.mxu0
    %v4152 = vadd.f32 %v2721, %v4151
    %v4153 = vpop.f32.mrf.mxu0
    %4154 = vdwg.mxu0
    %4155 = vmatpush.bf16.msra.mxu0 %v3544
    %4156 = vmatpush.bf16.msra.mxu0 %v3537
    %4157 = vmatpush.bf16.msra.mxu0 %v3530
    %4158 = vmatpush.bf16.msra.mxu0 %v3523
    %4159 = vmatpush.bf16.msra.mxu0 %v3516
    %4160 = vmatpush.bf16.msra.mxu0 %v3509
    %4161 = vmatpush.bf16.msra.mxu0 %v3502
    %4162 = vmatpush.bf16.msra.mxu0 %v3495
    %4163 = vmatmul.bf16.gmra.mxu0 %v2455
    %v4164 = vpop.f32.mrf.mxu0
    %v4165 = vadd.f32 %v4152, %v4164
    %v4166 = vpop.f32.mrf.mxu0
    %4167 = vdwg.mxu0
    %4168 = vmatpush.bf16.msra.mxu0 %v3600
    %4169 = vmatpush.bf16.msra.mxu0 %v3593
    %4170 = vmatpush.bf16.msra.mxu0 %v3586
    %4171 = vmatpush.bf16.msra.mxu0 %v3579
    %4172 = vmatpush.bf16.msra.mxu0 %v3572
    %4173 = vmatpush.bf16.msra.mxu0 %v3565
    %4174 = vmatpush.bf16.msra.mxu0 %v3558
    %4175 = vmatpush.bf16.msra.mxu0 %v3551
    %4176 = vmatmul.bf16.gmra.mxu0 %v2456
    %v4177 = vpop.f32.mrf.mxu0
    %v4178 = vadd.f32 %v4165, %v4177
    %v4179 = vpop.f32.mrf.mxu0
    %4180 = vdwg.mxu0
    %4181 = vmatpush.bf16.msra.mxu0 %v3656
    %4182 = vmatpush.bf16.msra.mxu0 %v3649
    %4183 = vmatpush.bf16.msra.mxu0 %v3642
    %4184 = vmatpush.bf16.msra.mxu0 %v3635
    %4185 = vmatpush.bf16.msra.mxu0 %v3628
    %4186 = vmatpush.bf16.msra.mxu0 %v3621
    %4187 = vmatpush.bf16.msra.mxu0 %v3614
    %4188 = vmatpush.bf16.msra.mxu0 %v3607
    %4189 = vmatmul.bf16.gmra.mxu0 %v2457
    %v4190 = vpop.f32.mrf.mxu0
    %v4191 = vadd.f32 %v4178, %v4190
    %v4192 = vpop.f32.mrf.mxu0
    %4193 = vdwg.mxu0
    %4194 = vmatpush.bf16.msra.mxu0 %v3489
    %4195 = vmatpush.bf16.msra.mxu0 %v3482
    %4196 = vmatpush.bf16.msra.mxu0 %v3475
    %4197 = vmatpush.bf16.msra.mxu0 %v3468
    %4198 = vmatpush.bf16.msra.mxu0 %v3461
    %4199 = vmatpush.bf16.msra.mxu0 %v3454
    %4200 = vmatpush.bf16.msra.mxu0 %v3447
    %4201 = vmatpush.bf16.msra.mxu0 %v3440
    %4202 = vmatmul.bf16.gmra.mxu0 %v2454
    %v4203 = vpop.f32.mrf.mxu0
    %v4204 = vadd.f32 %v2722, %v4203
    %v4205 = vpop.f32.mrf.mxu0
    %4206 = vdwg.mxu0
    %4207 = vmatpush.bf16.msra.mxu0 %v3545
    %4208 = vmatpush.bf16.msra.mxu0 %v3538
    %4209 = vmatpush.bf16.msra.mxu0 %v3531
    %4210 = vmatpush.bf16.msra.mxu0 %v3524
    %4211 = vmatpush.bf16.msra.mxu0 %v3517
    %4212 = vmatpush.bf16.msra.mxu0 %v3510
    %4213 = vmatpush.bf16.msra.mxu0 %v3503
    %4214 = vmatpush.bf16.msra.mxu0 %v3496
    %4215 = vmatmul.bf16.gmra.mxu0 %v2455
    %v4216 = vpop.f32.mrf.mxu0
    %v4217 = vadd.f32 %v4204, %v4216
    %v4218 = vpop.f32.mrf.mxu0
    %4219 = vdwg.mxu0
    %4220 = vmatpush.bf16.msra.mxu0 %v3601
    %4221 = vmatpush.bf16.msra.mxu0 %v3594
    %4222 = vmatpush.bf16.msra.mxu0 %v3587
    %4223 = vmatpush.bf16.msra.mxu0 %v3580
    %4224 = vmatpush.bf16.msra.mxu0 %v3573
    %4225 = vmatpush.bf16.msra.mxu0 %v3566
    %4226 = vmatpush.bf16.msra.mxu0 %v3559
    %4227 = vmatpush.bf16.msra.mxu0 %v3552
    %4228 = vmatmul.bf16.gmra.mxu0 %v2456
    %v4229 = vpop.f32.mrf.mxu0
    %v4230 = vadd.f32 %v4217, %v4229
    %v4231 = vpop.f32.mrf.mxu0
    %4232 = vdwg.mxu0
    %4233 = vmatpush.bf16.msra.mxu0 %v3657
    %4234 = vmatpush.bf16.msra.mxu0 %v3650
    %4235 = vmatpush.bf16.msra.mxu0 %v3643
    %4236 = vmatpush.bf16.msra.mxu0 %v3636
    %4237 = vmatpush.bf16.msra.mxu0 %v3629
    %4238 = vmatpush.bf16.msra.mxu0 %v3622
    %4239 = vmatpush.bf16.msra.mxu0 %v3615
    %4240 = vmatpush.bf16.msra.mxu0 %v3608
    %4241 = vmatmul.bf16.gmra.mxu0 %v2457
    %v4242 = vpop.f32.mrf.mxu0
    %v4243 = vadd.f32 %v4230, %v4242
    %v4244 = vpop.f32.mrf.mxu0
    %4245 = vdwg.mxu0
    %v4246 = vand.u32 2147483647, %v3931
    %v4247 = vand.u32 2147483647, %v3983
    %v4248 = vand.u32 2147483647, %v4035
    %v4249 = vand.u32 2147483647, %v4087
    %v4250 = vand.u32 2147483647, %v4139
    %v4251 = vand.u32 2147483647, %v4191
    %v4252 = vand.u32 2147483647, %v4243
    %v4253 = vsub.f32 0.0, %v4246
    %v4254 = vsub.f32 0.0, %v4247
    %v4255 = vsub.f32 0.0, %v4248
    %v4256 = vsub.f32 0.0, %v4249
    %v4257 = vsub.f32 0.0, %v4250
    %v4258 = vsub.f32 0.0, %v4251
    %v4259 = vsub.f32 0.0, %v4252
    %v4260 = vmul.f32 %v4253, 1.442695
    %v4261 = vpow.pop %v4260
    %v4262 = vmul.f32 %v4254, 1.442695
    %v4263 = vpow.pop %v4262
    %v4264 = vmul.f32 %v4255, 1.442695
    %v4265 = vpow.pop %v4264
    %v4266 = vmul.f32 %v4256, 1.442695
    %v4267 = vpow.pop %v4266
    %v4268 = vmul.f32 %v4257, 1.442695
    %v4269 = vpow.pop %v4268
    %v4270 = vmul.f32 %v4258, 1.442695
    %v4271 = vpow.pop %v4270
    %v4272 = vmul.f32 %v4259, 1.442695
    %v4273 = vpow.pop %v4272
    %v4274 = vadd.f32 %v4261, 1.0
    %v4275 = vadd.f32 %v4263, 1.0
    %v4276 = vadd.f32 %v4265, 1.0
    %v4277 = vadd.f32 %v4267, 1.0
    %v4278 = vadd.f32 %v4269, 1.0
    %v4279 = vadd.f32 %v4271, 1.0
    %v4280 = vadd.f32 %v4273, 1.0
    %v4281 = vrcp.pop %v4274
    %v4282 = vrcp.pop %v4275
    %v4283 = vrcp.pop %v4276
    %v4284 = vrcp.pop %v4277
    %v4285 = vrcp.pop %v4278
    %v4286 = vrcp.pop %v4279
    %v4287 = vrcp.pop %v4280
    %vm4288 = vcmp.ge.f32.partialorder %v3931, 0.0
    %vm4289 = vcmp.ge.f32.partialorder %v3983, 0.0
    %vm4290 = vcmp.ge.f32.partialorder %v4035, 0.0
    %vm4291 = vcmp.ge.f32.partialorder %v4087, 0.0
    %vm4292 = vcmp.ge.f32.partialorder %v4139, 0.0
    %vm4293 = vcmp.ge.f32.partialorder %v4191, 0.0
    %vm4294 = vcmp.ge.f32.partialorder %v4243, 0.0
    %v4295 = vmul.f32 %v4261, %v4281
    %v4296 = vmul.f32 %v4263, %v4282
    %v4297 = vmul.f32 %v4265, %v4283
    %v4298 = vmul.f32 %v4267, %v4284
    %v4299 = vmul.f32 %v4269, %v4285
    %v4300 = vmul.f32 %v4271, %v4286
    %v4301 = vmul.f32 %v4273, %v4287
    %v4302 = vsel %vm4288, %v4281, %v4295
    %v4303 = vsel %vm4289, %v4282, %v4296
    %v4304 = vsel %vm4290, %v4283, %v4297
    %v4305 = vsel %vm4291, %v4284, %v4298
    %v4306 = vsel %vm4292, %v4285, %v4299
    %v4307 = vsel %vm4293, %v4286, %v4300
    %v4308 = vsel %vm4294, %v4287, %v4301
    %v4309 = vpack.c.bf16 %v4303, %v4302
    %v4310 = vpack.c.bf16 %v4305, %v4304
    %v4311 = vpack.c.bf16 %v4307, %v4306
    %v4312 = vpack.c.bf16 %v4308, %v4308
    %4313 = vst [vmem:[#allocation16] sm:$0xff] %v4309
    %4314 = vst [vmem:[#allocation16 + $0x8] sm:$0xff] %v4310
    %4315 = vst [vmem:[#allocation16 + $0x10] sm:$0xff] %v4311
    %4316 = vst [vmem:[#allocation16 + $0x18] sm:$0xf] %v4312
    %s4317 = smul.u32 0, 8
    %v4318 = vlaneseq
    %v4319 = vshrl.u32 %v4318, 7
    %v4320 = vstv %s4317
    %v4321 = vadd.s32 %v4320, %v4319
    %s4322 = sld [smem:[#allocation3]]
    %v4323 = vstv %s4322
    %vm4324 = vcmp.lt.s32.totalorder %v4321, %v4323
    %v4325 = vsel %vm4324, 1, 0
    %v4326 = vcvt.s32.f32 %v4325
    %vm4327 = vcmask 7168
    %v4328 = vsel %vm4327, %v4326, 0.0
    %4329 = vadd.xlane.f32.xlu0 %v4328
    %v4330 = vpop.xlane.xlu0 %4329
    %v4331 = vrot.slane %v4330, 4
    %v4332 = vadd.f32 %v4330, %v4331
    %v4333 = vrot.slane %v4332, 2
    %v4334 = vadd.f32 %v4332, %v4333
    %v4335 = vrot.slane %v4334, 1
    %v4336 = vadd.f32 %v4334, %v4335
    %s4337 = vtos %v4336
    %v4338 = vmax.f32 %v3931, 0.0
    %v4339 = vmax.f32 %v3983, 0.0
    %v4340 = vmax.f32 %v4035, 0.0
    %v4341 = vmax.f32 %v4087, 0.0
    %v4342 = vmax.f32 %v4139, 0.0
    %v4343 = vmax.f32 %v4191, 0.0
    %v4344 = vmax.f32 %v4243, 0.0
    %v4345 = vmul.f32 %v142, %v3931
    %v4346 = vmul.f32 %v143, %v3983
    %v4347 = vmul.f32 %v144, %v4035
    %v4348 = vmul.f32 %v145, %v4087
    %v4349 = vmul.f32 %v146, %v4139
    %v4350 = vmul.f32 %v147, %v4191
    %v4351 = vmul.f32 %v148, %v4243
    %v4352 = vsub.f32 %v4338, %v4345
    %v4353 = vsub.f32 %v4339, %v4346
    %v4354 = vsub.f32 %v4340, %v4347
    %v4355 = vsub.f32 %v4341, %v4348
    %v4356 = vsub.f32 %v4342, %v4349
    %v4357 = vsub.f32 %v4343, %v4350
    %v4358 = vsub.f32 %v4344, %v4351
    %v4359 = vadd.f32 %v4261, 1.0
    %v4360 = vlog2.pop %v4359
    %v4361 = vmul.f32 %v4360, 0.6931472
    %v4362 = vmul.f32 -0.5, %v4261
    %v4363 = vadd.f32 %v4362, 1.0
    %v4364 = vmul.f32 %v4363, %v4261
    %v4365 = vand.u32 2147483647, %v4261
    %vm4366 = vcmp.lt.f32.partialorder %v4365, 0.0004427343
    %v4367 = vsel %vm4366, %v4364, %v4361
    %v4368 = vadd.f32 %v4263, 1.0
    %v4369 = vlog2.pop %v4368
    %v4370 = vmul.f32 %v4369, 0.6931472
    %v4371 = vmul.f32 -0.5, %v4263
    %v4372 = vadd.f32 %v4371, 1.0
    %v4373 = vmul.f32 %v4372, %v4263
    %v4374 = vand.u32 2147483647, %v4263
    %vm4375 = vcmp.lt.f32.partialorder %v4374, 0.0004427343
    %v4376 = vsel %vm4375, %v4373, %v4370
    %v4377 = vadd.f32 %v4265, 1.0
    %v4378 = vlog2.pop %v4377
    %v4379 = vmul.f32 %v4378, 0.6931472
    %v4380 = vmul.f32 -0.5, %v4265
    %v4381 = vadd.f32 %v4380, 1.0
    %v4382 = vmul.f32 %v4381, %v4265
    %v4383 = vand.u32 2147483647, %v4265
    %vm4384 = vcmp.lt.f32.partialorder %v4383, 0.0004427343
    %v4385 = vsel %vm4384, %v4382, %v4379
    %v4386 = vadd.f32 %v4267, 1.0
    %v4387 = vlog2.pop %v4386
    %v4388 = vmul.f32 %v4387, 0.6931472
    %v4389 = vmul.f32 -0.5, %v4267
    %v4390 = vadd.f32 %v4389, 1.0
    %v4391 = vmul.f32 %v4390, %v4267
    %v4392 = vand.u32 2147483647, %v4267
    %vm4393 = vcmp.lt.f32.partialorder %v4392, 0.0004427343
    %v4394 = vsel %vm4393, %v4391, %v4388
    %v4395 = vadd.f32 %v4269, 1.0
    %v4396 = vlog2.pop %v4395
    %v4397 = vmul.f32 %v4396, 0.6931472
    %v4398 = vmul.f32 -0.5, %v4269
    %v4399 = vadd.f32 %v4398, 1.0
    %v4400 = vmul.f32 %v4399, %v4269
    %v4401 = vand.u32 2147483647, %v4269
    %vm4402 = vcmp.lt.f32.partialorder %v4401, 0.0004427343
    %v4403 = vsel %vm4402, %v4400, %v4397
    %v4404 = vadd.f32 %v4271, 1.0
    %v4405 = vlog2.pop %v4404
    %v4406 = vmul.f32 %v4405, 0.6931472
    %v4407 = vmul.f32 -0.5, %v4271
    %v4408 = vadd.f32 %v4407, 1.0
    %v4409 = vmul.f32 %v4408, %v4271
    %v4410 = vand.u32 2147483647, %v4271
    %vm4411 = vcmp.lt.f32.partialorder %v4410, 0.0004427343
    %v4412 = vsel %vm4411, %v4409, %v4406
    %v4413 = vadd.f32 %v4273, 1.0
    %v4414 = vlog2.pop %v4413
    %v4415 = vmul.f32 %v4414, 0.6931472
    %v4416 = vmul.f32 -0.5, %v4273
    %v4417 = vadd.f32 %v4416, 1.0
    %v4418 = vmul.f32 %v4417, %v4273
    %v4419 = vand.u32 2147483647, %v4273
    %vm4420 = vcmp.lt.f32.partialorder %v4419, 0.0004427343
    %v4421 = vsel %vm4420, %v4418, %v4415
    %v4422 = vadd.f32 %v4352, %v4367
    %v4423 = vadd.f32 %v4353, %v4376
    %v4424 = vadd.f32 %v4354, %v4385
    %v4425 = vadd.f32 %v4355, %v4394
    %v4426 = vadd.f32 %v4356, %v4403
    %v4427 = vadd.f32 %v4357, %v4412
    %v4428 = vadd.f32 %v4358, %v4421
    %v4429 = vmul.f32 %v4422, %v4326
    %v4430 = vmul.f32 %v4423, %v4326
    %v4431 = vmul.f32 %v4424, %v4326
    %v4432 = vmul.f32 %v4425, %v4326
    %v4433 = vmul.f32 %v4426, %v4326
    %v4434 = vmul.f32 %v4427, %v4326
    %v4435 = vmul.f32 %v4428, %v4326
    %v4436 = vadd.f32 %v4429, %v4430
    %v4437 = vadd.f32 %v4436, %v4431
    %v4438 = vadd.f32 %v4437, %v4432
    %v4439 = vadd.f32 %v4438, %v4433
    %v4440 = vadd.f32 %v4439, %v4434
    %v4441 = vadd.f32 %v4440, %v4435
    %4442 = vadd.xlane.f32.xlu0 %v4441
    %v4443 = vpop.xlane.xlu0 %4442
    %v4444 = vrot.slane %v4443, 4
    %v4445 = vadd.f32 %v4443, %v4444
    %v4446 = vrot.slane %v4445, 2
    %v4447 = vadd.f32 %v4445, %v4446
    %v4448 = vrot.slane %v4447, 1
    %v4449 = vadd.f32 %v4447, %v4448
    %s4450 = vtos %v4449
    %s4451 = smul.f32 %s4337, 77.632484
    %s4452 = ssub.f32 %s4450, %s4451
    %v4453 = vlaneseq
    %v4454 = vand.u32 %v4453, 127
    %vm4455 = vcmp.lt.s32.totalorder %v4454, 20
    %v4456 = vsel %vm4455, 1.0, 0.0
    %vm4457 = vcmp.ge.s32.totalorder %v4454, 20
    %vm4458 = vcmp.lt.s32.totalorder %v4454, 40
    %vm4459 = vmand %vm4457, %vm4458
    %v4460 = vsel %vm4459, 1.0, 0.0
    %vm4461 = vcmp.gt.f32.partialorder %v4460, 0.5
    %v4462 = vsel %vm4461, %v2191, 0.0
    %v4463 = vmul.f32 %v4462, 1.442695
    %v4464 = vpow.pop %v4463
    %v4465 = vsub.f32 %v2191, %v4464
    %v4466 = vmul.f32 %v4465, %v4460
    %v4467 = vmul.f32 %v2191, %v2191
    %v4468 = vmul.f32 %v4467, %v4456
    %v4469 = vsub.f32 %v4466, %v4468
    %4470 = vadd.xlane.f32.xlu0 %v4469
    %v4471 = vpop.xlane.xlu0 %4470
    %v4472 = vadd.f32 %v4471, 20.0
    %v4473 = vmul.f32 %v4472, %v4326
    %v4474 = vsel %vm4327, %v4473, 0.0
    %4475 = vadd.xlane.f32.xlu0 %v4474
    %v4476 = vpop.xlane.xlu0 %4475
    %v4477 = vrot.slane %v4476, 4
    %v4478 = vadd.f32 %v4476, %v4477
    %v4479 = vrot.slane %v4478, 2
    %v4480 = vadd.f32 %v4478, %v4479
    %v4481 = vrot.slane %v4480, 1
    %v4482 = vadd.f32 %v4480, %v4481
    %s4483 = vtos %v4482
    %s4484 = smul.f32 %s4483, -0.5
    %s4485 = sadd.f32 %s4452, %s4484
    %v4486 = vstv %s4485
    %4487 = vst [vmem:[#allocation19] sm:$0xff] %v4486
    // Predicated region
    $region66: #{tpu_custom_call.1} parent=1 // pred_check
      _
    $region67: #{tpu_custom_call.1} parent=1 // pred_check_branch
      %4489 = sbr.rel (0) target = $region69
    $region68: #{tpu_custom_call.1} parent=1 // pred_region
      %4491 = vsyncadd [#allocation6], 0
      %s4493 = sshll.u32 [#allocation16], 4
      %s4494 = int_to_ptr.vmem [resolvable:$true] %s4493
      %s4495 = sshll.u32 %s10, 4
      %s4496 = int_to_ptr.hbm [resolvable:$true] %s4495
      %4498 = dma.vmem_to_hbm [thread:$0]  %s4494, 448, %s4496, [#allocation6]
    $region69: #{tpu_custom_call.1} parent=1 // pred_fallthru
      _
    // Predicated region
    $region70: #{tpu_custom_call.1} parent=1 // pred_check
      _
    $region71: #{tpu_custom_call.1} parent=1 // pred_check_branch
      %4500 = sbr.rel (0) target = $region73
    $region72: #{tpu_custom_call.1} parent=1 // pred_region
      %4502 = vsyncadd [#allocation18], 0
      %s4504 = sshll.u32 [#allocation17], 4
      %s4505 = int_to_ptr.vmem [resolvable:$true] %s4504
      %s4506 = sshll.u32 %s11, 4
      %s4507 = int_to_ptr.hbm [resolvable:$true] %s4506
      %4509 = dma.vmem_to_hbm [thread:$0]  %s4505, 128, %s4507, [#allocation18]
    $region73: #{tpu_custom_call.1} parent=1 // pred_fallthru
      _
    // Predicated region
    $region74: #{tpu_custom_call.1} parent=1 // pred_check
      _
    $region75: #{tpu_custom_call.1} parent=1 // pred_check_branch
      %4511 = sbr.rel (0) target = $region77
    $region76: #{tpu_custom_call.1} parent=1 // pred_region
      %4513 = vsyncadd [#allocation18], 0
      %s4515 = sshll.u32 [#allocation19], 4
      %s4516 = int_to_ptr.vmem [resolvable:$true] %s4515
      %s4517 = sshll.u32 %s12, 4
      %s4518 = int_to_ptr.hbm [resolvable:$true] %s4517
      %4520 = dma.vmem_to_hbm [thread:$0]  %s4516, 128, %s4518, [#allocation18]
    $region77: #{tpu_custom_call.1} parent=1 // pred_fallthru
      _
    // Predicated region
    $region78: #{tpu_custom_call.1} parent=1 // pred_check
      _
    $region79: #{tpu_custom_call.1} parent=1 // pred_check_branch
      %4522 = sbr.rel (0) target = $region81
    $region80: #{tpu_custom_call.1} parent=1 // pred_region
      %4524 = dma.done [#allocation6], 448
    $region81: #{tpu_custom_call.1} parent=1 // pred_fallthru
      _
    // Predicated region
    $region82: #{tpu_custom_call.1} parent=1 // pred_check
      _
    $region83: #{tpu_custom_call.1} parent=1 // pred_check_branch
      %4526 = sbr.rel (0) target = $region85
    $region84: #{tpu_custom_call.1} parent=1 // pred_region
      %4528 = dma.done [#allocation18], 128
    $region85: #{tpu_custom_call.1} parent=1 // pred_fallthru
      _
    // Predicated region
    $region86: #{tpu_custom_call.1} parent=1 // pred_check
      _
    $region87: #{tpu_custom_call.1} parent=1 // pred_check_branch
      %4530 = sbr.rel (0) target = $region89
    $region88: #{tpu_custom_call.1} parent=1 // pred_region
      %4532 = dma.done [#allocation18], 128
    $region89: #{tpu_custom_call.1} parent=1 // pred_fallthru
      _
    %4533 = vsyncpa [#allocation5], 1
    %4534 = vsyncpa [#allocation8], 1
    %4535 = vsyncpa [#allocation11], 1
    %4536 = vsyncpa [#allocation14], 1
    %4537 = vsyncpa [#allocation6], 1
    %4538 = vsyncpa [#allocation18], 1

</llo_original>
